<compile_context>
chip_gen: v6e
topology: v6e:2x2x1
jax: 0.10.0
libtpu: 0.0.40
codegen_flags: <defaults>
</compile_context>

<pallas_src>
import numpy as np
import jax
import jax.numpy as jnp
from jax.experimental import pallas as pl
from jax.experimental.pallas import tpu as pltpu

LANE = 128


def _round_up(x, m):
    return ((x + m - 1) // m) * m


# --------------------------- constant packing --------------------------------

class _ThetaPacker:
    """Packs small f32 matrices into one [R, 128] array; each piece 8-row aligned."""

    def __init__(self):
        self._chunks = []
        self._rows = 0

    def add(self, mat):
        mat = np.asarray(mat, np.float32)
        if mat.ndim == 1:
            mat = mat[None, :]
        r, c = mat.shape
        assert c <= LANE, f"piece wider than {LANE} lanes: {mat.shape}"
        rp = _round_up(r, 8)
        buf = np.zeros((rp, LANE), np.float32)
        buf[:r, :c] = mat
        entry = (self._rows, r, c)          # (row offset, rows, cols) - static ints
        self._chunks.append(buf)
        self._rows += rp
        return entry

    def finalize(self):
        return np.concatenate(self._chunks, axis=0)


def _block_diag(a, b):
    out = np.zeros((a.shape[0] + b.shape[0], a.shape[1] + b.shape[1]), np.float32)
    out[:a.shape[0], :a.shape[1]] = a
    out[a.shape[0]:, a.shape[1]:] = b
    return out


# --------------------------- parameter init ----------------------------------

def _fold_conv_bn(w, b, gamma, beta, mean, var, eps=1e-5):
    scale = gamma / np.sqrt(var + eps)
    return w * scale[None, None, None, :], (b - mean) * scale + beta


def _init_conv_bn(key, cin, cout, ksize):
    kw_, kb, kg, kbe, km, kv = jax.random.split(key, 6)
    w = 0.1 * jax.random.normal(kw_, (ksize, ksize, cin, cout), jnp.float32)
    b = 0.1 * jax.random.normal(kb, (cout,), jnp.float32)
    gamma = 1.0 + 0.1 * jax.random.normal(kg, (cout,), jnp.float32)
    beta = 0.1 * jax.random.normal(kbe, (cout,), jnp.float32)
    mean = 0.1 * jax.random.normal(km, (cout,), jnp.float32)
    var = 1.0 + 0.1 * jnp.abs(jax.random.normal(kv, (cout,), jnp.float32))
    return _fold_conv_bn(*[np.asarray(a) for a in (w, b, gamma, beta, mean, var)])


def _init_linear(key, fin, fout):
    kw_, kb = jax.random.split(key)
    w = jax.random.normal(kw_, (fin, fout), jnp.float32) / np.sqrt(float(fin))
    b = 0.1 * jax.random.normal(kb, (fout,), jnp.float32)
    return np.asarray(w), np.asarray(b)


# --------------------------- conv -> tap matrices -----------------------------
# 3x3 conv, padding 1, stride s, folded BN.  Activation layout A[n*H + h, w*C + c].
#   out[n*Ho+ho, wo*Cout+co] = sum_{ki,kj,ci} x[n, ho*s+ki-1, wo*s+kj-1, ci]*W[ki,kj,ci,co]
# is implemented as  sum_ki (P_ki @ A) @ G_ki  with out-of-range taps dropped
# (== zero padding) and the stride folded into both P and G.

def _conv_taps(packer, wf, bf, n, hin, win, stride):
    cin, cout = wf.shape[2], wf.shape[3]
    ho = (hin - 1) // stride + 1
    wo = (win - 1) // stride + 1
    taps = []
    for ki in range(3):
        P = np.zeros((n * ho, n * hin), np.float32)
        hit = False
        for bi in range(n):
            for r in range(ho):
                hi = r * stride + ki - 1
                if 0 <= hi < hin:
                    P[bi * ho + r, bi * hin + hi] = 1.0
                    hit = True
        if not hit:               # this vertical tap only touches zero padding
            continue
        G = np.zeros((win * cin, wo * cout), np.float32)
        for wo_i in range(wo):
            for kj in range(3):
                wi = wo_i * stride + kj - 1
                if 0 <= wi < win:
                    G[wi * cin:(wi + 1) * cin, wo_i * cout:(wo_i + 1) * cout] = wf[ki, kj]
        identity = (P.shape[0] == P.shape[1]) and np.array_equal(
            P, np.eye(P.shape[0], dtype=np.float32))
        p_entry = None if identity else packer.add(P)
        taps.append((p_entry, packer.add(G)))
    bias_entry = packer.add(np.tile(bf, wo))          # [1, Wo*Cout]
    return dict(taps=taps, bias=bias_entry), ho, wo


# --------------------------- model build --------------------------------------

def build_model(key, input_shape, out_features, classify_sum, batch):
    c0, h0, w0 = input_shape
    chans = [c0, 8, 8, 8, 16, 16, 32, 32, 64, out_features]
    strides = [1] + [2] * 8
    keys = jax.random.split(key, 32)
    ki = iter(keys)

    conv_params = [_init_conv_bn(next(ki), chans[i], chans[i + 1], 3) for i in range(9)]

    # MS_CAM(channels=64, r=4): 1x1 conv + BN per stage, folded the same way.
    C, inter = 64, 16
    ms_l1 = _init_conv_bn(next(ki), C, inter, 1)
    ms_l2 = _init_conv_bn(next(ki), inter, C, 1)
    ms_g1 = _init_conv_bn(next(ki), C, inter, 1)
    ms_g2 = _init_conv_bn(next(ki), inter, C, 1)

    # True post-conv spatial size from the conv chain itself (review concern: the
    # module's H//2**8 + 1 formula only coincidentally matches for some inputs).
    hf, wf_sp = h0, w0
    for s in strides:
        hf = (hf - 1) // s + 1
        wf_sp = (wf_sp - 1) // s + 1
    assert hf == 1 and wf_sp == 1, (
        "fused kernel assumes the conv stack reduces to 1x1 spatial, "
        f"got {hf}x{wf_sp}")
    in_features = out_features * hf * wf_sp
    h1, h2 = in_features // 2, in_features // 4

    reg = [_init_linear(next(ki), in_features, h1),
           _init_linear(next(ki), h1, h2),
           _init_linear(next(ki), h2, 1)]
    cls = [_init_linear(next(ki), in_features, h1),
           _init_linear(next(ki), h1, h2),
           _init_linear(next(ki), h2, classify_sum)]

    # ---- pack every constant the kernel needs into one [R, 128] array ----
    packer = _ThetaPacker()
    conv_plan = []
    hin, win = h0, w0
    for (wf_, bf_), s in zip(conv_params, strides):
        layer, hin, win = _conv_taps(packer, wf_, bf_, batch, hin, win, s)
        conv_plan.append(layer)

    wl1, bl1 = ms_l1[0][0, 0], ms_l1[1]
    wl2, bl2 = ms_l2[0][0, 0], ms_l2[1]
    wg1, bg1 = ms_g1[0][0, 0], ms_g1[1]
    wg2, bg2 = ms_g2[0][0, 0], ms_g2[1]
    # local & global branches fused: first level concatenated on the output axis,
    # second level stacked on K so the matmul directly yields xl + xg.
    ms_plan = dict(
        w1=packer.add(np.concatenate([wl1, wg1], axis=1)),   # [64, 32]
        b1=packer.add(np.concatenate([bl1, bg1], axis=0)),   # [1, 32]
        w2=packer.add(np.concatenate([wl2, wg2], axis=0)),   # [32, 64]
        b2=packer.add(bl2 + bg2),                            # [1, 64]
    )

    # regression & classify heads fused per level (wider lane dimension per matmul).
    head_plan = dict(
        w1=packer.add(np.concatenate([reg[0][0], cls[0][0]], axis=1)),  # [64, 64]
        b1=packer.add(np.concatenate([reg[0][1], cls[0][1]], axis=0)),
        w2=packer.add(_block_diag(reg[1][0], cls[1][0])),               # [64, 32]
        b2=packer.add(np.concatenate([reg[1][1], cls[1][1]], axis=0)),
        w3=packer.add(_block_diag(reg[2][0], cls[2][0])),               # [32, 1+cs]
        b3=packer.add(np.concatenate([reg[2][1], cls[2][1]], axis=0)),
    )

    theta = jnp.asarray(packer.finalize())
    plan = dict(convs=conv_plan, ms=ms_plan, heads=head_plan,
                batch=batch, input_shape=input_shape, classify_sum=classify_sum)
    # Folded per-branch params for the pure-JAX reference check.
    ref_params = dict(convs=conv_params, strides=strides,
                      ms=dict(l1=(wl1, bl1), l2=(wl2, bl2),
                              g1=(wg1, bg1), g2=(wg2, bg2)),
                      reg=reg, cls=cls)
    return theta, plan, ref_params


# --------------------------- the fused Pallas kernel --------------------------

def _make_kernel(plan):
    convs, ms, heads = plan["convs"], plan["ms"], plan["heads"]

    def kernel(x_ref, theta_ref, out_ref):
        def rd(entry):
            off, r, c = entry
            return theta_ref[off:off + r, :c]          # static, 8-row-aligned slice

        def dense(x, w_e, b_e, relu):
            y = jnp.dot(x, rd(w_e), preferred_element_type=jnp.float32) + rd(b_e)
            return jnp.maximum(y, 0.0) if relu else y

        a = x_ref[...]                                  # [N*H0, W0*C0]

        # 9x BasicConv2d (conv3x3 + folded BN + ReLU), activations VMEM-resident.
        for layer in convs:
            acc = None
            for p_e, g_e in layer["taps"]:
                lhs = a if p_e is None else jnp.dot(
                    rd(p_e), a, preferred_element_type=jnp.float32)
                t = jnp.dot(lhs, rd(g_e), preferred_element_type=jnp.float32)
                acc = t if acc is None else acc + t
            a = jnp.maximum(acc + rd(layer["bias"]), 0.0)

        # MS_CAM (final spatial is 1x1, so the global avg-pool is the identity).
        h = dense(a, ms["w1"], ms["b1"], relu=True)      # [N, 32]  local|global stage 1
        xlg = dense(h, ms["w2"], ms["b2"], relu=False)   # [N, 64]  == xl + xg
        gated = a * jax.nn.sigmoid(xlg)

        # regression & classify heads (fused along the lane axis).
        z = dense(gated, heads["w1"], heads["b1"], relu=True)   # [N, 64]
        z = dense(z, heads["w2"], heads["b2"], relu=True)       # [N, 32]
        z = dense(z, heads["w3"], heads["b3"], relu=False)      # [N, 1 + classify_sum]
        out_ref[...] = z

    return kernel


def make_forward(plan):
    batch = plan["batch"]
    c0, h0, w0 = plan["input_shape"]
    n_out = 1 + plan["classify_sum"]
    call = pl.pallas_call(
        _make_kernel(plan),
        out_shape=jax.ShapeDtypeStruct((batch, n_out), jnp.float32),
        in_specs=[pl.BlockSpec(memory_space=pltpu.MemorySpace.VMEM),
                  pl.BlockSpec(memory_space=pltpu.MemorySpace.VMEM)],
        out_specs=pl.BlockSpec(memory_space=pltpu.MemorySpace.VMEM),
    )

    def forward(x_nchw, theta):
        # NCHW -> [N*H, W*C] layout expected by the kernel (the only wrapper glue).
        x2 = jnp.transpose(x_nchw, (0, 2, 3, 1)).reshape(batch * h0, w0 * c0)
        out = call(x2.astype(jnp.float32), theta)
        return out[:, :1], out[:, 1:]

    return forward


# --------------------------- pure-JAX reference -------------------------------

def _ref_forward(x_nchw, p):
    hp = jax.lax.Precision.HIGHEST
    x = jnp.transpose(x_nchw, (0, 2, 3, 1)).astype(jnp.float32)
    for (wf, bf), s in zip(p["convs"], p["strides"]):
        N, H, W, C = x.shape
        Ho, Wo = (H - 1) // s + 1, (W - 1) // s + 1
        xp = jnp.pad(x, ((0, 0), (1, 1), (1, 1), (0, 0)))
        acc = None
        for ki in range(3):
            for kj in range(3):
                win = xp[:, ki:ki + (Ho - 1) * s + 1:s, kj:kj + (Wo - 1) * s + 1:s, :]
                t = jnp.einsum('nhwc,cd->nhwd', win, wf[ki, kj], precision=hp)
                acc = t if acc is None else acc + t
        x = jax.nn.relu(acc + bf)
    N, Hf, Wf, C = x.shape
    x2 = x.reshape(N * Hf * Wf, C)
    ms = p["ms"]
    xl = jnp.dot(jax.nn.relu(jnp.dot(x2, ms["l1"][0], precision=hp) + ms["l1"][1]),
                 ms["l2"][0], precision=hp) + ms["l2"][1]
    pooled = x.mean(axis=(1, 2))
    xg = jnp.dot(jax.nn.relu(jnp.dot(pooled, ms["g1"][0], precision=hp) + ms["g1"][1]),
                 ms["g2"][0], precision=hp) + ms["g2"][1]
    wei = jax.nn.sigmoid(xl.reshape(N, Hf, Wf, C) + xg[:, None, None, :])
    gated = x * wei
    flat = jnp.transpose(gated, (0, 3, 1, 2)).reshape(N, -1)   # NCHW flatten

    def head(layers):
        h = flat
        for i, (w, b) in enumerate(layers):
            h = jnp.dot(h, w, precision=hp) + b
            if i < 2:
                h = jax.nn.relu(h)
        return h

    return head(p["reg"]), head(p["cls"])


# --------------------------- main ---------------------------------------------

if __name__ == "__main__":
    # ImageModule(input_shape=(3,16,16), out_features=64, classify_sum=4), batch=2.
    INPUT_SHAPE = (3, 16, 16)
    OUT_FEATURES = 64
    CLASSIFY_SUM = 4
    BATCH = 2

    key = jax.random.PRNGKey(0)
    kx, kp = jax.random.split(key)
    x = jax.random.normal(kx, (BATCH,) + INPUT_SHAPE, jnp.float32)

    theta, plan, ref_params = build_model(kp, INPUT_SHAPE, OUT_FEATURES,
                                          CLASSIFY_SUM, BATCH)
    fwd = jax.jit(make_forward(plan))

    y_reg, y_cls = fwd(x, theta)
    jax.block_until_ready((y_reg, y_cls))

    assert y_reg.shape == (BATCH, 1), y_reg.shape
    assert y_cls.shape == (BATCH, CLASSIFY_SUM), y_cls.shape
    assert bool(jnp.isfinite(y_reg).all()) and bool(jnp.isfinite(y_cls).all())

    # correctness check against a plain-JAX implementation of the same module
    r_reg, r_cls = _ref_forward(x, ref_params)
    np.testing.assert_allclose(np.asarray(y_reg), np.asarray(r_reg),
                               rtol=2e-2, atol=2e-2)
    np.testing.assert_allclose(np.asarray(y_cls), np.asarray(r_cls),
                               rtol=2e-2, atol=2e-2)

    print("KERNEL_OK")
</pallas_src>

<mosaic_0001>
module attributes {stable_mosaic.version = 11 : i64} {
  func.func @kernel(%arg0: memref<32x48xf32, #tpu.memory_space<vmem>>, %arg1: memref<1568x128xf32, #tpu.memory_space<vmem>>, %arg2: memref<2x5xf32, #tpu.memory_space<vmem>>) attributes {dimension_semantics = [], scalar_prefetch = 0 : i64, scratch_operands = 0 : i64, tpu.core_type = #tpu.core_type<tc>} {
    %c0 = arith.constant 0 : index
    %c0_0 = arith.constant 0 : index
    %0 = vector.load %arg0[%c0, %c0_0] : memref<32x48xf32, #tpu.memory_space<vmem>>, vector<32x48xf32>
    %c0_1 = arith.constant 0 : index
    %c0_2 = arith.constant 0 : index
    %1 = vector.load %arg1[%c0_1, %c0_2] : memref<1568x128xf32, #tpu.memory_space<vmem>>, vector<32x32xf32>
    %cst = arith.constant dense<0.000000e+00> : vector<32x48xf32>
    %2 = tpu.matmul %1, %0, %cst {dimension_numbers = #tpu.dot_dimension_numbers<[1], [0], [0], [1], [0, 0, 1, 1], [], []>} : vector<32x32xf32>, vector<32x48xf32>, vector<32x48xf32> -> vector<32x48xf32>
    %c32 = arith.constant 32 : index
    %c0_3 = arith.constant 0 : index
    %3 = vector.load %arg1[%c32, %c0_3] : memref<1568x128xf32, #tpu.memory_space<vmem>>, vector<48x128xf32>
    %cst_4 = arith.constant dense<0.000000e+00> : vector<32x128xf32>
    %4 = tpu.matmul %2, %3, %cst_4 {dimension_numbers = #tpu.dot_dimension_numbers<[1], [0], [0], [1], [0, 0, 1, 1], [], []>} : vector<32x48xf32>, vector<48x128xf32>, vector<32x128xf32> -> vector<32x128xf32>
    %c80 = arith.constant 80 : index
    %c0_5 = arith.constant 0 : index
    %5 = vector.load %arg1[%c80, %c0_5] : memref<1568x128xf32, #tpu.memory_space<vmem>>, vector<48x128xf32>
    %cst_6 = arith.constant dense<0.000000e+00> : vector<32x128xf32>
    %6 = tpu.matmul %0, %5, %cst_6 {dimension_numbers = #tpu.dot_dimension_numbers<[1], [0], [0], [1], [0, 0, 1, 1], [], []>} : vector<32x48xf32>, vector<48x128xf32>, vector<32x128xf32> -> vector<32x128xf32>
    %7 = arith.addf %4, %6 : vector<32x128xf32>
    %c128 = arith.constant 128 : index
    %c0_7 = arith.constant 0 : index
    %8 = vector.load %arg1[%c128, %c0_7] : memref<1568x128xf32, #tpu.memory_space<vmem>>, vector<32x32xf32>
    %cst_8 = arith.constant dense<0.000000e+00> : vector<32x48xf32>
    %9 = tpu.matmul %8, %0, %cst_8 {dimension_numbers = #tpu.dot_dimension_numbers<[1], [0], [0], [1], [0, 0, 1, 1], [], []>} : vector<32x32xf32>, vector<32x48xf32>, vector<32x48xf32> -> vector<32x48xf32>
    %c160 = arith.constant 160 : index
    %c0_9 = arith.constant 0 : index
    %10 = vector.load %arg1[%c160, %c0_9] : memref<1568x128xf32, #tpu.memory_space<vmem>>, vector<48x128xf32>
    %cst_10 = arith.constant dense<0.000000e+00> : vector<32x128xf32>
    %11 = tpu.matmul %9, %10, %cst_10 {dimension_numbers = #tpu.dot_dimension_numbers<[1], [0], [0], [1], [0, 0, 1, 1], [], []>} : vector<32x48xf32>, vector<48x128xf32>, vector<32x128xf32> -> vector<32x128xf32>
    %12 = arith.addf %7, %11 : vector<32x128xf32>
    %c208 = arith.constant 208 : index
    %c0_11 = arith.constant 0 : index
    %13 = vector.load %arg1[%c208, %c0_11] : memref<1568x128xf32, #tpu.memory_space<vmem>>, vector<1x128xf32>
    %14 = vector.broadcast %13 : vector<1x128xf32> to vector<32x128xf32>
    %15 = arith.addf %12, %14 : vector<32x128xf32>
    %cst_12 = arith.constant 0.000000e+00 : f32
    %16 = vector.broadcast %cst_12 : f32 to vector<32x128xf32>
    %17 = arith.maximumf %15, %16 : vector<32x128xf32>
    %c216 = arith.constant 216 : index
    %c0_13 = arith.constant 0 : index
    %18 = vector.load %arg1[%c216, %c0_13] : memref<1568x128xf32, #tpu.memory_space<vmem>>, vector<16x32xf32>
    %cst_14 = arith.constant dense<0.000000e+00> : vector<16x128xf32>
    %19 = tpu.matmul %18, %17, %cst_14 {dimension_numbers = #tpu.dot_dimension_numbers<[1], [0], [0], [1], [0, 0, 1, 1], [], []>} : vector<16x32xf32>, vector<32x128xf32>, vector<16x128xf32> -> vector<16x128xf32>
    %c232 = arith.constant 232 : index
    %c0_15 = arith.constant 0 : index
    %20 = vector.load %arg1[%c232, %c0_15] : memref<1568x128xf32, #tpu.memory_space<vmem>>, vector<128x64xf32>
    %cst_16 = arith.constant dense<0.000000e+00> : vector<16x64xf32>
    %21 = tpu.matmul %19, %20, %cst_16 {dimension_numbers = #tpu.dot_dimension_numbers<[1], [0], [0], [1], [0, 0, 1, 1], [], []>} : vector<16x128xf32>, vector<128x64xf32>, vector<16x64xf32> -> vector<16x64xf32>
    %c360 = arith.constant 360 : index
    %c0_17 = arith.constant 0 : index
    %22 = vector.load %arg1[%c360, %c0_17] : memref<1568x128xf32, #tpu.memory_space<vmem>>, vector<16x32xf32>
    %cst_18 = arith.constant dense<0.000000e+00> : vector<16x128xf32>
    %23 = tpu.matmul %22, %17, %cst_18 {dimension_numbers = #tpu.dot_dimension_numbers<[1], [0], [0], [1], [0, 0, 1, 1], [], []>} : vector<16x32xf32>, vector<32x128xf32>, vector<16x128xf32> -> vector<16x128xf32>
    %c376 = arith.constant 376 : index
    %c0_19 = arith.constant 0 : index
    %24 = vector.load %arg1[%c376, %c0_19] : memref<1568x128xf32, #tpu.memory_space<vmem>>, vector<128x64xf32>
    %cst_20 = arith.constant dense<0.000000e+00> : vector<16x64xf32>
    %25 = tpu.matmul %23, %24, %cst_20 {dimension_numbers = #tpu.dot_dimension_numbers<[1], [0], [0], [1], [0, 0, 1, 1], [], []>} : vector<16x128xf32>, vector<128x64xf32>, vector<16x64xf32> -> vector<16x64xf32>
    %26 = arith.addf %21, %25 : vector<16x64xf32>
    %c504 = arith.constant 504 : index
    %c0_21 = arith.constant 0 : index
    %27 = vector.load %arg1[%c504, %c0_21] : memref<1568x128xf32, #tpu.memory_space<vmem>>, vector<16x32xf32>
    %cst_22 = arith.constant dense<0.000000e+00> : vector<16x128xf32>
    %28 = tpu.matmul %27, %17, %cst_22 {dimension_numbers = #tpu.dot_dimension_numbers<[1], [0], [0], [1], [0, 0, 1, 1], [], []>} : vector<16x32xf32>, vector<32x128xf32>, vector<16x128xf32> -> vector<16x128xf32>
    %c520 = arith.constant 520 : index
    %c0_23 = arith.constant 0 : index
    %29 = vector.load %arg1[%c520, %c0_23] : memref<1568x128xf32, #tpu.memory_space<vmem>>, vector<128x64xf32>
    %cst_24 = arith.constant dense<0.000000e+00> : vector<16x64xf32>
    %30 = tpu.matmul %28, %29, %cst_24 {dimension_numbers = #tpu.dot_dimension_numbers<[1], [0], [0], [1], [0, 0, 1, 1], [], []>} : vector<16x128xf32>, vector<128x64xf32>, vector<16x64xf32> -> vector<16x64xf32>
    %31 = arith.addf %26, %30 : vector<16x64xf32>
    %c648 = arith.constant 648 : index
    %c0_25 = arith.constant 0 : index
    %32 = vector.load %arg1[%c648, %c0_25] : memref<1568x128xf32, #tpu.memory_space<vmem>>, vector<1x64xf32>
    %33 = vector.broadcast %32 : vector<1x64xf32> to vector<16x64xf32>
    %34 = arith.addf %31, %33 : vector<16x64xf32>
    %cst_26 = arith.constant 0.000000e+00 : f32
    %35 = vector.broadcast %cst_26 : f32 to vector<16x64xf32>
    %36 = arith.maximumf %34, %35 : vector<16x64xf32>
    %c656 = arith.constant 656 : index
    %c0_27 = arith.constant 0 : index
    %37 = vector.load %arg1[%c656, %c0_27] : memref<1568x128xf32, #tpu.memory_space<vmem>>, vector<8x16xf32>
    %cst_28 = arith.constant dense<0.000000e+00> : vector<8x64xf32>
    %38 = tpu.matmul %37, %36, %cst_28 {dimension_numbers = #tpu.dot_dimension_numbers<[1], [0], [0], [1], [0, 0, 1, 1], [], []>} : vector<8x16xf32>, vector<16x64xf32>, vector<8x64xf32> -> vector<8x64xf32>
    %c664 = arith.constant 664 : index
    %c0_29 = arith.constant 0 : index
    %39 = vector.load %arg1[%c664, %c0_29] : memref<1568x128xf32, #tpu.memory_space<vmem>>, vector<64x32xf32>
    %cst_30 = arith.constant dense<0.000000e+00> : vector<8x32xf32>
    %40 = tpu.matmul %38, %39, %cst_30 {dimension_numbers = #tpu.dot_dimension_numbers<[1], [0], [0], [1], [0, 0, 1, 1], [], []>} : vector<8x64xf32>, vector<64x32xf32>, vector<8x32xf32> -> vector<8x32xf32>
    %c728 = arith.constant 728 : index
    %c0_31 = arith.constant 0 : index
    %41 = vector.load %arg1[%c728, %c0_31] : memref<1568x128xf32, #tpu.memory_space<vmem>>, vector<8x16xf32>
    %cst_32 = arith.constant dense<0.000000e+00> : vector<8x64xf32>
    %42 = tpu.matmul %41, %36, %cst_32 {dimension_numbers = #tpu.dot_dimension_numbers<[1], [0], [0], [1], [0, 0, 1, 1], [], []>} : vector<8x16xf32>, vector<16x64xf32>, vector<8x64xf32> -> vector<8x64xf32>
    %c736 = arith.constant 736 : index
    %c0_33 = arith.constant 0 : index
    %43 = vector.load %arg1[%c736, %c0_33] : memref<1568x128xf32, #tpu.memory_space<vmem>>, vector<64x32xf32>
    %cst_34 = arith.constant dense<0.000000e+00> : vector<8x32xf32>
    %44 = tpu.matmul %42, %43, %cst_34 {dimension_numbers = #tpu.dot_dimension_numbers<[1], [0], [0], [1], [0, 0, 1, 1], [], []>} : vector<8x64xf32>, vector<64x32xf32>, vector<8x32xf32> -> vector<8x32xf32>
    %45 = arith.addf %40, %44 : vector<8x32xf32>
    %c800 = arith.constant 800 : index
    %c0_35 = arith.constant 0 : index
    %46 = vector.load %arg1[%c800, %c0_35] : memref<1568x128xf32, #tpu.memory_space<vmem>>, vector<8x16xf32>
    %cst_36 = arith.constant dense<0.000000e+00> : vector<8x64xf32>
    %47 = tpu.matmul %46, %36, %cst_36 {dimension_numbers = #tpu.dot_dimension_numbers<[1], [0], [0], [1], [0, 0, 1, 1], [], []>} : vector<8x16xf32>, vector<16x64xf32>, vector<8x64xf32> -> vector<8x64xf32>
    %c808 = arith.constant 808 : index
    %c0_37 = arith.constant 0 : index
    %48 = vector.load %arg1[%c808, %c0_37] : memref<1568x128xf32, #tpu.memory_space<vmem>>, vector<64x32xf32>
    %cst_38 = arith.constant dense<0.000000e+00> : vector<8x32xf32>
    %49 = tpu.matmul %47, %48, %cst_38 {dimension_numbers = #tpu.dot_dimension_numbers<[1], [0], [0], [1], [0, 0, 1, 1], [], []>} : vector<8x64xf32>, vector<64x32xf32>, vector<8x32xf32> -> vector<8x32xf32>
    %50 = arith.addf %45, %49 : vector<8x32xf32>
    %c872 = arith.constant 872 : index
    %c0_39 = arith.constant 0 : index
    %51 = vector.load %arg1[%c872, %c0_39] : memref<1568x128xf32, #tpu.memory_space<vmem>>, vector<1x32xf32>
    %52 = vector.broadcast %51 : vector<1x32xf32> to vector<8x32xf32>
    %53 = arith.addf %50, %52 : vector<8x32xf32>
    %cst_40 = arith.constant 0.000000e+00 : f32
    %54 = vector.broadcast %cst_40 : f32 to vector<8x32xf32>
    %55 = arith.maximumf %53, %54 : vector<8x32xf32>
    %c880 = arith.constant 880 : index
    %c0_41 = arith.constant 0 : index
    %56 = vector.load %arg1[%c880, %c0_41] : memref<1568x128xf32, #tpu.memory_space<vmem>>, vector<4x8xf32>
    %cst_42 = arith.constant dense<0.000000e+00> : vector<4x32xf32>
    %57 = tpu.matmul %56, %55, %cst_42 {dimension_numbers = #tpu.dot_dimension_numbers<[1], [0], [0], [1], [0, 0, 1, 1], [], []>} : vector<4x8xf32>, vector<8x32xf32>, vector<4x32xf32> -> vector<4x32xf32>
    %c888 = arith.constant 888 : index
    %c0_43 = arith.constant 0 : index
    %58 = vector.load %arg1[%c888, %c0_43] : memref<1568x128xf32, #tpu.memory_space<vmem>>, vector<32x32xf32>
    %cst_44 = arith.constant dense<0.000000e+00> : vector<4x32xf32>
    %59 = tpu.matmul %57, %58, %cst_44 {dimension_numbers = #tpu.dot_dimension_numbers<[1], [0], [0], [1], [0, 0, 1, 1], [], []>} : vector<4x32xf32>, vector<32x32xf32>, vector<4x32xf32> -> vector<4x32xf32>
    %c920 = arith.constant 920 : index
    %c0_45 = arith.constant 0 : index
    %60 = vector.load %arg1[%c920, %c0_45] : memref<1568x128xf32, #tpu.memory_space<vmem>>, vector<4x8xf32>
    %cst_46 = arith.constant dense<0.000000e+00> : vector<4x32xf32>
    %61 = tpu.matmul %60, %55, %cst_46 {dimension_numbers = #tpu.dot_dimension_numbers<[1], [0], [0], [1], [0, 0, 1, 1], [], []>} : vector<4x8xf32>, vector<8x32xf32>, vector<4x32xf32> -> vector<4x32xf32>
    %c928 = arith.constant 928 : index
    %c0_47 = arith.constant 0 : index
    %62 = vector.load %arg1[%c928, %c0_47] : memref<1568x128xf32, #tpu.memory_space<vmem>>, vector<32x32xf32>
    %cst_48 = arith.constant dense<0.000000e+00> : vector<4x32xf32>
    %63 = tpu.matmul %61, %62, %cst_48 {dimension_numbers = #tpu.dot_dimension_numbers<[1], [0], [0], [1], [0, 0, 1, 1], [], []>} : vector<4x32xf32>, vector<32x32xf32>, vector<4x32xf32> -> vector<4x32xf32>
    %64 = arith.addf %59, %63 : vector<4x32xf32>
    %c960 = arith.constant 960 : index
    %c0_49 = arith.constant 0 : index
    %65 = vector.load %arg1[%c960, %c0_49] : memref<1568x128xf32, #tpu.memory_space<vmem>>, vector<4x8xf32>
    %cst_50 = arith.constant dense<0.000000e+00> : vector<4x32xf32>
    %66 = tpu.matmul %65, %55, %cst_50 {dimension_numbers = #tpu.dot_dimension_numbers<[1], [0], [0], [1], [0, 0, 1, 1], [], []>} : vector<4x8xf32>, vector<8x32xf32>, vector<4x32xf32> -> vector<4x32xf32>
    %c968 = arith.constant 968 : index
    %c0_51 = arith.constant 0 : index
    %67 = vector.load %arg1[%c968, %c0_51] : memref<1568x128xf32, #tpu.memory_space<vmem>>, vector<32x32xf32>
    %cst_52 = arith.constant dense<0.000000e+00> : vector<4x32xf32>
    %68 = tpu.matmul %66, %67, %cst_52 {dimension_numbers = #tpu.dot_dimension_numbers<[1], [0], [0], [1], [0, 0, 1, 1], [], []>} : vector<4x32xf32>, vector<32x32xf32>, vector<4x32xf32> -> vector<4x32xf32>
    %69 = arith.addf %64, %68 : vector<4x32xf32>
    %c1000 = arith.constant 1000 : index
    %c0_53 = arith.constant 0 : index
    %70 = vector.load %arg1[%c1000, %c0_53] : memref<1568x128xf32, #tpu.memory_space<vmem>>, vector<1x32xf32>
    %71 = vector.broadcast %70 : vector<1x32xf32> to vector<4x32xf32>
    %72 = arith.addf %69, %71 : vector<4x32xf32>
    %cst_54 = arith.constant 0.000000e+00 : f32
    %73 = vector.broadcast %cst_54 : f32 to vector<4x32xf32>
    %74 = arith.maximumf %72, %73 : vector<4x32xf32>
    %c1008 = arith.constant 1008 : index
    %c0_55 = arith.constant 0 : index
    %75 = vector.load %arg1[%c1008, %c0_55] : memref<1568x128xf32, #tpu.memory_space<vmem>>, vector<2x4xf32>
    %cst_56 = arith.constant dense<0.000000e+00> : vector<2x32xf32>
    %76 = tpu.matmul %75, %74, %cst_56 {dimension_numbers = #tpu.dot_dimension_numbers<[1], [0], [0], [1], [0, 0, 1, 1], [], []>} : vector<2x4xf32>, vector<4x32xf32>, vector<2x32xf32> -> vector<2x32xf32>
    %c1016 = arith.constant 1016 : index
    %c0_57 = arith.constant 0 : index
    %77 = vector.load %arg1[%c1016, %c0_57] : memref<1568x128xf32, #tpu.memory_space<vmem>>, vector<32x16xf32>
    %cst_58 = arith.constant dense<0.000000e+00> : vector<2x16xf32>
    %78 = tpu.matmul %76, %77, %cst_58 {dimension_numbers = #tpu.dot_dimension_numbers<[1], [0], [0], [1], [0, 0, 1, 1], [], []>} : vector<2x32xf32>, vector<32x16xf32>, vector<2x16xf32> -> vector<2x16xf32>
    %c1048 = arith.constant 1048 : index
    %c0_59 = arith.constant 0 : index
    %79 = vector.load %arg1[%c1048, %c0_59] : memref<1568x128xf32, #tpu.memory_space<vmem>>, vector<2x4xf32>
    %cst_60 = arith.constant dense<0.000000e+00> : vector<2x32xf32>
    %80 = tpu.matmul %79, %74, %cst_60 {dimension_numbers = #tpu.dot_dimension_numbers<[1], [0], [0], [1], [0, 0, 1, 1], [], []>} : vector<2x4xf32>, vector<4x32xf32>, vector<2x32xf32> -> vector<2x32xf32>
    %c1056 = arith.constant 1056 : index
    %c0_61 = arith.constant 0 : index
    %81 = vector.load %arg1[%c1056, %c0_61] : memref<1568x128xf32, #tpu.memory_space<vmem>>, vector<32x16xf32>
    %cst_62 = arith.constant dense<0.000000e+00> : vector<2x16xf32>
    %82 = tpu.matmul %80, %81, %cst_62 {dimension_numbers = #tpu.dot_dimension_numbers<[1], [0], [0], [1], [0, 0, 1, 1], [], []>} : vector<2x32xf32>, vector<32x16xf32>, vector<2x16xf32> -> vector<2x16xf32>
    %83 = arith.addf %78, %82 : vector<2x16xf32>
    %c1088 = arith.constant 1088 : index
    %c0_63 = arith.constant 0 : index
    %84 = vector.load %arg1[%c1088, %c0_63] : memref<1568x128xf32, #tpu.memory_space<vmem>>, vector<1x16xf32>
    %85 = vector.broadcast %84 : vector<1x16xf32> to vector<2x16xf32>
    %86 = arith.addf %83, %85 : vector<2x16xf32>
    %cst_64 = arith.constant 0.000000e+00 : f32
    %87 = vector.broadcast %cst_64 : f32 to vector<2x16xf32>
    %88 = arith.maximumf %86, %87 : vector<2x16xf32>
    %c1096 = arith.constant 1096 : index
    %c0_65 = arith.constant 0 : index
    %89 = vector.load %arg1[%c1096, %c0_65] : memref<1568x128xf32, #tpu.memory_space<vmem>>, vector<16x32xf32>
    %cst_66 = arith.constant dense<0.000000e+00> : vector<2x32xf32>
    %90 = tpu.matmul %88, %89, %cst_66 {dimension_numbers = #tpu.dot_dimension_numbers<[1], [0], [0], [1], [0, 0, 1, 1], [], []>} : vector<2x16xf32>, vector<16x32xf32>, vector<2x32xf32> -> vector<2x32xf32>
    %c1112 = arith.constant 1112 : index
    %c0_67 = arith.constant 0 : index
    %91 = vector.load %arg1[%c1112, %c0_67] : memref<1568x128xf32, #tpu.memory_space<vmem>>, vector<1x32xf32>
    %92 = vector.broadcast %91 : vector<1x32xf32> to vector<2x32xf32>
    %93 = arith.addf %90, %92 : vector<2x32xf32>
    %cst_68 = arith.constant 0.000000e+00 : f32
    %94 = vector.broadcast %cst_68 : f32 to vector<2x32xf32>
    %95 = arith.maximumf %93, %94 : vector<2x32xf32>
    %c1120 = arith.constant 1120 : index
    %c0_69 = arith.constant 0 : index
    %96 = vector.load %arg1[%c1120, %c0_69] : memref<1568x128xf32, #tpu.memory_space<vmem>>, vector<32x32xf32>
    %cst_70 = arith.constant dense<0.000000e+00> : vector<2x32xf32>
    %97 = tpu.matmul %95, %96, %cst_70 {dimension_numbers = #tpu.dot_dimension_numbers<[1], [0], [0], [1], [0, 0, 1, 1], [], []>} : vector<2x32xf32>, vector<32x32xf32>, vector<2x32xf32> -> vector<2x32xf32>
    %c1152 = arith.constant 1152 : index
    %c0_71 = arith.constant 0 : index
    %98 = vector.load %arg1[%c1152, %c0_71] : memref<1568x128xf32, #tpu.memory_space<vmem>>, vector<1x32xf32>
    %99 = vector.broadcast %98 : vector<1x32xf32> to vector<2x32xf32>
    %100 = arith.addf %97, %99 : vector<2x32xf32>
    %cst_72 = arith.constant 0.000000e+00 : f32
    %101 = vector.broadcast %cst_72 : f32 to vector<2x32xf32>
    %102 = arith.maximumf %100, %101 : vector<2x32xf32>
    %c1160 = arith.constant 1160 : index
    %c0_73 = arith.constant 0 : index
    %103 = vector.load %arg1[%c1160, %c0_73] : memref<1568x128xf32, #tpu.memory_space<vmem>>, vector<32x64xf32>
    %cst_74 = arith.constant dense<0.000000e+00> : vector<2x64xf32>
    %104 = tpu.matmul %102, %103, %cst_74 {dimension_numbers = #tpu.dot_dimension_numbers<[1], [0], [0], [1], [0, 0, 1, 1], [], []>} : vector<2x32xf32>, vector<32x64xf32>, vector<2x64xf32> -> vector<2x64xf32>
    %c1192 = arith.constant 1192 : index
    %c0_75 = arith.constant 0 : index
    %105 = vector.load %arg1[%c1192, %c0_75] : memref<1568x128xf32, #tpu.memory_space<vmem>>, vector<1x64xf32>
    %106 = vector.broadcast %105 : vector<1x64xf32> to vector<2x64xf32>
    %107 = arith.addf %104, %106 : vector<2x64xf32>
    %cst_76 = arith.constant 0.000000e+00 : f32
    %108 = vector.broadcast %cst_76 : f32 to vector<2x64xf32>
    %109 = arith.maximumf %107, %108 : vector<2x64xf32>
    %c1200 = arith.constant 1200 : index
    %c0_77 = arith.constant 0 : index
    %110 = vector.load %arg1[%c1200, %c0_77] : memref<1568x128xf32, #tpu.memory_space<vmem>>, vector<64x64xf32>
    %cst_78 = arith.constant dense<0.000000e+00> : vector<2x64xf32>
    %111 = tpu.matmul %109, %110, %cst_78 {dimension_numbers = #tpu.dot_dimension_numbers<[1], [0], [0], [1], [0, 0, 1, 1], [], []>} : vector<2x64xf32>, vector<64x64xf32>, vector<2x64xf32> -> vector<2x64xf32>
    %c1264 = arith.constant 1264 : index
    %c0_79 = arith.constant 0 : index
    %112 = vector.load %arg1[%c1264, %c0_79] : memref<1568x128xf32, #tpu.memory_space<vmem>>, vector<1x64xf32>
    %113 = vector.broadcast %112 : vector<1x64xf32> to vector<2x64xf32>
    %114 = arith.addf %111, %113 : vector<2x64xf32>
    %cst_80 = arith.constant 0.000000e+00 : f32
    %115 = vector.broadcast %cst_80 : f32 to vector<2x64xf32>
    %116 = arith.maximumf %114, %115 : vector<2x64xf32>
    %c1272 = arith.constant 1272 : index
    %c0_81 = arith.constant 0 : index
    %117 = vector.load %arg1[%c1272, %c0_81] : memref<1568x128xf32, #tpu.memory_space<vmem>>, vector<64x32xf32>
    %cst_82 = arith.constant dense<0.000000e+00> : vector<2x32xf32>
    %118 = tpu.matmul %116, %117, %cst_82 {dimension_numbers = #tpu.dot_dimension_numbers<[1], [0], [0], [1], [0, 0, 1, 1], [], []>} : vector<2x64xf32>, vector<64x32xf32>, vector<2x32xf32> -> vector<2x32xf32>
    %c1336 = arith.constant 1336 : index
    %c0_83 = arith.constant 0 : index
    %119 = vector.load %arg1[%c1336, %c0_83] : memref<1568x128xf32, #tpu.memory_space<vmem>>, vector<1x32xf32>
    %120 = vector.broadcast %119 : vector<1x32xf32> to vector<2x32xf32>
    %121 = arith.addf %118, %120 : vector<2x32xf32>
    %cst_84 = arith.constant 0.000000e+00 : f32
    %122 = vector.broadcast %cst_84 : f32 to vector<2x32xf32>
    %123 = arith.maximumf %121, %122 : vector<2x32xf32>
    %c1344 = arith.constant 1344 : index
    %c0_85 = arith.constant 0 : index
    %124 = vector.load %arg1[%c1344, %c0_85] : memref<1568x128xf32, #tpu.memory_space<vmem>>, vector<32x64xf32>
    %cst_86 = arith.constant dense<0.000000e+00> : vector<2x64xf32>
    %125 = tpu.matmul %123, %124, %cst_86 {dimension_numbers = #tpu.dot_dimension_numbers<[1], [0], [0], [1], [0, 0, 1, 1], [], []>} : vector<2x32xf32>, vector<32x64xf32>, vector<2x64xf32> -> vector<2x64xf32>
    %c1376 = arith.constant 1376 : index
    %c0_87 = arith.constant 0 : index
    %126 = vector.load %arg1[%c1376, %c0_87] : memref<1568x128xf32, #tpu.memory_space<vmem>>, vector<1x64xf32>
    %127 = vector.broadcast %126 : vector<1x64xf32> to vector<2x64xf32>
    %128 = arith.addf %125, %127 : vector<2x64xf32>
    %129 = arith.negf %128 : vector<2x64xf32>
    %130 = math.exp %129 : vector<2x64xf32>
    %cst_88 = arith.constant 1.000000e+00 : f32
    %131 = vector.broadcast %cst_88 : f32 to vector<2x64xf32>
    %132 = arith.addf %131, %130 : vector<2x64xf32>
    %133 = arith.divf %131, %132 : vector<2x64xf32>
    %134 = arith.mulf %116, %133 : vector<2x64xf32>
    %c1384 = arith.constant 1384 : index
    %c0_89 = arith.constant 0 : index
    %135 = vector.load %arg1[%c1384, %c0_89] : memref<1568x128xf32, #tpu.memory_space<vmem>>, vector<64x64xf32>
    %cst_90 = arith.constant dense<0.000000e+00> : vector<2x64xf32>
    %136 = tpu.matmul %134, %135, %cst_90 {dimension_numbers = #tpu.dot_dimension_numbers<[1], [0], [0], [1], [0, 0, 1, 1], [], []>} : vector<2x64xf32>, vector<64x64xf32>, vector<2x64xf32> -> vector<2x64xf32>
    %c1448 = arith.constant 1448 : index
    %c0_91 = arith.constant 0 : index
    %137 = vector.load %arg1[%c1448, %c0_91] : memref<1568x128xf32, #tpu.memory_space<vmem>>, vector<1x64xf32>
    %138 = vector.broadcast %137 : vector<1x64xf32> to vector<2x64xf32>
    %139 = arith.addf %136, %138 : vector<2x64xf32>
    %cst_92 = arith.constant 0.000000e+00 : f32
    %140 = vector.broadcast %cst_92 : f32 to vector<2x64xf32>
    %141 = arith.maximumf %139, %140 : vector<2x64xf32>
    %c1456 = arith.constant 1456 : index
    %c0_93 = arith.constant 0 : index
    %142 = vector.load %arg1[%c1456, %c0_93] : memref<1568x128xf32, #tpu.memory_space<vmem>>, vector<64x32xf32>
    %cst_94 = arith.constant dense<0.000000e+00> : vector<2x32xf32>
    %143 = tpu.matmul %141, %142, %cst_94 {dimension_numbers = #tpu.dot_dimension_numbers<[1], [0], [0], [1], [0, 0, 1, 1], [], []>} : vector<2x64xf32>, vector<64x32xf32>, vector<2x32xf32> -> vector<2x32xf32>
    %c1520 = arith.constant 1520 : index
    %c0_95 = arith.constant 0 : index
    %144 = vector.load %arg1[%c1520, %c0_95] : memref<1568x128xf32, #tpu.memory_space<vmem>>, vector<1x32xf32>
    %145 = vector.broadcast %144 : vector<1x32xf32> to vector<2x32xf32>
    %146 = arith.addf %143, %145 : vector<2x32xf32>
    %cst_96 = arith.constant 0.000000e+00 : f32
    %147 = vector.broadcast %cst_96 : f32 to vector<2x32xf32>
    %148 = arith.maximumf %146, %147 : vector<2x32xf32>
    %c1528 = arith.constant 1528 : index
    %c0_97 = arith.constant 0 : index
    %149 = vector.load %arg1[%c1528, %c0_97] : memref<1568x128xf32, #tpu.memory_space<vmem>>, vector<32x5xf32>
    %cst_98 = arith.constant dense<0.000000e+00> : vector<2x5xf32>
    %150 = tpu.matmul %148, %149, %cst_98 {dimension_numbers = #tpu.dot_dimension_numbers<[1], [0], [0], [1], [0, 0, 1, 1], [], []>} : vector<2x32xf32>, vector<32x5xf32>, vector<2x5xf32> -> vector<2x5xf32>
    %c1560 = arith.constant 1560 : index
    %c0_99 = arith.constant 0 : index
    %151 = vector.load %arg1[%c1560, %c0_99] : memref<1568x128xf32, #tpu.memory_space<vmem>>, vector<1x5xf32>
    %152 = vector.broadcast %151 : vector<1x5xf32> to vector<2x5xf32>
    %153 = arith.addf %150, %152 : vector<2x5xf32>
    %c0_100 = arith.constant 0 : index
    %c0_101 = arith.constant 0 : index
    %154 = vector.load %arg2[%c0_100, %c0_101] : memref<2x5xf32, #tpu.memory_space<vmem>>, vector<2x5xf32>
    tpu.vector_store %arg2[%c0_100, %c0_101], %153 {strides = array<i32>} : memref<2x5xf32, #tpu.memory_space<vmem>>, vector<2x5xf32>,
    return
  }
}

</mosaic_0001>

<llo_original>
// kernel: forward.1
$region0: #{forward.1}
  #allocation0 [shape = 'u32[]', space=smem, size = 0x4, offset = 0x4, fixed_abs, tag = 'smem constant byte address 0x4 - core index']
  #allocation1 [shape = 'u32[144,128]{1,0:T(1,128)}', space=vmem, size = 0x12000, scoped, tag = 'internal scratch']
  %s0 = inlined_call_operand.vmem [shape: f32[32,48], index: 0, kind: input, shape index: {}]
  %s1 = inlined_call_operand.hbm [shape: f32[1568,128], index: 1, kind: input, shape index: {}]
  %s2 = inlined_call_operand.vmem [shape: f32[2,5], index: 2, kind: output, shape index: {}]
  %s3 = sld [smem:[#allocation0]]
  $region22: #{forward.1} parent=0
    _
  %s5 = ssub.s32 1, %s3
  %s6 = scalar_select 0, %s5, %s3
  $region1: #{forward.1} parent=0
    #allocation2 [shape = 'u8[802816]{0}', space=vmem, size = 0xc4000, scoped, tag = 'input window, operand 1, single buffered']
    #allocation3 [shape = 's32[1]{0}', space=sflag, size = 0x4, scoped, tag = 'scoped memory for forward.1']
    %7 = vsyncpa [#allocation3], 0
    // Predicated region
    $region2: #{forward.1} parent=1 // pred_check
      _
    $region3: #{forward.1} parent=1 // pred_check_branch
      %9 = sbr.rel (0) target = $region5
    $region4: #{forward.1} parent=1 // pred_region
      _
    $region5: #{forward.1} parent=1 // pred_fallthru
      _
    // Predicated region
    $region6: #{forward.1} parent=1 // pred_check
      _
    $region7: #{forward.1} parent=1 // pred_check_branch
      %11 = sbr.rel (0) target = $region9
    $region8: #{forward.1} parent=1 // pred_region
      %s13 = ssub.s32 25088, 25088
      %14 = vsyncadd [#allocation3], %s13
      %s15 = sshll.u32 [#allocation2], 4
      %s16 = int_to_ptr.vmem [resolvable:$true] %s15
      %21 = dma.hbm_to_vmem [thread:$0]  %s1, 25088, %s16, [#allocation3], 128, 128, 8
    $region9: #{forward.1} parent=1 // pred_fallthru
      _
    // Predicated region
    $region10: #{forward.1} parent=1 // pred_check
      _
    $region11: #{forward.1} parent=1 // pred_check_branch
      %23 = sbr.rel (0) target = $region13
    $region12: #{forward.1} parent=1 // pred_region
      %24 = dma.done [#allocation3], 25088
    $region13: #{forward.1} parent=1 // pred_fallthru
      _
    %v25 = vld [vmem:[%s0] sm:$0xff]
    %v26 = vld [vmem:[%s0 + $0x8] sm:$0xff]
    %v27 = vld [vmem:[%s0 + $0x10] sm:$0xff]
    %v28 = vld [vmem:[%s0 + $0x18] sm:$0xff]
    %v29 = vld [vmem:[#allocation2] sm:$0xff]
    %v30 = vld [vmem:[#allocation2 + $0x8] sm:$0xff]
    %v31 = vld [vmem:[#allocation2 + $0x10] sm:$0xff]
    %v32 = vld [vmem:[#allocation2 + $0x18] sm:$0xff]
    %vm33 = vcmask 261120
    %v35 = vsel %vm33, %v29, 0
    %v38 = vsel %vm33, %v30, 0
    %v41 = vsel %vm33, %v31, 0
    %v44 = vsel %vm33, %v32, 0
    %46 = vmatprep.subr.mxu0 0.0
    %47 = vmatpush1.msra.mxu0 0.0
    %48 = vmatprep.subr.mxu0 0.0
    %49 = vmatpush1.msra.mxu0 0.0
    %50 = vmatprep.subr.mxu0 0.0
    %51 = vmatpush1.msra.mxu0 0.0
    %52 = vmatprep.subr.mxu0 0.0
    %53 = vmatpush1.msra.mxu0 0.0
    %54 = vmatprep.subr.mxu0 0.0
    %55 = vmatpush1.msra.mxu0 0.0
    %56 = vmatprep.subr.mxu0 0.0
    %57 = vmatpush1.msra.mxu0 0.0
    %58 = vmatprep.subr.mxu0 0.0
    %59 = vmatpush1.msra.mxu0 0.0
    %60 = vmatprep.subr.mxu0 0.0
    %61 = vmatpush1.msra.mxu0 0.0
    %62 = vmatprep.subr.mxu0 0.0
    %63 = vmatpush1.msra.mxu0 0.0
    %64 = vmatprep.subr.mxu0 0.0
    %65 = vmatpush1.msra.mxu0 0.0
    %66 = vmatprep.subr.mxu0 0.0
    %67 = vmatpush1.msra.mxu0 0.0
    %68 = vmatprep.subr.mxu0 0.0
    %69 = vmatpush1.msra.mxu0 0.0
    %70 = vmatprep.subr.mxu0 0.0
    %71 = vmatpush1.msra.mxu0 %v28
    %72 = vmatprep.subr.mxu0 0.0
    %73 = vmatpush1.msra.mxu0 %v27
    %74 = vmatprep.subr.mxu0 0.0
    %75 = vmatpush1.msra.mxu0 %v26
    %76 = vmatprep.subr.mxu0 0.0
    %77 = vmatpush1.msra.mxu0 %v25
    %78 = vmatprep.subr.mxu0 0.0
    %79 = vmatpush2.msra.mxu0 0.0
    %80 = vmatprep.subr.mxu0 0.0
    %81 = vmatpush2.msra.mxu0 0.0
    %82 = vmatprep.subr.mxu0 0.0
    %83 = vmatpush2.msra.mxu0 0.0
    %84 = vmatprep.subr.mxu0 0.0
    %85 = vmatpush2.msra.mxu0 0.0
    %86 = vmatprep.subr.mxu0 0.0
    %87 = vmatpush2.msra.mxu0 0.0
    %88 = vmatprep.subr.mxu0 0.0
    %89 = vmatpush2.msra.mxu0 0.0
    %90 = vmatprep.subr.mxu0 0.0
    %91 = vmatpush2.msra.mxu0 0.0
    %92 = vmatprep.subr.mxu0 0.0
    %93 = vmatpush2.msra.mxu0 0.0
    %94 = vmatprep.subr.mxu0 0.0
    %95 = vmatpush2.msra.mxu0 0.0
    %96 = vmatprep.subr.mxu0 0.0
    %97 = vmatpush2.msra.mxu0 0.0
    %98 = vmatprep.subr.mxu0 0.0
    %99 = vmatpush2.msra.mxu0 0.0
    %100 = vmatprep.subr.mxu0 0.0
    %101 = vmatpush2.msra.mxu0 0.0
    %102 = vmatprep.subr.mxu0 0.0
    %103 = vmatpush2.msra.mxu0 0.0
    %104 = vmatprep.subr.mxu0 0.0
    %105 = vmatpush2.msra.mxu0 0.0
    %106 = vmatprep.subr.mxu0 0.0
    %107 = vmatpush2.msra.mxu0 0.0
    %108 = vmatprep.subr.mxu0 0.0
    %109 = vmatpush2.msra.mxu0 0.0
    %110 = vmatprep.mubr.f32.mxu0 0.0
    %111 = vmatmul.mubr.f32.gmra.mxu0 %v35
    %v112 = vpop.f32.mrf.mxu0
    %v113 = vadd.f32 0.0, %v112
    %v114 = vpop.f32.mrf.mxu0
    %115 = vmatprep.mubr.f32.mxu0 0.0
    %116 = vmatmul.mubr.f32.gmra.mxu0 %v38
    %v117 = vpop.f32.mrf.mxu0
    %v118 = vadd.f32 0.0, %v117
    %v119 = vpop.f32.mrf.mxu0
    %120 = vmatprep.mubr.f32.mxu0 0.0
    %121 = vmatmul.mubr.f32.gmra.mxu0 %v41
    %v122 = vpop.f32.mrf.mxu0
    %v123 = vadd.f32 0.0, %v122
    %v124 = vpop.f32.mrf.mxu0
    %125 = vmatprep.mubr.f32.mxu0 0.0
    %126 = vmatmul.mubr.f32.gmra.mxu0 %v44
    %v127 = vpop.f32.mrf.mxu0
    %v128 = vadd.f32 0.0, %v127
    %v129 = vpop.f32.mrf.mxu0
    %130 = vdwg.mxu0
    %v131 = vld [vmem:[#allocation2 + $0x20] sm:$0xff]
    %v132 = vld [vmem:[#allocation2 + $0x28] sm:$0xff]
    %v133 = vld [vmem:[#allocation2 + $0x30] sm:$0xff]
    %v134 = vld [vmem:[#allocation2 + $0x38] sm:$0xff]
    %v135 = vld [vmem:[#allocation2 + $0x40] sm:$0xff]
    %v136 = vld [vmem:[#allocation2 + $0x48] sm:$0xff]
    %v137 = vld [vmem:[#allocation2 + $0x50] sm:$0xff]
    %v138 = vld [vmem:[#allocation2 + $0x58] sm:$0xff]
    %v139 = vld [vmem:[#allocation2 + $0x60] sm:$0xff]
    %v140 = vld [vmem:[#allocation2 + $0x68] sm:$0xff]
    %v141 = vld [vmem:[#allocation2 + $0x70] sm:$0xff]
    %v142 = vld [vmem:[#allocation2 + $0x78] sm:$0xff]
    %vm143 = vcmask 392192
    %v145 = vsel %vm143, %v25, 0
    %v148 = vsel %vm143, %v26, 0
    %v151 = vsel %vm143, %v27, 0
    %v154 = vsel %vm143, %v28, 0
    %156 = vmatprep.subr.mxu0 0.0
    %157 = vmatpush1.msra.mxu0 0.0
    %158 = vmatprep.subr.mxu0 0.0
    %159 = vmatpush1.msra.mxu0 0.0
    %160 = vmatprep.subr.mxu0 0.0
    %161 = vmatpush1.msra.mxu0 0.0
    %162 = vmatprep.subr.mxu0 0.0
    %163 = vmatpush1.msra.mxu0 0.0
    %164 = vmatprep.subr.mxu0 0.0
    %165 = vmatpush1.msra.mxu0 0.0
    %166 = vmatprep.subr.mxu0 0.0
    %167 = vmatpush1.msra.mxu0 0.0
    %168 = vmatprep.subr.mxu0 0.0
    %169 = vmatpush1.msra.mxu0 0.0
    %170 = vmatprep.subr.mxu0 0.0
    %171 = vmatpush1.msra.mxu0 0.0
    %172 = vmatprep.subr.mxu0 0.0
    %173 = vmatpush1.msra.mxu0 0.0
    %174 = vmatprep.subr.mxu0 0.0
    %175 = vmatpush1.msra.mxu0 0.0
    %176 = vmatprep.subr.mxu0 0.0
    %177 = vmatpush1.msra.mxu0 %v142
    %178 = vmatprep.subr.mxu0 0.0
    %179 = vmatpush1.msra.mxu0 %v141
    %180 = vmatprep.subr.mxu0 0.0
    %181 = vmatpush1.msra.mxu0 %v140
    %182 = vmatprep.subr.mxu0 0.0
    %183 = vmatpush1.msra.mxu0 %v139
    %184 = vmatprep.subr.mxu0 0.0
    %185 = vmatpush1.msra.mxu0 %v138
    %186 = vmatprep.subr.mxu0 0.0
    %187 = vmatpush1.msra.mxu0 %v137
    %188 = vmatprep.subr.mxu0 0.0
    %189 = vmatpush2.msra.mxu0 0.0
    %190 = vmatprep.subr.mxu0 0.0
    %191 = vmatpush2.msra.mxu0 0.0
    %192 = vmatprep.subr.mxu0 0.0
    %193 = vmatpush2.msra.mxu0 0.0
    %194 = vmatprep.subr.mxu0 0.0
    %195 = vmatpush2.msra.mxu0 0.0
    %196 = vmatprep.subr.mxu0 0.0
    %197 = vmatpush2.msra.mxu0 0.0
    %198 = vmatprep.subr.mxu0 0.0
    %199 = vmatpush2.msra.mxu0 0.0
    %200 = vmatprep.subr.mxu0 0.0
    %201 = vmatpush2.msra.mxu0 0.0
    %202 = vmatprep.subr.mxu0 0.0
    %203 = vmatpush2.msra.mxu0 0.0
    %204 = vmatprep.subr.mxu0 0.0
    %205 = vmatpush2.msra.mxu0 0.0
    %206 = vmatprep.subr.mxu0 0.0
    %207 = vmatpush2.msra.mxu0 0.0
    %208 = vmatprep.subr.mxu0 0.0
    %209 = vmatpush2.msra.mxu0 0.0
    %210 = vmatprep.subr.mxu0 0.0
    %211 = vmatpush2.msra.mxu0 0.0
    %212 = vmatprep.subr.mxu0 0.0
    %213 = vmatpush2.msra.mxu0 0.0
    %214 = vmatprep.subr.mxu0 0.0
    %215 = vmatpush2.msra.mxu0 0.0
    %216 = vmatprep.subr.mxu0 0.0
    %217 = vmatpush2.msra.mxu0 0.0
    %218 = vmatprep.subr.mxu0 0.0
    %219 = vmatpush2.msra.mxu0 0.0
    %220 = vmatprep.mubr.f32.mxu0 0.0
    %221 = vmatmul.mubr.f32.gmra.mxu0 %v145
    %v222 = vpop.f32.mrf.mxu0
    %v223 = vadd.f32 0.0, %v222
    %v224 = vpop.f32.mrf.mxu0
    %225 = vmatprep.mubr.f32.mxu0 0.0
    %226 = vmatmul.mubr.f32.gmra.mxu0 %v148
    %v227 = vpop.f32.mrf.mxu0
    %v228 = vadd.f32 0.0, %v227
    %v229 = vpop.f32.mrf.mxu0
    %230 = vmatprep.mubr.f32.mxu0 0.0
    %231 = vmatmul.mubr.f32.gmra.mxu0 %v151
    %v232 = vpop.f32.mrf.mxu0
    %v233 = vadd.f32 0.0, %v232
    %v234 = vpop.f32.mrf.mxu0
    %235 = vmatprep.mubr.f32.mxu0 0.0
    %236 = vmatmul.mubr.f32.gmra.mxu0 %v154
    %v237 = vpop.f32.mrf.mxu0
    %v238 = vadd.f32 0.0, %v237
    %v239 = vpop.f32.mrf.mxu0
    %240 = vdwg.mxu0
    %v242 = vsel %vm143, %v113, 0
    %v245 = vsel %vm143, %v118, 0
    %v248 = vsel %vm143, %v123, 0
    %v251 = vsel %vm143, %v128, 0
    %253 = vmatprep.subr.mxu0 0.0
    %254 = vmatpush1.msra.mxu0 0.0
    %255 = vmatprep.subr.mxu0 0.0
    %256 = vmatpush1.msra.mxu0 0.0
    %257 = vmatprep.subr.mxu0 0.0
    %258 = vmatpush1.msra.mxu0 0.0
    %259 = vmatprep.subr.mxu0 0.0
    %260 = vmatpush1.msra.mxu0 0.0
    %261 = vmatprep.subr.mxu0 0.0
    %262 = vmatpush1.msra.mxu0 0.0
    %263 = vmatprep.subr.mxu0 0.0
    %264 = vmatpush1.msra.mxu0 0.0
    %265 = vmatprep.subr.mxu0 0.0
    %266 = vmatpush1.msra.mxu0 0.0
    %267 = vmatprep.subr.mxu0 0.0
    %268 = vmatpush1.msra.mxu0 0.0
    %269 = vmatprep.subr.mxu0 0.0
    %270 = vmatpush1.msra.mxu0 0.0
    %271 = vmatprep.subr.mxu0 0.0
    %272 = vmatpush1.msra.mxu0 0.0
    %273 = vmatprep.subr.mxu0 0.0
    %274 = vmatpush1.msra.mxu0 %v136
    %275 = vmatprep.subr.mxu0 0.0
    %276 = vmatpush1.msra.mxu0 %v135
    %277 = vmatprep.subr.mxu0 0.0
    %278 = vmatpush1.msra.mxu0 %v134
    %279 = vmatprep.subr.mxu0 0.0
    %280 = vmatpush1.msra.mxu0 %v133
    %281 = vmatprep.subr.mxu0 0.0
    %282 = vmatpush1.msra.mxu0 %v132
    %283 = vmatprep.subr.mxu0 0.0
    %284 = vmatpush1.msra.mxu0 %v131
    %285 = vmatprep.subr.mxu0 0.0
    %286 = vmatpush2.msra.mxu0 0.0
    %287 = vmatprep.subr.mxu0 0.0
    %288 = vmatpush2.msra.mxu0 0.0
    %289 = vmatprep.subr.mxu0 0.0
    %290 = vmatpush2.msra.mxu0 0.0
    %291 = vmatprep.subr.mxu0 0.0
    %292 = vmatpush2.msra.mxu0 0.0
    %293 = vmatprep.subr.mxu0 0.0
    %294 = vmatpush2.msra.mxu0 0.0
    %295 = vmatprep.subr.mxu0 0.0
    %296 = vmatpush2.msra.mxu0 0.0
    %297 = vmatprep.subr.mxu0 0.0
    %298 = vmatpush2.msra.mxu0 0.0
    %299 = vmatprep.subr.mxu0 0.0
    %300 = vmatpush2.msra.mxu0 0.0
    %301 = vmatprep.subr.mxu0 0.0
    %302 = vmatpush2.msra.mxu0 0.0
    %303 = vmatprep.subr.mxu0 0.0
    %304 = vmatpush2.msra.mxu0 0.0
    %305 = vmatprep.subr.mxu0 0.0
    %306 = vmatpush2.msra.mxu0 0.0
    %307 = vmatprep.subr.mxu0 0.0
    %308 = vmatpush2.msra.mxu0 0.0
    %309 = vmatprep.subr.mxu0 0.0
    %310 = vmatpush2.msra.mxu0 0.0
    %311 = vmatprep.subr.mxu0 0.0
    %312 = vmatpush2.msra.mxu0 0.0
    %313 = vmatprep.subr.mxu0 0.0
    %314 = vmatpush2.msra.mxu0 0.0
    %315 = vmatprep.subr.mxu0 0.0
    %316 = vmatpush2.msra.mxu0 0.0
    %317 = vmatprep.mubr.f32.mxu0 0.0
    %318 = vmatmul.mubr.f32.gmra.mxu0 %v242
    %v319 = vpop.f32.mrf.mxu0
    %v320 = vadd.f32 %v223, %v319
    %v321 = vpop.f32.mrf.mxu0
    %322 = vmatprep.mubr.f32.mxu0 0.0
    %323 = vmatmul.mubr.f32.gmra.mxu0 %v245
    %v324 = vpop.f32.mrf.mxu0
    %v325 = vadd.f32 %v228, %v324
    %v326 = vpop.f32.mrf.mxu0
    %327 = vmatprep.mubr.f32.mxu0 0.0
    %328 = vmatmul.mubr.f32.gmra.mxu0 %v248
    %v329 = vpop.f32.mrf.mxu0
    %v330 = vadd.f32 %v233, %v329
    %v331 = vpop.f32.mrf.mxu0
    %332 = vmatprep.mubr.f32.mxu0 0.0
    %333 = vmatmul.mubr.f32.gmra.mxu0 %v251
    %v334 = vpop.f32.mrf.mxu0
    %v335 = vadd.f32 %v238, %v334
    %v336 = vpop.f32.mrf.mxu0
    %337 = vdwg.mxu0
    %v338 = vld [vmem:[#allocation2 + $0x80] sm:$0xff]
    %v339 = vld [vmem:[#allocation2 + $0x88] sm:$0xff]
    %v340 = vld [vmem:[#allocation2 + $0x90] sm:$0xff]
    %v341 = vld [vmem:[#allocation2 + $0x98] sm:$0xff]
    %v343 = vsel %vm33, %v338, 0
    %v346 = vsel %vm33, %v339, 0
    %v349 = vsel %vm33, %v340, 0
    %v352 = vsel %vm33, %v341, 0
    %354 = vmatprep.subr.mxu0 0.0
    %355 = vmatpush1.msra.mxu0 0.0
    %356 = vmatprep.subr.mxu0 0.0
    %357 = vmatpush1.msra.mxu0 0.0
    %358 = vmatprep.subr.mxu0 0.0
    %359 = vmatpush1.msra.mxu0 0.0
    %360 = vmatprep.subr.mxu0 0.0
    %361 = vmatpush1.msra.mxu0 0.0
    %362 = vmatprep.subr.mxu0 0.0
    %363 = vmatpush1.msra.mxu0 0.0
    %364 = vmatprep.subr.mxu0 0.0
    %365 = vmatpush1.msra.mxu0 0.0
    %366 = vmatprep.subr.mxu0 0.0
    %367 = vmatpush1.msra.mxu0 0.0
    %368 = vmatprep.subr.mxu0 0.0
    %369 = vmatpush1.msra.mxu0 0.0
    %370 = vmatprep.subr.mxu0 0.0
    %371 = vmatpush1.msra.mxu0 0.0
    %372 = vmatprep.subr.mxu0 0.0
    %373 = vmatpush1.msra.mxu0 0.0
    %374 = vmatprep.subr.mxu0 0.0
    %375 = vmatpush1.msra.mxu0 0.0
    %376 = vmatprep.subr.mxu0 0.0
    %377 = vmatpush1.msra.mxu0 0.0
    %378 = vmatprep.subr.mxu0 0.0
    %379 = vmatpush1.msra.mxu0 %v28
    %380 = vmatprep.subr.mxu0 0.0
    %381 = vmatpush1.msra.mxu0 %v27
    %382 = vmatprep.subr.mxu0 0.0
    %383 = vmatpush1.msra.mxu0 %v26
    %384 = vmatprep.subr.mxu0 0.0
    %385 = vmatpush1.msra.mxu0 %v25
    %386 = vmatprep.subr.mxu0 0.0
    %387 = vmatpush2.msra.mxu0 0.0
    %388 = vmatprep.subr.mxu0 0.0
    %389 = vmatpush2.msra.mxu0 0.0
    %390 = vmatprep.subr.mxu0 0.0
    %391 = vmatpush2.msra.mxu0 0.0
    %392 = vmatprep.subr.mxu0 0.0
    %393 = vmatpush2.msra.mxu0 0.0
    %394 = vmatprep.subr.mxu0 0.0
    %395 = vmatpush2.msra.mxu0 0.0
    %396 = vmatprep.subr.mxu0 0.0
    %397 = vmatpush2.msra.mxu0 0.0
    %398 = vmatprep.subr.mxu0 0.0
    %399 = vmatpush2.msra.mxu0 0.0
    %400 = vmatprep.subr.mxu0 0.0
    %401 = vmatpush2.msra.mxu0 0.0
    %402 = vmatprep.subr.mxu0 0.0
    %403 = vmatpush2.msra.mxu0 0.0
    %404 = vmatprep.subr.mxu0 0.0
    %405 = vmatpush2.msra.mxu0 0.0
    %406 = vmatprep.subr.mxu0 0.0
    %407 = vmatpush2.msra.mxu0 0.0
    %408 = vmatprep.subr.mxu0 0.0
    %409 = vmatpush2.msra.mxu0 0.0
    %410 = vmatprep.subr.mxu0 0.0
    %411 = vmatpush2.msra.mxu0 0.0
    %412 = vmatprep.subr.mxu0 0.0
    %413 = vmatpush2.msra.mxu0 0.0
    %414 = vmatprep.subr.mxu0 0.0
    %415 = vmatpush2.msra.mxu0 0.0
    %416 = vmatprep.subr.mxu0 0.0
    %417 = vmatpush2.msra.mxu0 0.0
    %418 = vmatprep.mubr.f32.mxu0 0.0
    %419 = vmatmul.mubr.f32.gmra.mxu0 %v343
    %v420 = vpop.f32.mrf.mxu0
    %v421 = vadd.f32 0.0, %v420
    %v422 = vpop.f32.mrf.mxu0
    %423 = vmatprep.mubr.f32.mxu0 0.0
    %424 = vmatmul.mubr.f32.gmra.mxu0 %v346
    %v425 = vpop.f32.mrf.mxu0
    %v426 = vadd.f32 0.0, %v425
    %v427 = vpop.f32.mrf.mxu0
    %428 = vmatprep.mubr.f32.mxu0 0.0
    %429 = vmatmul.mubr.f32.gmra.mxu0 %v349
    %v430 = vpop.f32.mrf.mxu0
    %v431 = vadd.f32 0.0, %v430
    %v432 = vpop.f32.mrf.mxu0
    %433 = vmatprep.mubr.f32.mxu0 0.0
    %434 = vmatmul.mubr.f32.gmra.mxu0 %v352
    %v435 = vpop.f32.mrf.mxu0
    %v436 = vadd.f32 0.0, %v435
    %v437 = vpop.f32.mrf.mxu0
    %438 = vdwg.mxu0
    %v439 = vld [vmem:[#allocation2 + $0xa0] sm:$0xff]
    %v440 = vld [vmem:[#allocation2 + $0xa8] sm:$0xff]
    %v441 = vld [vmem:[#allocation2 + $0xb0] sm:$0xff]
    %v442 = vld [vmem:[#allocation2 + $0xb8] sm:$0xff]
    %v443 = vld [vmem:[#allocation2 + $0xc0] sm:$0xff]
    %v444 = vld [vmem:[#allocation2 + $0xc8] sm:$0xff]
    %v446 = vsel %vm143, %v421, 0
    %v449 = vsel %vm143, %v426, 0
    %v452 = vsel %vm143, %v431, 0
    %v455 = vsel %vm143, %v436, 0
    %457 = vmatprep.subr.mxu0 0.0
    %458 = vmatpush1.msra.mxu0 0.0
    %459 = vmatprep.subr.mxu0 0.0
    %460 = vmatpush1.msra.mxu0 0.0
    %461 = vmatprep.subr.mxu0 0.0
    %462 = vmatpush1.msra.mxu0 0.0
    %463 = vmatprep.subr.mxu0 0.0
    %464 = vmatpush1.msra.mxu0 0.0
    %465 = vmatprep.subr.mxu0 0.0
    %466 = vmatpush1.msra.mxu0 0.0
    %467 = vmatprep.subr.mxu0 0.0
    %468 = vmatpush1.msra.mxu0 0.0
    %469 = vmatprep.subr.mxu0 0.0
    %470 = vmatpush1.msra.mxu0 0.0
    %471 = vmatprep.subr.mxu0 0.0
    %472 = vmatpush1.msra.mxu0 0.0
    %473 = vmatprep.subr.mxu0 0.0
    %474 = vmatpush1.msra.mxu0 0.0
    %475 = vmatprep.subr.mxu0 0.0
    %476 = vmatpush1.msra.mxu0 0.0
    %477 = vmatprep.subr.mxu0 0.0
    %478 = vmatpush1.msra.mxu0 %v444
    %479 = vmatprep.subr.mxu0 0.0
    %480 = vmatpush1.msra.mxu0 %v443
    %481 = vmatprep.subr.mxu0 0.0
    %482 = vmatpush1.msra.mxu0 %v442
    %483 = vmatprep.subr.mxu0 0.0
    %484 = vmatpush1.msra.mxu0 %v441
    %485 = vmatprep.subr.mxu0 0.0
    %486 = vmatpush1.msra.mxu0 %v440
    %487 = vmatprep.subr.mxu0 0.0
    %488 = vmatpush1.msra.mxu0 %v439
    %489 = vmatprep.subr.mxu0 0.0
    %490 = vmatpush2.msra.mxu0 0.0
    %491 = vmatprep.subr.mxu0 0.0
    %492 = vmatpush2.msra.mxu0 0.0
    %493 = vmatprep.subr.mxu0 0.0
    %494 = vmatpush2.msra.mxu0 0.0
    %495 = vmatprep.subr.mxu0 0.0
    %496 = vmatpush2.msra.mxu0 0.0
    %497 = vmatprep.subr.mxu0 0.0
    %498 = vmatpush2.msra.mxu0 0.0
    %499 = vmatprep.subr.mxu0 0.0
    %500 = vmatpush2.msra.mxu0 0.0
    %501 = vmatprep.subr.mxu0 0.0
    %502 = vmatpush2.msra.mxu0 0.0
    %503 = vmatprep.subr.mxu0 0.0
    %504 = vmatpush2.msra.mxu0 0.0
    %505 = vmatprep.subr.mxu0 0.0
    %506 = vmatpush2.msra.mxu0 0.0
    %507 = vmatprep.subr.mxu0 0.0
    %508 = vmatpush2.msra.mxu0 0.0
    %509 = vmatprep.subr.mxu0 0.0
    %510 = vmatpush2.msra.mxu0 0.0
    %511 = vmatprep.subr.mxu0 0.0
    %512 = vmatpush2.msra.mxu0 0.0
    %513 = vmatprep.subr.mxu0 0.0
    %514 = vmatpush2.msra.mxu0 0.0
    %515 = vmatprep.subr.mxu0 0.0
    %516 = vmatpush2.msra.mxu0 0.0
    %517 = vmatprep.subr.mxu0 0.0
    %518 = vmatpush2.msra.mxu0 0.0
    %519 = vmatprep.subr.mxu0 0.0
    %520 = vmatpush2.msra.mxu0 0.0
    %521 = vmatprep.mubr.f32.mxu0 0.0
    %522 = vmatmul.mubr.f32.gmra.mxu0 %v446
    %v523 = vpop.f32.mrf.mxu0
    %v524 = vadd.f32 0.0, %v523
    %v525 = vpop.f32.mrf.mxu0
    %526 = vmatprep.mubr.f32.mxu0 0.0
    %527 = vmatmul.mubr.f32.gmra.mxu0 %v449
    %v528 = vpop.f32.mrf.mxu0
    %v529 = vadd.f32 0.0, %v528
    %v530 = vpop.f32.mrf.mxu0
    %531 = vmatprep.mubr.f32.mxu0 0.0
    %532 = vmatmul.mubr.f32.gmra.mxu0 %v452
    %v533 = vpop.f32.mrf.mxu0
    %v534 = vadd.f32 0.0, %v533
    %v535 = vpop.f32.mrf.mxu0
    %536 = vmatprep.mubr.f32.mxu0 0.0
    %537 = vmatmul.mubr.f32.gmra.mxu0 %v455
    %v538 = vpop.f32.mrf.mxu0
    %v539 = vadd.f32 0.0, %v538
    %v540 = vpop.f32.mrf.mxu0
    %541 = vdwg.mxu0
    %v542 = vadd.f32 %v320, %v524
    %v543 = vadd.f32 %v325, %v529
    %v544 = vadd.f32 %v330, %v534
    %v545 = vadd.f32 %v335, %v539
    %v546 = vld [vmem:[#allocation2 + $0xd0] sm:$0x1]
    %v547 = vlaneseq
    %v548 = vshrl.u32 %v547, 7
    %v549 = vsub.s32 0, %v548
    %v550 = vrot.slane %v546, %v549
    %v551 = vadd.f32 %v542, %v550
    %v552 = vadd.f32 %v543, %v550
    %v553 = vadd.f32 %v544, %v550
    %v554 = vadd.f32 %v545, %v550
    %v555 = vmax.f32 %v551, 0.0
    %v556 = vmax.f32 %v552, 0.0
    %v557 = vmax.f32 %v553, 0.0
    %v558 = vmax.f32 %v554, 0.0
    %v559 = vld [vmem:[#allocation2 + $0xd8] sm:$0xff]
    %v560 = vld [vmem:[#allocation2 + $0xe0] sm:$0xff]
    %v562 = vsel %vm33, %v559, 0
    %v565 = vsel %vm33, %v560, 0
    %567 = vmatprep.subr.mxu0 0.0
    %568 = vmatpush1.msra.mxu0 0.0
    %569 = vmatprep.subr.mxu0 0.0
    %570 = vmatpush1.msra.mxu0 0.0
    %571 = vmatprep.subr.mxu0 0.0
    %572 = vmatpush1.msra.mxu0 0.0
    %573 = vmatprep.subr.mxu0 0.0
    %574 = vmatpush1.msra.mxu0 0.0
    %575 = vmatprep.subr.mxu0 0.0
    %576 = vmatpush1.msra.mxu0 0.0
    %577 = vmatprep.subr.mxu0 0.0
    %578 = vmatpush1.msra.mxu0 0.0
    %579 = vmatprep.subr.mxu0 0.0
    %580 = vmatpush1.msra.mxu0 0.0
    %581 = vmatprep.subr.mxu0 0.0
    %582 = vmatpush1.msra.mxu0 0.0
    %583 = vmatprep.subr.mxu0 0.0
    %584 = vmatpush1.msra.mxu0 0.0
    %585 = vmatprep.subr.mxu0 0.0
    %586 = vmatpush1.msra.mxu0 0.0
    %587 = vmatprep.subr.mxu0 0.0
    %588 = vmatpush1.msra.mxu0 0.0
    %589 = vmatprep.subr.mxu0 0.0
    %590 = vmatpush1.msra.mxu0 0.0
    %591 = vmatprep.subr.mxu0 0.0
    %592 = vmatpush1.msra.mxu0 %v558
    %593 = vmatprep.subr.mxu0 0.0
    %594 = vmatpush1.msra.mxu0 %v557
    %595 = vmatprep.subr.mxu0 0.0
    %596 = vmatpush1.msra.mxu0 %v556
    %597 = vmatprep.subr.mxu0 0.0
    %598 = vmatpush1.msra.mxu0 %v555
    %599 = vmatprep.subr.mxu0 0.0
    %600 = vmatpush2.msra.mxu0 0.0
    %601 = vmatprep.subr.mxu0 0.0
    %602 = vmatpush2.msra.mxu0 0.0
    %603 = vmatprep.subr.mxu0 0.0
    %604 = vmatpush2.msra.mxu0 0.0
    %605 = vmatprep.subr.mxu0 0.0
    %606 = vmatpush2.msra.mxu0 0.0
    %607 = vmatprep.subr.mxu0 0.0
    %608 = vmatpush2.msra.mxu0 0.0
    %609 = vmatprep.subr.mxu0 0.0
    %610 = vmatpush2.msra.mxu0 0.0
    %611 = vmatprep.subr.mxu0 0.0
    %612 = vmatpush2.msra.mxu0 0.0
    %613 = vmatprep.subr.mxu0 0.0
    %614 = vmatpush2.msra.mxu0 0.0
    %615 = vmatprep.subr.mxu0 0.0
    %616 = vmatpush2.msra.mxu0 0.0
    %617 = vmatprep.subr.mxu0 0.0
    %618 = vmatpush2.msra.mxu0 0.0
    %619 = vmatprep.subr.mxu0 0.0
    %620 = vmatpush2.msra.mxu0 0.0
    %621 = vmatprep.subr.mxu0 0.0
    %622 = vmatpush2.msra.mxu0 0.0
    %623 = vmatprep.subr.mxu0 0.0
    %624 = vmatpush2.msra.mxu0 0.0
    %625 = vmatprep.subr.mxu0 0.0
    %626 = vmatpush2.msra.mxu0 0.0
    %627 = vmatprep.subr.mxu0 0.0
    %628 = vmatpush2.msra.mxu0 0.0
    %629 = vmatprep.subr.mxu0 0.0
    %630 = vmatpush2.msra.mxu0 0.0
    %631 = vmatprep.mubr.f32.mxu0 0.0
    %632 = vmatmul.mubr.f32.gmra.mxu0 %v562
    %v633 = vpop.f32.mrf.mxu0
    %v634 = vadd.f32 0.0, %v633
    %v635 = vpop.f32.mrf.mxu0
    %636 = vmatprep.mubr.f32.mxu0 0.0
    %637 = vmatmul.mubr.f32.gmra.mxu0 %v565
    %v638 = vpop.f32.mrf.mxu0
    %v639 = vadd.f32 0.0, %v638
    %v640 = vpop.f32.mrf.mxu0
    %641 = vdwg.mxu0
    %v642 = vld [vmem:[#allocation2 + $0xe8] sm:$0xff]
    %v643 = vld [vmem:[#allocation2 + $0xf0] sm:$0xff]
    %v644 = vld [vmem:[#allocation2 + $0xf8] sm:$0xff]
    %v645 = vld [vmem:[#allocation2 + $0x100] sm:$0xff]
    %v646 = vld [vmem:[#allocation2 + $0x108] sm:$0xff]
    %v647 = vld [vmem:[#allocation2 + $0x110] sm:$0xff]
    %v648 = vld [vmem:[#allocation2 + $0x118] sm:$0xff]
    %v649 = vld [vmem:[#allocation2 + $0x120] sm:$0xff]
    %v650 = vld [vmem:[#allocation2 + $0x128] sm:$0xff]
    %v651 = vld [vmem:[#allocation2 + $0x130] sm:$0xff]
    %v652 = vld [vmem:[#allocation2 + $0x138] sm:$0xff]
    %v653 = vld [vmem:[#allocation2 + $0x140] sm:$0xff]
    %v654 = vld [vmem:[#allocation2 + $0x148] sm:$0xff]
    %v655 = vld [vmem:[#allocation2 + $0x150] sm:$0xff]
    %v656 = vld [vmem:[#allocation2 + $0x158] sm:$0xff]
    %v657 = vld [vmem:[#allocation2 + $0x160] sm:$0xff]
    %v658 = vld [vmem:[#allocation2 + $0x168] sm:$0xff]
    %v659 = vld [vmem:[#allocation2 + $0x170] sm:$0xff]
    %v661 = vsel %vm33, %v658, 0
    %v664 = vsel %vm33, %v659, 0
    %666 = vmatprep.subr.mxu0 0.0
    %667 = vmatpush1.msra.mxu0 0.0
    %668 = vmatprep.subr.mxu0 0.0
    %669 = vmatpush1.msra.mxu0 0.0
    %670 = vmatprep.subr.mxu0 0.0
    %671 = vmatpush1.msra.mxu0 0.0
    %672 = vmatprep.subr.mxu0 0.0
    %673 = vmatpush1.msra.mxu0 0.0
    %674 = vmatprep.subr.mxu0 0.0
    %675 = vmatpush1.msra.mxu0 0.0
    %676 = vmatprep.subr.mxu0 0.0
    %677 = vmatpush1.msra.mxu0 0.0
    %678 = vmatprep.subr.mxu0 0.0
    %679 = vmatpush1.msra.mxu0 0.0
    %680 = vmatprep.subr.mxu0 0.0
    %681 = vmatpush1.msra.mxu0 0.0
    %682 = vmatprep.subr.mxu0 0.0
    %683 = vmatpush1.msra.mxu0 0.0
    %684 = vmatprep.subr.mxu0 0.0
    %685 = vmatpush1.msra.mxu0 0.0
    %686 = vmatprep.subr.mxu0 0.0
    %687 = vmatpush1.msra.mxu0 0.0
    %688 = vmatprep.subr.mxu0 0.0
    %689 = vmatpush1.msra.mxu0 0.0
    %690 = vmatprep.subr.mxu0 0.0
    %691 = vmatpush1.msra.mxu0 %v558
    %692 = vmatprep.subr.mxu0 0.0
    %693 = vmatpush1.msra.mxu0 %v557
    %694 = vmatprep.subr.mxu0 0.0
    %695 = vmatpush1.msra.mxu0 %v556
    %696 = vmatprep.subr.mxu0 0.0
    %697 = vmatpush1.msra.mxu0 %v555
    %698 = vmatprep.subr.mxu0 0.0
    %699 = vmatpush2.msra.mxu0 0.0
    %700 = vmatprep.subr.mxu0 0.0
    %701 = vmatpush2.msra.mxu0 0.0
    %702 = vmatprep.subr.mxu0 0.0
    %703 = vmatpush2.msra.mxu0 0.0
    %704 = vmatprep.subr.mxu0 0.0
    %705 = vmatpush2.msra.mxu0 0.0
    %706 = vmatprep.subr.mxu0 0.0
    %707 = vmatpush2.msra.mxu0 0.0
    %708 = vmatprep.subr.mxu0 0.0
    %709 = vmatpush2.msra.mxu0 0.0
    %710 = vmatprep.subr.mxu0 0.0
    %711 = vmatpush2.msra.mxu0 0.0
    %712 = vmatprep.subr.mxu0 0.0
    %713 = vmatpush2.msra.mxu0 0.0
    %714 = vmatprep.subr.mxu0 0.0
    %715 = vmatpush2.msra.mxu0 0.0
    %716 = vmatprep.subr.mxu0 0.0
    %717 = vmatpush2.msra.mxu0 0.0
    %718 = vmatprep.subr.mxu0 0.0
    %719 = vmatpush2.msra.mxu0 0.0
    %720 = vmatprep.subr.mxu0 0.0
    %721 = vmatpush2.msra.mxu0 0.0
    %722 = vmatprep.subr.mxu0 0.0
    %723 = vmatpush2.msra.mxu0 0.0
    %724 = vmatprep.subr.mxu0 0.0
    %725 = vmatpush2.msra.mxu0 0.0
    %726 = vmatprep.subr.mxu0 0.0
    %727 = vmatpush2.msra.mxu0 0.0
    %728 = vmatprep.subr.mxu0 0.0
    %729 = vmatpush2.msra.mxu0 0.0
    %730 = vmatprep.mubr.f32.mxu0 0.0
    %731 = vmatmul.mubr.f32.gmra.mxu0 %v661
    %v732 = vpop.f32.mrf.mxu0
    %v733 = vadd.f32 0.0, %v732
    %v734 = vpop.f32.mrf.mxu0
    %735 = vmatprep.mubr.f32.mxu0 0.0
    %736 = vmatmul.mubr.f32.gmra.mxu0 %v664
    %v737 = vpop.f32.mrf.mxu0
    %v738 = vadd.f32 0.0, %v737
    %v739 = vpop.f32.mrf.mxu0
    %740 = vdwg.mxu0
    %v741 = vld [vmem:[#allocation2 + $0x178] sm:$0xff]
    %v742 = vld [vmem:[#allocation2 + $0x180] sm:$0xff]
    %v743 = vld [vmem:[#allocation2 + $0x188] sm:$0xff]
    %v744 = vld [vmem:[#allocation2 + $0x190] sm:$0xff]
    %v745 = vld [vmem:[#allocation2 + $0x198] sm:$0xff]
    %v746 = vld [vmem:[#allocation2 + $0x1a0] sm:$0xff]
    %v747 = vld [vmem:[#allocation2 + $0x1a8] sm:$0xff]
    %v748 = vld [vmem:[#allocation2 + $0x1b0] sm:$0xff]
    %v749 = vld [vmem:[#allocation2 + $0x1b8] sm:$0xff]
    %v750 = vld [vmem:[#allocation2 + $0x1c0] sm:$0xff]
    %v751 = vld [vmem:[#allocation2 + $0x1c8] sm:$0xff]
    %v752 = vld [vmem:[#allocation2 + $0x1d0] sm:$0xff]
    %v753 = vld [vmem:[#allocation2 + $0x1d8] sm:$0xff]
    %v754 = vld [vmem:[#allocation2 + $0x1e0] sm:$0xff]
    %v755 = vld [vmem:[#allocation2 + $0x1e8] sm:$0xff]
    %v756 = vld [vmem:[#allocation2 + $0x1f0] sm:$0xff]
    %757 = vmatprep.subr.mxu0 0.0
    %758 = vmatpush1.msra.mxu0 %v756
    %759 = vmatprep.subr.mxu0 0.0
    %760 = vmatpush1.msra.mxu0 %v755
    %761 = vmatprep.subr.mxu0 0.0
    %762 = vmatpush1.msra.mxu0 %v754
    %763 = vmatprep.subr.mxu0 0.0
    %764 = vmatpush1.msra.mxu0 %v753
    %765 = vmatprep.subr.mxu0 0.0
    %766 = vmatpush1.msra.mxu0 %v752
    %767 = vmatprep.subr.mxu0 0.0
    %768 = vmatpush1.msra.mxu0 %v751
    %769 = vmatprep.subr.mxu0 0.0
    %770 = vmatpush1.msra.mxu0 %v750
    %771 = vmatprep.subr.mxu0 0.0
    %772 = vmatpush1.msra.mxu0 %v749
    %773 = vmatprep.subr.mxu0 0.0
    %774 = vmatpush1.msra.mxu0 %v748
    %775 = vmatprep.subr.mxu0 0.0
    %776 = vmatpush1.msra.mxu0 %v747
    %777 = vmatprep.subr.mxu0 0.0
    %778 = vmatpush1.msra.mxu0 %v746
    %779 = vmatprep.subr.mxu0 0.0
    %780 = vmatpush1.msra.mxu0 %v745
    %781 = vmatprep.subr.mxu0 0.0
    %782 = vmatpush1.msra.mxu0 %v744
    %783 = vmatprep.subr.mxu0 0.0
    %784 = vmatpush1.msra.mxu0 %v743
    %785 = vmatprep.subr.mxu0 0.0
    %786 = vmatpush1.msra.mxu0 %v742
    %787 = vmatprep.subr.mxu0 0.0
    %788 = vmatpush1.msra.mxu0 %v741
    %789 = vmatprep.subr.mxu0 0.0
    %790 = vmatpush2.msra.mxu0 0.0
    %791 = vmatprep.subr.mxu0 0.0
    %792 = vmatpush2.msra.mxu0 0.0
    %793 = vmatprep.subr.mxu0 0.0
    %794 = vmatpush2.msra.mxu0 0.0
    %795 = vmatprep.subr.mxu0 0.0
    %796 = vmatpush2.msra.mxu0 0.0
    %797 = vmatprep.subr.mxu0 0.0
    %798 = vmatpush2.msra.mxu0 0.0
    %799 = vmatprep.subr.mxu0 0.0
    %800 = vmatpush2.msra.mxu0 0.0
    %801 = vmatprep.subr.mxu0 0.0
    %802 = vmatpush2.msra.mxu0 0.0
    %803 = vmatprep.subr.mxu0 0.0
    %804 = vmatpush2.msra.mxu0 0.0
    %805 = vmatprep.subr.mxu0 0.0
    %806 = vmatpush2.msra.mxu0 0.0
    %807 = vmatprep.subr.mxu0 0.0
    %808 = vmatpush2.msra.mxu0 0.0
    %809 = vmatprep.subr.mxu0 0.0
    %810 = vmatpush2.msra.mxu0 0.0
    %811 = vmatprep.subr.mxu0 0.0
    %812 = vmatpush2.msra.mxu0 0.0
    %813 = vmatprep.subr.mxu0 0.0
    %814 = vmatpush2.msra.mxu0 0.0
    %815 = vmatprep.subr.mxu0 0.0
    %816 = vmatpush2.msra.mxu0 0.0
    %817 = vmatprep.subr.mxu0 0.0
    %818 = vmatpush2.msra.mxu0 0.0
    %819 = vmatprep.subr.mxu0 0.0
    %820 = vmatpush2.msra.mxu0 0.0
    %821 = vmatprep.mubr.f32.mxu0 0.0
    %822 = vmatmul.mubr.f32.gmra.mxu0 %v733
    %v823 = vpop.f32.mrf.mxu0
    %v824 = vadd.f32 0.0, %v823
    %v825 = vpop.f32.mrf.mxu0
    %826 = vmatprep.mubr.f32.mxu0 0.0
    %827 = vmatmul.mubr.f32.gmra.mxu0 %v738
    %v828 = vpop.f32.mrf.mxu0
    %v829 = vadd.f32 0.0, %v828
    %v830 = vpop.f32.mrf.mxu0
    %831 = vdwg.mxu0
    %832 = vmatprep.subr.mxu0 0.0
    %833 = vmatpush1.msra.mxu0 %v657
    %834 = vmatprep.subr.mxu0 0.0
    %835 = vmatpush1.msra.mxu0 %v656
    %836 = vmatprep.subr.mxu0 0.0
    %837 = vmatpush1.msra.mxu0 %v655
    %838 = vmatprep.subr.mxu0 0.0
    %839 = vmatpush1.msra.mxu0 %v654
    %840 = vmatprep.subr.mxu0 0.0
    %841 = vmatpush1.msra.mxu0 %v653
    %842 = vmatprep.subr.mxu0 0.0
    %843 = vmatpush1.msra.mxu0 %v652
    %844 = vmatprep.subr.mxu0 0.0
    %845 = vmatpush1.msra.mxu0 %v651
    %846 = vmatprep.subr.mxu0 0.0
    %847 = vmatpush1.msra.mxu0 %v650
    %848 = vmatprep.subr.mxu0 0.0
    %849 = vmatpush1.msra.mxu0 %v649
    %850 = vmatprep.subr.mxu0 0.0
    %851 = vmatpush1.msra.mxu0 %v648
    %852 = vmatprep.subr.mxu0 0.0
    %853 = vmatpush1.msra.mxu0 %v647
    %854 = vmatprep.subr.mxu0 0.0
    %855 = vmatpush1.msra.mxu0 %v646
    %856 = vmatprep.subr.mxu0 0.0
    %857 = vmatpush1.msra.mxu0 %v645
    %858 = vmatprep.subr.mxu0 0.0
    %859 = vmatpush1.msra.mxu0 %v644
    %860 = vmatprep.subr.mxu0 0.0
    %861 = vmatpush1.msra.mxu0 %v643
    %862 = vmatprep.subr.mxu0 0.0
    %863 = vmatpush1.msra.mxu0 %v642
    %864 = vmatprep.subr.mxu0 0.0
    %865 = vmatpush2.msra.mxu0 0.0
    %866 = vmatprep.subr.mxu0 0.0
    %867 = vmatpush2.msra.mxu0 0.0
    %868 = vmatprep.subr.mxu0 0.0
    %869 = vmatpush2.msra.mxu0 0.0
    %870 = vmatprep.subr.mxu0 0.0
    %871 = vmatpush2.msra.mxu0 0.0
    %872 = vmatprep.subr.mxu0 0.0
    %873 = vmatpush2.msra.mxu0 0.0
    %874 = vmatprep.subr.mxu0 0.0
    %875 = vmatpush2.msra.mxu0 0.0
    %876 = vmatprep.subr.mxu0 0.0
    %877 = vmatpush2.msra.mxu0 0.0
    %878 = vmatprep.subr.mxu0 0.0
    %879 = vmatpush2.msra.mxu0 0.0
    %880 = vmatprep.subr.mxu0 0.0
    %881 = vmatpush2.msra.mxu0 0.0
    %882 = vmatprep.subr.mxu0 0.0
    %883 = vmatpush2.msra.mxu0 0.0
    %884 = vmatprep.subr.mxu0 0.0
    %885 = vmatpush2.msra.mxu0 0.0
    %886 = vmatprep.subr.mxu0 0.0
    %887 = vmatpush2.msra.mxu0 0.0
    %888 = vmatprep.subr.mxu0 0.0
    %889 = vmatpush2.msra.mxu0 0.0
    %890 = vmatprep.subr.mxu0 0.0
    %891 = vmatpush2.msra.mxu0 0.0
    %892 = vmatprep.subr.mxu0 0.0
    %893 = vmatpush2.msra.mxu0 0.0
    %894 = vmatprep.subr.mxu0 0.0
    %895 = vmatpush2.msra.mxu0 0.0
    %896 = vmatprep.mubr.f32.mxu0 0.0
    %897 = vmatmul.mubr.f32.gmra.mxu0 %v634
    %v898 = vpop.f32.mrf.mxu0
    %v899 = vadd.f32 %v824, %v898
    %v900 = vpop.f32.mrf.mxu0
    %901 = vmatprep.mubr.f32.mxu0 0.0
    %902 = vmatmul.mubr.f32.gmra.mxu0 %v639
    %v903 = vpop.f32.mrf.mxu0
    %v904 = vadd.f32 %v829, %v903
    %v905 = vpop.f32.mrf.mxu0
    %906 = vdwg.mxu0
    %v907 = vld [vmem:[#allocation2 + $0x1f8] sm:$0xff]
    %v908 = vld [vmem:[#allocation2 + $0x200] sm:$0xff]
    %v910 = vsel %vm33, %v907, 0
    %v913 = vsel %vm33, %v908, 0
    %915 = vmatprep.subr.mxu0 0.0
    %916 = vmatpush1.msra.mxu0 0.0
    %917 = vmatprep.subr.mxu0 0.0
    %918 = vmatpush1.msra.mxu0 0.0
    %919 = vmatprep.subr.mxu0 0.0
    %920 = vmatpush1.msra.mxu0 0.0
    %921 = vmatprep.subr.mxu0 0.0
    %922 = vmatpush1.msra.mxu0 0.0
    %923 = vmatprep.subr.mxu0 0.0
    %924 = vmatpush1.msra.mxu0 0.0
    %925 = vmatprep.subr.mxu0 0.0
    %926 = vmatpush1.msra.mxu0 0.0
    %927 = vmatprep.subr.mxu0 0.0
    %928 = vmatpush1.msra.mxu0 0.0
    %929 = vmatprep.subr.mxu0 0.0
    %930 = vmatpush1.msra.mxu0 0.0
    %931 = vmatprep.subr.mxu0 0.0
    %932 = vmatpush1.msra.mxu0 0.0
    %933 = vmatprep.subr.mxu0 0.0
    %934 = vmatpush1.msra.mxu0 0.0
    %935 = vmatprep.subr.mxu0 0.0
    %936 = vmatpush1.msra.mxu0 0.0
    %937 = vmatprep.subr.mxu0 0.0
    %938 = vmatpush1.msra.mxu0 0.0
    %939 = vmatprep.subr.mxu0 0.0
    %940 = vmatpush1.msra.mxu0 %v558
    %941 = vmatprep.subr.mxu0 0.0
    %942 = vmatpush1.msra.mxu0 %v557
    %943 = vmatprep.subr.mxu0 0.0
    %944 = vmatpush1.msra.mxu0 %v556
    %945 = vmatprep.subr.mxu0 0.0
    %946 = vmatpush1.msra.mxu0 %v555
    %947 = vmatprep.subr.mxu0 0.0
    %948 = vmatpush2.msra.mxu0 0.0
    %949 = vmatprep.subr.mxu0 0.0
    %950 = vmatpush2.msra.mxu0 0.0
    %951 = vmatprep.subr.mxu0 0.0
    %952 = vmatpush2.msra.mxu0 0.0
    %953 = vmatprep.subr.mxu0 0.0
    %954 = vmatpush2.msra.mxu0 0.0
    %955 = vmatprep.subr.mxu0 0.0
    %956 = vmatpush2.msra.mxu0 0.0
    %957 = vmatprep.subr.mxu0 0.0
    %958 = vmatpush2.msra.mxu0 0.0
    %959 = vmatprep.subr.mxu0 0.0
    %960 = vmatpush2.msra.mxu0 0.0
    %961 = vmatprep.subr.mxu0 0.0
    %962 = vmatpush2.msra.mxu0 0.0
    %963 = vmatprep.subr.mxu0 0.0
    %964 = vmatpush2.msra.mxu0 0.0
    %965 = vmatprep.subr.mxu0 0.0
    %966 = vmatpush2.msra.mxu0 0.0
    %967 = vmatprep.subr.mxu0 0.0
    %968 = vmatpush2.msra.mxu0 0.0
    %969 = vmatprep.subr.mxu0 0.0
    %970 = vmatpush2.msra.mxu0 0.0
    %971 = vmatprep.subr.mxu0 0.0
    %972 = vmatpush2.msra.mxu0 0.0
    %973 = vmatprep.subr.mxu0 0.0
    %974 = vmatpush2.msra.mxu0 0.0
    %975 = vmatprep.subr.mxu0 0.0
    %976 = vmatpush2.msra.mxu0 0.0
    %977 = vmatprep.subr.mxu0 0.0
    %978 = vmatpush2.msra.mxu0 0.0
    %979 = vmatprep.mubr.f32.mxu0 0.0
    %980 = vmatmul.mubr.f32.gmra.mxu0 %v910
    %v981 = vpop.f32.mrf.mxu0
    %v982 = vadd.f32 0.0, %v981
    %v983 = vpop.f32.mrf.mxu0
    %984 = vmatprep.mubr.f32.mxu0 0.0
    %985 = vmatmul.mubr.f32.gmra.mxu0 %v913
    %v986 = vpop.f32.mrf.mxu0
    %v987 = vadd.f32 0.0, %v986
    %v988 = vpop.f32.mrf.mxu0
    %989 = vdwg.mxu0
    %v990 = vld [vmem:[#allocation2 + $0x208] sm:$0xff]
    %v991 = vld [vmem:[#allocation2 + $0x210] sm:$0xff]
    %v992 = vld [vmem:[#allocation2 + $0x218] sm:$0xff]
    %v993 = vld [vmem:[#allocation2 + $0x220] sm:$0xff]
    %v994 = vld [vmem:[#allocation2 + $0x228] sm:$0xff]
    %v995 = vld [vmem:[#allocation2 + $0x230] sm:$0xff]
    %v996 = vld [vmem:[#allocation2 + $0x238] sm:$0xff]
    %v997 = vld [vmem:[#allocation2 + $0x240] sm:$0xff]
    %v998 = vld [vmem:[#allocation2 + $0x248] sm:$0xff]
    %v999 = vld [vmem:[#allocation2 + $0x250] sm:$0xff]
    %v1000 = vld [vmem:[#allocation2 + $0x258] sm:$0xff]
    %v1001 = vld [vmem:[#allocation2 + $0x260] sm:$0xff]
    %v1002 = vld [vmem:[#allocation2 + $0x268] sm:$0xff]
    %v1003 = vld [vmem:[#allocation2 + $0x270] sm:$0xff]
    %v1004 = vld [vmem:[#allocation2 + $0x278] sm:$0xff]
    %v1005 = vld [vmem:[#allocation2 + $0x280] sm:$0xff]
    %1006 = vmatprep.subr.mxu0 0.0
    %1007 = vmatpush1.msra.mxu0 %v1005
    %1008 = vmatprep.subr.mxu0 0.0
    %1009 = vmatpush1.msra.mxu0 %v1004
    %1010 = vmatprep.subr.mxu0 0.0
    %1011 = vmatpush1.msra.mxu0 %v1003
    %1012 = vmatprep.subr.mxu0 0.0
    %1013 = vmatpush1.msra.mxu0 %v1002
    %1014 = vmatprep.subr.mxu0 0.0
    %1015 = vmatpush1.msra.mxu0 %v1001
    %1016 = vmatprep.subr.mxu0 0.0
    %1017 = vmatpush1.msra.mxu0 %v1000
    %1018 = vmatprep.subr.mxu0 0.0
    %1019 = vmatpush1.msra.mxu0 %v999
    %1020 = vmatprep.subr.mxu0 0.0
    %1021 = vmatpush1.msra.mxu0 %v998
    %1022 = vmatprep.subr.mxu0 0.0
    %1023 = vmatpush1.msra.mxu0 %v997
    %1024 = vmatprep.subr.mxu0 0.0
    %1025 = vmatpush1.msra.mxu0 %v996
    %1026 = vmatprep.subr.mxu0 0.0
    %1027 = vmatpush1.msra.mxu0 %v995
    %1028 = vmatprep.subr.mxu0 0.0
    %1029 = vmatpush1.msra.mxu0 %v994
    %1030 = vmatprep.subr.mxu0 0.0
    %1031 = vmatpush1.msra.mxu0 %v993
    %1032 = vmatprep.subr.mxu0 0.0
    %1033 = vmatpush1.msra.mxu0 %v992
    %1034 = vmatprep.subr.mxu0 0.0
    %1035 = vmatpush1.msra.mxu0 %v991
    %1036 = vmatprep.subr.mxu0 0.0
    %1037 = vmatpush1.msra.mxu0 %v990
    %1038 = vmatprep.subr.mxu0 0.0
    %1039 = vmatpush2.msra.mxu0 0.0
    %1040 = vmatprep.subr.mxu0 0.0
    %1041 = vmatpush2.msra.mxu0 0.0
    %1042 = vmatprep.subr.mxu0 0.0
    %1043 = vmatpush2.msra.mxu0 0.0
    %1044 = vmatprep.subr.mxu0 0.0
    %1045 = vmatpush2.msra.mxu0 0.0
    %1046 = vmatprep.subr.mxu0 0.0
    %1047 = vmatpush2.msra.mxu0 0.0
    %1048 = vmatprep.subr.mxu0 0.0
    %1049 = vmatpush2.msra.mxu0 0.0
    %1050 = vmatprep.subr.mxu0 0.0
    %1051 = vmatpush2.msra.mxu0 0.0
    %1052 = vmatprep.subr.mxu0 0.0
    %1053 = vmatpush2.msra.mxu0 0.0
    %1054 = vmatprep.subr.mxu0 0.0
    %1055 = vmatpush2.msra.mxu0 0.0
    %1056 = vmatprep.subr.mxu0 0.0
    %1057 = vmatpush2.msra.mxu0 0.0
    %1058 = vmatprep.subr.mxu0 0.0
    %1059 = vmatpush2.msra.mxu0 0.0
    %1060 = vmatprep.subr.mxu0 0.0
    %1061 = vmatpush2.msra.mxu0 0.0
    %1062 = vmatprep.subr.mxu0 0.0
    %1063 = vmatpush2.msra.mxu0 0.0
    %1064 = vmatprep.subr.mxu0 0.0
    %1065 = vmatpush2.msra.mxu0 0.0
    %1066 = vmatprep.subr.mxu0 0.0
    %1067 = vmatpush2.msra.mxu0 0.0
    %1068 = vmatprep.subr.mxu0 0.0
    %1069 = vmatpush2.msra.mxu0 0.0
    %1070 = vmatprep.mubr.f32.mxu0 0.0
    %1071 = vmatmul.mubr.f32.gmra.mxu0 %v982
    %v1072 = vpop.f32.mrf.mxu0
    %v1073 = vadd.f32 0.0, %v1072
    %v1074 = vpop.f32.mrf.mxu0
    %1075 = vmatprep.mubr.f32.mxu0 0.0
    %1076 = vmatmul.mubr.f32.gmra.mxu0 %v987
    %v1077 = vpop.f32.mrf.mxu0
    %v1078 = vadd.f32 0.0, %v1077
    %v1079 = vpop.f32.mrf.mxu0
    %1080 = vdwg.mxu0
    %v1081 = vadd.f32 %v899, %v1073
    %v1082 = vadd.f32 %v904, %v1078
    %v1083 = vld [vmem:[#allocation2 + $0x288] sm:$0x1]
    %v1084 = vlaneseq
    %v1085 = vshrl.u32 %v1084, 7
    %v1086 = vsub.s32 0, %v1085
    %v1087 = vrot.slane %v1083, %v1086
    %v1088 = vadd.f32 %v1081, %v1087
    %v1089 = vadd.f32 %v1082, %v1087
    %v1090 = vmax.f32 %v1088, 0.0
    %v1091 = vmax.f32 %v1089, 0.0
    %v1092 = vld [vmem:[#allocation2 + $0x290] sm:$0xff]
    %vm1093 = vcmask 130048
    %v1095 = vsel %vm1093, %v1092, 0
    %1097 = vmatprep.subr.mxu0 0.0
    %1098 = vmatpush1.msra.mxu0 0.0
    %1099 = vmatprep.subr.mxu0 0.0
    %1100 = vmatpush1.msra.mxu0 0.0
    %1101 = vmatprep.subr.mxu0 0.0
    %1102 = vmatpush1.msra.mxu0 0.0
    %1103 = vmatprep.subr.mxu0 0.0
    %1104 = vmatpush1.msra.mxu0 0.0
    %1105 = vmatprep.subr.mxu0 0.0
    %1106 = vmatpush1.msra.mxu0 0.0
    %1107 = vmatprep.subr.mxu0 0.0
    %1108 = vmatpush1.msra.mxu0 0.0
    %1109 = vmatprep.subr.mxu0 0.0
    %1110 = vmatpush1.msra.mxu0 0.0
    %1111 = vmatprep.subr.mxu0 0.0
    %1112 = vmatpush1.msra.mxu0 0.0
    %1113 = vmatprep.subr.mxu0 0.0
    %1114 = vmatpush1.msra.mxu0 0.0
    %1115 = vmatprep.subr.mxu0 0.0
    %1116 = vmatpush1.msra.mxu0 0.0
    %1117 = vmatprep.subr.mxu0 0.0
    %1118 = vmatpush1.msra.mxu0 0.0
    %1119 = vmatprep.subr.mxu0 0.0
    %1120 = vmatpush1.msra.mxu0 0.0
    %1121 = vmatprep.subr.mxu0 0.0
    %1122 = vmatpush1.msra.mxu0 0.0
    %1123 = vmatprep.subr.mxu0 0.0
    %1124 = vmatpush1.msra.mxu0 0.0
    %1125 = vmatprep.subr.mxu0 0.0
    %1126 = vmatpush1.msra.mxu0 %v1091
    %1127 = vmatprep.subr.mxu0 0.0
    %1128 = vmatpush1.msra.mxu0 %v1090
    %1129 = vmatprep.subr.mxu0 0.0
    %1130 = vmatpush2.msra.mxu0 0.0
    %1131 = vmatprep.subr.mxu0 0.0
    %1132 = vmatpush2.msra.mxu0 0.0
    %1133 = vmatprep.subr.mxu0 0.0
    %1134 = vmatpush2.msra.mxu0 0.0
    %1135 = vmatprep.subr.mxu0 0.0
    %1136 = vmatpush2.msra.mxu0 0.0
    %1137 = vmatprep.subr.mxu0 0.0
    %1138 = vmatpush2.msra.mxu0 0.0
    %1139 = vmatprep.subr.mxu0 0.0
    %1140 = vmatpush2.msra.mxu0 0.0
    %1141 = vmatprep.subr.mxu0 0.0
    %1142 = vmatpush2.msra.mxu0 0.0
    %1143 = vmatprep.subr.mxu0 0.0
    %1144 = vmatpush2.msra.mxu0 0.0
    %1145 = vmatprep.subr.mxu0 0.0
    %1146 = vmatpush2.msra.mxu0 0.0
    %1147 = vmatprep.subr.mxu0 0.0
    %1148 = vmatpush2.msra.mxu0 0.0
    %1149 = vmatprep.subr.mxu0 0.0
    %1150 = vmatpush2.msra.mxu0 0.0
    %1151 = vmatprep.subr.mxu0 0.0
    %1152 = vmatpush2.msra.mxu0 0.0
    %1153 = vmatprep.subr.mxu0 0.0
    %1154 = vmatpush2.msra.mxu0 0.0
    %1155 = vmatprep.subr.mxu0 0.0
    %1156 = vmatpush2.msra.mxu0 0.0
    %1157 = vmatprep.subr.mxu0 0.0
    %1158 = vmatpush2.msra.mxu0 0.0
    %1159 = vmatprep.subr.mxu0 0.0
    %1160 = vmatpush2.msra.mxu0 0.0
    %1161 = vmatprep.mubr.f32.mxu0 0.0
    %1162 = vmatmul.mubr.f32.gmra.mxu0 %v1095
    %v1163 = vpop.f32.mrf.mxu0
    %v1164 = vadd.f32 0.0, %v1163
    %v1165 = vpop.f32.mrf.mxu0
    %1166 = vdwg.mxu0
    %v1167 = vld [vmem:[#allocation2 + $0x298] sm:$0xff]
    %v1168 = vld [vmem:[#allocation2 + $0x2a0] sm:$0xff]
    %v1169 = vld [vmem:[#allocation2 + $0x2a8] sm:$0xff]
    %v1170 = vld [vmem:[#allocation2 + $0x2b0] sm:$0xff]
    %v1171 = vld [vmem:[#allocation2 + $0x2b8] sm:$0xff]
    %v1172 = vld [vmem:[#allocation2 + $0x2c0] sm:$0xff]
    %v1173 = vld [vmem:[#allocation2 + $0x2c8] sm:$0xff]
    %v1174 = vld [vmem:[#allocation2 + $0x2d0] sm:$0xff]
    %v1175 = vld [vmem:[#allocation2 + $0x2d8] sm:$0xff]
    %v1177 = vsel %vm1093, %v1175, 0
    %1179 = vmatprep.subr.mxu0 0.0
    %1180 = vmatpush1.msra.mxu0 0.0
    %1181 = vmatprep.subr.mxu0 0.0
    %1182 = vmatpush1.msra.mxu0 0.0
    %1183 = vmatprep.subr.mxu0 0.0
    %1184 = vmatpush1.msra.mxu0 0.0
    %1185 = vmatprep.subr.mxu0 0.0
    %1186 = vmatpush1.msra.mxu0 0.0
    %1187 = vmatprep.subr.mxu0 0.0
    %1188 = vmatpush1.msra.mxu0 0.0
    %1189 = vmatprep.subr.mxu0 0.0
    %1190 = vmatpush1.msra.mxu0 0.0
    %1191 = vmatprep.subr.mxu0 0.0
    %1192 = vmatpush1.msra.mxu0 0.0
    %1193 = vmatprep.subr.mxu0 0.0
    %1194 = vmatpush1.msra.mxu0 0.0
    %1195 = vmatprep.subr.mxu0 0.0
    %1196 = vmatpush1.msra.mxu0 0.0
    %1197 = vmatprep.subr.mxu0 0.0
    %1198 = vmatpush1.msra.mxu0 0.0
    %1199 = vmatprep.subr.mxu0 0.0
    %1200 = vmatpush1.msra.mxu0 0.0
    %1201 = vmatprep.subr.mxu0 0.0
    %1202 = vmatpush1.msra.mxu0 0.0
    %1203 = vmatprep.subr.mxu0 0.0
    %1204 = vmatpush1.msra.mxu0 0.0
    %1205 = vmatprep.subr.mxu0 0.0
    %1206 = vmatpush1.msra.mxu0 0.0
    %1207 = vmatprep.subr.mxu0 0.0
    %1208 = vmatpush1.msra.mxu0 %v1091
    %1209 = vmatprep.subr.mxu0 0.0
    %1210 = vmatpush1.msra.mxu0 %v1090
    %1211 = vmatprep.subr.mxu0 0.0
    %1212 = vmatpush2.msra.mxu0 0.0
    %1213 = vmatprep.subr.mxu0 0.0
    %1214 = vmatpush2.msra.mxu0 0.0
    %1215 = vmatprep.subr.mxu0 0.0
    %1216 = vmatpush2.msra.mxu0 0.0
    %1217 = vmatprep.subr.mxu0 0.0
    %1218 = vmatpush2.msra.mxu0 0.0
    %1219 = vmatprep.subr.mxu0 0.0
    %1220 = vmatpush2.msra.mxu0 0.0
    %1221 = vmatprep.subr.mxu0 0.0
    %1222 = vmatpush2.msra.mxu0 0.0
    %1223 = vmatprep.subr.mxu0 0.0
    %1224 = vmatpush2.msra.mxu0 0.0
    %1225 = vmatprep.subr.mxu0 0.0
    %1226 = vmatpush2.msra.mxu0 0.0
    %1227 = vmatprep.subr.mxu0 0.0
    %1228 = vmatpush2.msra.mxu0 0.0
    %1229 = vmatprep.subr.mxu0 0.0
    %1230 = vmatpush2.msra.mxu0 0.0
    %1231 = vmatprep.subr.mxu0 0.0
    %1232 = vmatpush2.msra.mxu0 0.0
    %1233 = vmatprep.subr.mxu0 0.0
    %1234 = vmatpush2.msra.mxu0 0.0
    %1235 = vmatprep.subr.mxu0 0.0
    %1236 = vmatpush2.msra.mxu0 0.0
    %1237 = vmatprep.subr.mxu0 0.0
    %1238 = vmatpush2.msra.mxu0 0.0
    %1239 = vmatprep.subr.mxu0 0.0
    %1240 = vmatpush2.msra.mxu0 0.0
    %1241 = vmatprep.subr.mxu0 0.0
    %1242 = vmatpush2.msra.mxu0 0.0
    %1243 = vmatprep.mubr.f32.mxu0 0.0
    %1244 = vmatmul.mubr.f32.gmra.mxu0 %v1177
    %v1245 = vpop.f32.mrf.mxu0
    %v1246 = vadd.f32 0.0, %v1245
    %v1247 = vpop.f32.mrf.mxu0
    %1248 = vdwg.mxu0
    %v1249 = vld [vmem:[#allocation2 + $0x2e0] sm:$0xff]
    %v1250 = vld [vmem:[#allocation2 + $0x2e8] sm:$0xff]
    %v1251 = vld [vmem:[#allocation2 + $0x2f0] sm:$0xff]
    %v1252 = vld [vmem:[#allocation2 + $0x2f8] sm:$0xff]
    %v1253 = vld [vmem:[#allocation2 + $0x300] sm:$0xff]
    %v1254 = vld [vmem:[#allocation2 + $0x308] sm:$0xff]
    %v1255 = vld [vmem:[#allocation2 + $0x310] sm:$0xff]
    %v1256 = vld [vmem:[#allocation2 + $0x318] sm:$0xff]
    %vm1257 = vcmask 523264
    %v1259 = vsel %vm1257, %v1246, 0
    %1261 = vmatprep.subr.mxu0 0.0
    %1262 = vmatpush1.msra.mxu0 0.0
    %1263 = vmatprep.subr.mxu0 0.0
    %1264 = vmatpush1.msra.mxu0 0.0
    %1265 = vmatprep.subr.mxu0 0.0
    %1266 = vmatpush1.msra.mxu0 0.0
    %1267 = vmatprep.subr.mxu0 0.0
    %1268 = vmatpush1.msra.mxu0 0.0
    %1269 = vmatprep.subr.mxu0 0.0
    %1270 = vmatpush1.msra.mxu0 0.0
    %1271 = vmatprep.subr.mxu0 0.0
    %1272 = vmatpush1.msra.mxu0 0.0
    %1273 = vmatprep.subr.mxu0 0.0
    %1274 = vmatpush1.msra.mxu0 0.0
    %1275 = vmatprep.subr.mxu0 0.0
    %1276 = vmatpush1.msra.mxu0 0.0
    %1277 = vmatprep.subr.mxu0 0.0
    %1278 = vmatpush1.msra.mxu0 %v1256
    %1279 = vmatprep.subr.mxu0 0.0
    %1280 = vmatpush1.msra.mxu0 %v1255
    %1281 = vmatprep.subr.mxu0 0.0
    %1282 = vmatpush1.msra.mxu0 %v1254
    %1283 = vmatprep.subr.mxu0 0.0
    %1284 = vmatpush1.msra.mxu0 %v1253
    %1285 = vmatprep.subr.mxu0 0.0
    %1286 = vmatpush1.msra.mxu0 %v1252
    %1287 = vmatprep.subr.mxu0 0.0
    %1288 = vmatpush1.msra.mxu0 %v1251
    %1289 = vmatprep.subr.mxu0 0.0
    %1290 = vmatpush1.msra.mxu0 %v1250
    %1291 = vmatprep.subr.mxu0 0.0
    %1292 = vmatpush1.msra.mxu0 %v1249
    %1293 = vmatprep.subr.mxu0 0.0
    %1294 = vmatpush2.msra.mxu0 0.0
    %1295 = vmatprep.subr.mxu0 0.0
    %1296 = vmatpush2.msra.mxu0 0.0
    %1297 = vmatprep.subr.mxu0 0.0
    %1298 = vmatpush2.msra.mxu0 0.0
    %1299 = vmatprep.subr.mxu0 0.0
    %1300 = vmatpush2.msra.mxu0 0.0
    %1301 = vmatprep.subr.mxu0 0.0
    %1302 = vmatpush2.msra.mxu0 0.0
    %1303 = vmatprep.subr.mxu0 0.0
    %1304 = vmatpush2.msra.mxu0 0.0
    %1305 = vmatprep.subr.mxu0 0.0
    %1306 = vmatpush2.msra.mxu0 0.0
    %1307 = vmatprep.subr.mxu0 0.0
    %1308 = vmatpush2.msra.mxu0 0.0
    %1309 = vmatprep.subr.mxu0 0.0
    %1310 = vmatpush2.msra.mxu0 0.0
    %1311 = vmatprep.subr.mxu0 0.0
    %1312 = vmatpush2.msra.mxu0 0.0
    %1313 = vmatprep.subr.mxu0 0.0
    %1314 = vmatpush2.msra.mxu0 0.0
    %1315 = vmatprep.subr.mxu0 0.0
    %1316 = vmatpush2.msra.mxu0 0.0
    %1317 = vmatprep.subr.mxu0 0.0
    %1318 = vmatpush2.msra.mxu0 0.0
    %1319 = vmatprep.subr.mxu0 0.0
    %1320 = vmatpush2.msra.mxu0 0.0
    %1321 = vmatprep.subr.mxu0 0.0
    %1322 = vmatpush2.msra.mxu0 0.0
    %1323 = vmatprep.subr.mxu0 0.0
    %1324 = vmatpush2.msra.mxu0 0.0
    %1325 = vmatprep.mubr.f32.mxu0 0.0
    %1326 = vmatmul.mubr.f32.gmra.mxu0 %v1259
    %v1327 = vpop.f32.mrf.mxu0
    %v1328 = vadd.f32 0.0, %v1327
    %v1329 = vpop.f32.mrf.mxu0
    %1330 = vdwg.mxu0
    %v1332 = vsel %vm1257, %v1164, 0
    %1334 = vmatprep.subr.mxu0 0.0
    %1335 = vmatpush1.msra.mxu0 0.0
    %1336 = vmatprep.subr.mxu0 0.0
    %1337 = vmatpush1.msra.mxu0 0.0
    %1338 = vmatprep.subr.mxu0 0.0
    %1339 = vmatpush1.msra.mxu0 0.0
    %1340 = vmatprep.subr.mxu0 0.0
    %1341 = vmatpush1.msra.mxu0 0.0
    %1342 = vmatprep.subr.mxu0 0.0
    %1343 = vmatpush1.msra.mxu0 0.0
    %1344 = vmatprep.subr.mxu0 0.0
    %1345 = vmatpush1.msra.mxu0 0.0
    %1346 = vmatprep.subr.mxu0 0.0
    %1347 = vmatpush1.msra.mxu0 0.0
    %1348 = vmatprep.subr.mxu0 0.0
    %1349 = vmatpush1.msra.mxu0 0.0
    %1350 = vmatprep.subr.mxu0 0.0
    %1351 = vmatpush1.msra.mxu0 %v1174
    %1352 = vmatprep.subr.mxu0 0.0
    %1353 = vmatpush1.msra.mxu0 %v1173
    %1354 = vmatprep.subr.mxu0 0.0
    %1355 = vmatpush1.msra.mxu0 %v1172
    %1356 = vmatprep.subr.mxu0 0.0
    %1357 = vmatpush1.msra.mxu0 %v1171
    %1358 = vmatprep.subr.mxu0 0.0
    %1359 = vmatpush1.msra.mxu0 %v1170
    %1360 = vmatprep.subr.mxu0 0.0
    %1361 = vmatpush1.msra.mxu0 %v1169
    %1362 = vmatprep.subr.mxu0 0.0
    %1363 = vmatpush1.msra.mxu0 %v1168
    %1364 = vmatprep.subr.mxu0 0.0
    %1365 = vmatpush1.msra.mxu0 %v1167
    %1366 = vmatprep.subr.mxu0 0.0
    %1367 = vmatpush2.msra.mxu0 0.0
    %1368 = vmatprep.subr.mxu0 0.0
    %1369 = vmatpush2.msra.mxu0 0.0
    %1370 = vmatprep.subr.mxu0 0.0
    %1371 = vmatpush2.msra.mxu0 0.0
    %1372 = vmatprep.subr.mxu0 0.0
    %1373 = vmatpush2.msra.mxu0 0.0
    %1374 = vmatprep.subr.mxu0 0.0
    %1375 = vmatpush2.msra.mxu0 0.0
    %1376 = vmatprep.subr.mxu0 0.0
    %1377 = vmatpush2.msra.mxu0 0.0
    %1378 = vmatprep.subr.mxu0 0.0
    %1379 = vmatpush2.msra.mxu0 0.0
    %1380 = vmatprep.subr.mxu0 0.0
    %1381 = vmatpush2.msra.mxu0 0.0
    %1382 = vmatprep.subr.mxu0 0.0
    %1383 = vmatpush2.msra.mxu0 0.0
    %1384 = vmatprep.subr.mxu0 0.0
    %1385 = vmatpush2.msra.mxu0 0.0
    %1386 = vmatprep.subr.mxu0 0.0
    %1387 = vmatpush2.msra.mxu0 0.0
    %1388 = vmatprep.subr.mxu0 0.0
    %1389 = vmatpush2.msra.mxu0 0.0
    %1390 = vmatprep.subr.mxu0 0.0
    %1391 = vmatpush2.msra.mxu0 0.0
    %1392 = vmatprep.subr.mxu0 0.0
    %1393 = vmatpush2.msra.mxu0 0.0
    %1394 = vmatprep.subr.mxu0 0.0
    %1395 = vmatpush2.msra.mxu0 0.0
    %1396 = vmatprep.subr.mxu0 0.0
    %1397 = vmatpush2.msra.mxu0 0.0
    %1398 = vmatprep.mubr.f32.mxu0 0.0
    %1399 = vmatmul.mubr.f32.gmra.mxu0 %v1332
    %v1400 = vpop.f32.mrf.mxu0
    %v1401 = vadd.f32 %v1328, %v1400
    %v1402 = vpop.f32.mrf.mxu0
    %1403 = vdwg.mxu0
    %v1404 = vld [vmem:[#allocation2 + $0x320] sm:$0xff]
    %v1406 = vsel %vm1093, %v1404, 0
    %1408 = vmatprep.subr.mxu0 0.0
    %1409 = vmatpush1.msra.mxu0 0.0
    %1410 = vmatprep.subr.mxu0 0.0
    %1411 = vmatpush1.msra.mxu0 0.0
    %1412 = vmatprep.subr.mxu0 0.0
    %1413 = vmatpush1.msra.mxu0 0.0
    %1414 = vmatprep.subr.mxu0 0.0
    %1415 = vmatpush1.msra.mxu0 0.0
    %1416 = vmatprep.subr.mxu0 0.0
    %1417 = vmatpush1.msra.mxu0 0.0
    %1418 = vmatprep.subr.mxu0 0.0
    %1419 = vmatpush1.msra.mxu0 0.0
    %1420 = vmatprep.subr.mxu0 0.0
    %1421 = vmatpush1.msra.mxu0 0.0
    %1422 = vmatprep.subr.mxu0 0.0
    %1423 = vmatpush1.msra.mxu0 0.0
    %1424 = vmatprep.subr.mxu0 0.0
    %1425 = vmatpush1.msra.mxu0 0.0
    %1426 = vmatprep.subr.mxu0 0.0
    %1427 = vmatpush1.msra.mxu0 0.0
    %1428 = vmatprep.subr.mxu0 0.0
    %1429 = vmatpush1.msra.mxu0 0.0
    %1430 = vmatprep.subr.mxu0 0.0
    %1431 = vmatpush1.msra.mxu0 0.0
    %1432 = vmatprep.subr.mxu0 0.0
    %1433 = vmatpush1.msra.mxu0 0.0
    %1434 = vmatprep.subr.mxu0 0.0
    %1435 = vmatpush1.msra.mxu0 0.0
    %1436 = vmatprep.subr.mxu0 0.0
    %1437 = vmatpush1.msra.mxu0 %v1091
    %1438 = vmatprep.subr.mxu0 0.0
    %1439 = vmatpush1.msra.mxu0 %v1090
    %1440 = vmatprep.subr.mxu0 0.0
    %1441 = vmatpush2.msra.mxu0 0.0
    %1442 = vmatprep.subr.mxu0 0.0
    %1443 = vmatpush2.msra.mxu0 0.0
    %1444 = vmatprep.subr.mxu0 0.0
    %1445 = vmatpush2.msra.mxu0 0.0
    %1446 = vmatprep.subr.mxu0 0.0
    %1447 = vmatpush2.msra.mxu0 0.0
    %1448 = vmatprep.subr.mxu0 0.0
    %1449 = vmatpush2.msra.mxu0 0.0
    %1450 = vmatprep.subr.mxu0 0.0
    %1451 = vmatpush2.msra.mxu0 0.0
    %1452 = vmatprep.subr.mxu0 0.0
    %1453 = vmatpush2.msra.mxu0 0.0
    %1454 = vmatprep.subr.mxu0 0.0
    %1455 = vmatpush2.msra.mxu0 0.0
    %1456 = vmatprep.subr.mxu0 0.0
    %1457 = vmatpush2.msra.mxu0 0.0
    %1458 = vmatprep.subr.mxu0 0.0
    %1459 = vmatpush2.msra.mxu0 0.0
    %1460 = vmatprep.subr.mxu0 0.0
    %1461 = vmatpush2.msra.mxu0 0.0
    %1462 = vmatprep.subr.mxu0 0.0
    %1463 = vmatpush2.msra.mxu0 0.0
    %1464 = vmatprep.subr.mxu0 0.0
    %1465 = vmatpush2.msra.mxu0 0.0
    %1466 = vmatprep.subr.mxu0 0.0
    %1467 = vmatpush2.msra.mxu0 0.0
    %1468 = vmatprep.subr.mxu0 0.0
    %1469 = vmatpush2.msra.mxu0 0.0
    %1470 = vmatprep.subr.mxu0 0.0
    %1471 = vmatpush2.msra.mxu0 0.0
    %1472 = vmatprep.mubr.f32.mxu0 0.0
    %1473 = vmatmul.mubr.f32.gmra.mxu0 %v1406
    %v1474 = vpop.f32.mrf.mxu0
    %v1475 = vadd.f32 0.0, %v1474
    %v1476 = vpop.f32.mrf.mxu0
    %1477 = vdwg.mxu0
    %v1478 = vld [vmem:[#allocation2 + $0x328] sm:$0xff]
    %v1479 = vld [vmem:[#allocation2 + $0x330] sm:$0xff]
    %v1480 = vld [vmem:[#allocation2 + $0x338] sm:$0xff]
    %v1481 = vld [vmem:[#allocation2 + $0x340] sm:$0xff]
    %v1482 = vld [vmem:[#allocation2 + $0x348] sm:$0xff]
    %v1483 = vld [vmem:[#allocation2 + $0x350] sm:$0xff]
    %v1484 = vld [vmem:[#allocation2 + $0x358] sm:$0xff]
    %v1485 = vld [vmem:[#allocation2 + $0x360] sm:$0xff]
    %v1487 = vsel %vm1257, %v1475, 0
    %1489 = vmatprep.subr.mxu0 0.0
    %1490 = vmatpush1.msra.mxu0 0.0
    %1491 = vmatprep.subr.mxu0 0.0
    %1492 = vmatpush1.msra.mxu0 0.0
    %1493 = vmatprep.subr.mxu0 0.0
    %1494 = vmatpush1.msra.mxu0 0.0
    %1495 = vmatprep.subr.mxu0 0.0
    %1496 = vmatpush1.msra.mxu0 0.0
    %1497 = vmatprep.subr.mxu0 0.0
    %1498 = vmatpush1.msra.mxu0 0.0
    %1499 = vmatprep.subr.mxu0 0.0
    %1500 = vmatpush1.msra.mxu0 0.0
    %1501 = vmatprep.subr.mxu0 0.0
    %1502 = vmatpush1.msra.mxu0 0.0
    %1503 = vmatprep.subr.mxu0 0.0
    %1504 = vmatpush1.msra.mxu0 0.0
    %1505 = vmatprep.subr.mxu0 0.0
    %1506 = vmatpush1.msra.mxu0 %v1485
    %1507 = vmatprep.subr.mxu0 0.0
    %1508 = vmatpush1.msra.mxu0 %v1484
    %1509 = vmatprep.subr.mxu0 0.0
    %1510 = vmatpush1.msra.mxu0 %v1483
    %1511 = vmatprep.subr.mxu0 0.0
    %1512 = vmatpush1.msra.mxu0 %v1482
    %1513 = vmatprep.subr.mxu0 0.0
    %1514 = vmatpush1.msra.mxu0 %v1481
    %1515 = vmatprep.subr.mxu0 0.0
    %1516 = vmatpush1.msra.mxu0 %v1480
    %1517 = vmatprep.subr.mxu0 0.0
    %1518 = vmatpush1.msra.mxu0 %v1479
    %1519 = vmatprep.subr.mxu0 0.0
    %1520 = vmatpush1.msra.mxu0 %v1478
    %1521 = vmatprep.subr.mxu0 0.0
    %1522 = vmatpush2.msra.mxu0 0.0
    %1523 = vmatprep.subr.mxu0 0.0
    %1524 = vmatpush2.msra.mxu0 0.0
    %1525 = vmatprep.subr.mxu0 0.0
    %1526 = vmatpush2.msra.mxu0 0.0
    %1527 = vmatprep.subr.mxu0 0.0
    %1528 = vmatpush2.msra.mxu0 0.0
    %1529 = vmatprep.subr.mxu0 0.0
    %1530 = vmatpush2.msra.mxu0 0.0
    %1531 = vmatprep.subr.mxu0 0.0
    %1532 = vmatpush2.msra.mxu0 0.0
    %1533 = vmatprep.subr.mxu0 0.0
    %1534 = vmatpush2.msra.mxu0 0.0
    %1535 = vmatprep.subr.mxu0 0.0
    %1536 = vmatpush2.msra.mxu0 0.0
    %1537 = vmatprep.subr.mxu0 0.0
    %1538 = vmatpush2.msra.mxu0 0.0
    %1539 = vmatprep.subr.mxu0 0.0
    %1540 = vmatpush2.msra.mxu0 0.0
    %1541 = vmatprep.subr.mxu0 0.0
    %1542 = vmatpush2.msra.mxu0 0.0
    %1543 = vmatprep.subr.mxu0 0.0
    %1544 = vmatpush2.msra.mxu0 0.0
    %1545 = vmatprep.subr.mxu0 0.0
    %1546 = vmatpush2.msra.mxu0 0.0
    %1547 = vmatprep.subr.mxu0 0.0
    %1548 = vmatpush2.msra.mxu0 0.0
    %1549 = vmatprep.subr.mxu0 0.0
    %1550 = vmatpush2.msra.mxu0 0.0
    %1551 = vmatprep.subr.mxu0 0.0
    %1552 = vmatpush2.msra.mxu0 0.0
    %1553 = vmatprep.mubr.f32.mxu0 0.0
    %1554 = vmatmul.mubr.f32.gmra.mxu0 %v1487
    %v1555 = vpop.f32.mrf.mxu0
    %v1556 = vadd.f32 0.0, %v1555
    %v1557 = vpop.f32.mrf.mxu0
    %1558 = vdwg.mxu0
    %v1559 = vadd.f32 %v1401, %v1556
    %v1560 = vld [vmem:[#allocation2 + $0x368] sm:$0x1]
    %v1561 = vlaneseq
    %v1562 = vshrl.u32 %v1561, 7
    %v1563 = vsub.s32 0, %v1562
    %v1564 = vrot.slane %v1560, %v1563
    %v1565 = vadd.f32 %v1559, %v1564
    %v1566 = vmax.f32 %v1565, 0.0
    %v1567 = vld [vmem:[#allocation2 + $0x370] sm:$0xf]
    %vm1568 = vcmask 64512
    %v1570 = vsel %vm1568, %v1567, 0
    %1572 = vmatprep.subr.mxu0 0.0
    %1573 = vmatpush1.msra.mxu0 0.0
    %1574 = vmatprep.subr.mxu0 0.0
    %1575 = vmatpush1.msra.mxu0 0.0
    %1576 = vmatprep.subr.mxu0 0.0
    %1577 = vmatpush1.msra.mxu0 0.0
    %1578 = vmatprep.subr.mxu0 0.0
    %1579 = vmatpush1.msra.mxu0 0.0
    %1580 = vmatprep.subr.mxu0 0.0
    %1581 = vmatpush1.msra.mxu0 0.0
    %1582 = vmatprep.subr.mxu0 0.0
    %1583 = vmatpush1.msra.mxu0 0.0
    %1584 = vmatprep.subr.mxu0 0.0
    %1585 = vmatpush1.msra.mxu0 0.0
    %1586 = vmatprep.subr.mxu0 0.0
    %1587 = vmatpush1.msra.mxu0 0.0
    %1588 = vmatprep.subr.mxu0 0.0
    %1589 = vmatpush1.msra.mxu0 0.0
    %1590 = vmatprep.subr.mxu0 0.0
    %1591 = vmatpush1.msra.mxu0 0.0
    %1592 = vmatprep.subr.mxu0 0.0
    %1593 = vmatpush1.msra.mxu0 0.0
    %1594 = vmatprep.subr.mxu0 0.0
    %1595 = vmatpush1.msra.mxu0 0.0
    %1596 = vmatprep.subr.mxu0 0.0
    %1597 = vmatpush1.msra.mxu0 0.0
    %1598 = vmatprep.subr.mxu0 0.0
    %1599 = vmatpush1.msra.mxu0 0.0
    %1600 = vmatprep.subr.mxu0 0.0
    %1601 = vmatpush1.msra.mxu0 0.0
    %1602 = vmatprep.subr.mxu0 0.0
    %1603 = vmatpush1.msra.mxu0 %v1566
    %1604 = vmatprep.subr.mxu0 0.0
    %1605 = vmatpush2.msra.mxu0 0.0
    %1606 = vmatprep.subr.mxu0 0.0
    %1607 = vmatpush2.msra.mxu0 0.0
    %1608 = vmatprep.subr.mxu0 0.0
    %1609 = vmatpush2.msra.mxu0 0.0
    %1610 = vmatprep.subr.mxu0 0.0
    %1611 = vmatpush2.msra.mxu0 0.0
    %1612 = vmatprep.subr.mxu0 0.0
    %1613 = vmatpush2.msra.mxu0 0.0
    %1614 = vmatprep.subr.mxu0 0.0
    %1615 = vmatpush2.msra.mxu0 0.0
    %1616 = vmatprep.subr.mxu0 0.0
    %1617 = vmatpush2.msra.mxu0 0.0
    %1618 = vmatprep.subr.mxu0 0.0
    %1619 = vmatpush2.msra.mxu0 0.0
    %1620 = vmatprep.subr.mxu0 0.0
    %1621 = vmatpush2.msra.mxu0 0.0
    %1622 = vmatprep.subr.mxu0 0.0
    %1623 = vmatpush2.msra.mxu0 0.0
    %1624 = vmatprep.subr.mxu0 0.0
    %1625 = vmatpush2.msra.mxu0 0.0
    %1626 = vmatprep.subr.mxu0 0.0
    %1627 = vmatpush2.msra.mxu0 0.0
    %1628 = vmatprep.subr.mxu0 0.0
    %1629 = vmatpush2.msra.mxu0 0.0
    %1630 = vmatprep.subr.mxu0 0.0
    %1631 = vmatpush2.msra.mxu0 0.0
    %1632 = vmatprep.subr.mxu0 0.0
    %1633 = vmatpush2.msra.mxu0 0.0
    %1634 = vmatprep.subr.mxu0 0.0
    %1635 = vmatpush2.msra.mxu0 0.0
    %1636 = vmatprep.mubr.f32.mxu0 0.0
    %1637 = vmatmul.mubr.f32.gmra.mxu0 %v1570
    %v1638 = vpop.f32.mrf.mxu0
    %v1639 = vadd.f32 0.0, %v1638
    %v1640 = vpop.f32.mrf.mxu0
    %1641 = vdwg.mxu0
    %v1642 = vld [vmem:[#allocation2 + $0x378] sm:$0xff]
    %v1643 = vld [vmem:[#allocation2 + $0x380] sm:$0xff]
    %v1644 = vld [vmem:[#allocation2 + $0x388] sm:$0xff]
    %v1645 = vld [vmem:[#allocation2 + $0x390] sm:$0xff]
    %v1646 = vld [vmem:[#allocation2 + $0x398] sm:$0xf]
    %v1648 = vsel %vm1568, %v1646, 0
    %1650 = vmatprep.subr.mxu0 0.0
    %1651 = vmatpush1.msra.mxu0 0.0
    %1652 = vmatprep.subr.mxu0 0.0
    %1653 = vmatpush1.msra.mxu0 0.0
    %1654 = vmatprep.subr.mxu0 0.0
    %1655 = vmatpush1.msra.mxu0 0.0
    %1656 = vmatprep.subr.mxu0 0.0
    %1657 = vmatpush1.msra.mxu0 0.0
    %1658 = vmatprep.subr.mxu0 0.0
    %1659 = vmatpush1.msra.mxu0 0.0
    %1660 = vmatprep.subr.mxu0 0.0
    %1661 = vmatpush1.msra.mxu0 0.0
    %1662 = vmatprep.subr.mxu0 0.0
    %1663 = vmatpush1.msra.mxu0 0.0
    %1664 = vmatprep.subr.mxu0 0.0
    %1665 = vmatpush1.msra.mxu0 0.0
    %1666 = vmatprep.subr.mxu0 0.0
    %1667 = vmatpush1.msra.mxu0 0.0
    %1668 = vmatprep.subr.mxu0 0.0
    %1669 = vmatpush1.msra.mxu0 0.0
    %1670 = vmatprep.subr.mxu0 0.0
    %1671 = vmatpush1.msra.mxu0 0.0
    %1672 = vmatprep.subr.mxu0 0.0
    %1673 = vmatpush1.msra.mxu0 0.0
    %1674 = vmatprep.subr.mxu0 0.0
    %1675 = vmatpush1.msra.mxu0 0.0
    %1676 = vmatprep.subr.mxu0 0.0
    %1677 = vmatpush1.msra.mxu0 0.0
    %1678 = vmatprep.subr.mxu0 0.0
    %1679 = vmatpush1.msra.mxu0 0.0
    %1680 = vmatprep.subr.mxu0 0.0
    %1681 = vmatpush1.msra.mxu0 %v1566
    %1682 = vmatprep.subr.mxu0 0.0
    %1683 = vmatpush2.msra.mxu0 0.0
    %1684 = vmatprep.subr.mxu0 0.0
    %1685 = vmatpush2.msra.mxu0 0.0
    %1686 = vmatprep.subr.mxu0 0.0
    %1687 = vmatpush2.msra.mxu0 0.0
    %1688 = vmatprep.subr.mxu0 0.0
    %1689 = vmatpush2.msra.mxu0 0.0
    %1690 = vmatprep.subr.mxu0 0.0
    %1691 = vmatpush2.msra.mxu0 0.0
    %1692 = vmatprep.subr.mxu0 0.0
    %1693 = vmatpush2.msra.mxu0 0.0
    %1694 = vmatprep.subr.mxu0 0.0
    %1695 = vmatpush2.msra.mxu0 0.0
    %1696 = vmatprep.subr.mxu0 0.0
    %1697 = vmatpush2.msra.mxu0 0.0
    %1698 = vmatprep.subr.mxu0 0.0
    %1699 = vmatpush2.msra.mxu0 0.0
    %1700 = vmatprep.subr.mxu0 0.0
    %1701 = vmatpush2.msra.mxu0 0.0
    %1702 = vmatprep.subr.mxu0 0.0
    %1703 = vmatpush2.msra.mxu0 0.0
    %1704 = vmatprep.subr.mxu0 0.0
    %1705 = vmatpush2.msra.mxu0 0.0
    %1706 = vmatprep.subr.mxu0 0.0
    %1707 = vmatpush2.msra.mxu0 0.0
    %1708 = vmatprep.subr.mxu0 0.0
    %1709 = vmatpush2.msra.mxu0 0.0
    %1710 = vmatprep.subr.mxu0 0.0
    %1711 = vmatpush2.msra.mxu0 0.0
    %1712 = vmatprep.subr.mxu0 0.0
    %1713 = vmatpush2.msra.mxu0 0.0
    %1714 = vmatprep.mubr.f32.mxu0 0.0
    %1715 = vmatmul.mubr.f32.gmra.mxu0 %v1648
    %v1716 = vpop.f32.mrf.mxu0
    %v1717 = vadd.f32 0.0, %v1716
    %v1718 = vpop.f32.mrf.mxu0
    %1719 = vdwg.mxu0
    %v1720 = vld [vmem:[#allocation2 + $0x3a0] sm:$0xff]
    %v1721 = vld [vmem:[#allocation2 + $0x3a8] sm:$0xff]
    %v1722 = vld [vmem:[#allocation2 + $0x3b0] sm:$0xff]
    %v1723 = vld [vmem:[#allocation2 + $0x3b8] sm:$0xff]
    %v1725 = vsel %vm33, %v1717, 0
    %1727 = vmatprep.subr.mxu0 0.0
    %1728 = vmatpush1.msra.mxu0 0.0
    %1729 = vmatprep.subr.mxu0 0.0
    %1730 = vmatpush1.msra.mxu0 0.0
    %1731 = vmatprep.subr.mxu0 0.0
    %1732 = vmatpush1.msra.mxu0 0.0
    %1733 = vmatprep.subr.mxu0 0.0
    %1734 = vmatpush1.msra.mxu0 0.0
    %1735 = vmatprep.subr.mxu0 0.0
    %1736 = vmatpush1.msra.mxu0 0.0
    %1737 = vmatprep.subr.mxu0 0.0
    %1738 = vmatpush1.msra.mxu0 0.0
    %1739 = vmatprep.subr.mxu0 0.0
    %1740 = vmatpush1.msra.mxu0 0.0
    %1741 = vmatprep.subr.mxu0 0.0
    %1742 = vmatpush1.msra.mxu0 0.0
    %1743 = vmatprep.subr.mxu0 0.0
    %1744 = vmatpush1.msra.mxu0 0.0
    %1745 = vmatprep.subr.mxu0 0.0
    %1746 = vmatpush1.msra.mxu0 0.0
    %1747 = vmatprep.subr.mxu0 0.0
    %1748 = vmatpush1.msra.mxu0 0.0
    %1749 = vmatprep.subr.mxu0 0.0
    %1750 = vmatpush1.msra.mxu0 0.0
    %1751 = vmatprep.subr.mxu0 0.0
    %1752 = vmatpush1.msra.mxu0 %v1723
    %1753 = vmatprep.subr.mxu0 0.0
    %1754 = vmatpush1.msra.mxu0 %v1722
    %1755 = vmatprep.subr.mxu0 0.0
    %1756 = vmatpush1.msra.mxu0 %v1721
    %1757 = vmatprep.subr.mxu0 0.0
    %1758 = vmatpush1.msra.mxu0 %v1720
    %1759 = vmatprep.subr.mxu0 0.0
    %1760 = vmatpush2.msra.mxu0 0.0
    %1761 = vmatprep.subr.mxu0 0.0
    %1762 = vmatpush2.msra.mxu0 0.0
    %1763 = vmatprep.subr.mxu0 0.0
    %1764 = vmatpush2.msra.mxu0 0.0
    %1765 = vmatprep.subr.mxu0 0.0
    %1766 = vmatpush2.msra.mxu0 0.0
    %1767 = vmatprep.subr.mxu0 0.0
    %1768 = vmatpush2.msra.mxu0 0.0
    %1769 = vmatprep.subr.mxu0 0.0
    %1770 = vmatpush2.msra.mxu0 0.0
    %1771 = vmatprep.subr.mxu0 0.0
    %1772 = vmatpush2.msra.mxu0 0.0
    %1773 = vmatprep.subr.mxu0 0.0
    %1774 = vmatpush2.msra.mxu0 0.0
    %1775 = vmatprep.subr.mxu0 0.0
    %1776 = vmatpush2.msra.mxu0 0.0
    %1777 = vmatprep.subr.mxu0 0.0
    %1778 = vmatpush2.msra.mxu0 0.0
    %1779 = vmatprep.subr.mxu0 0.0
    %1780 = vmatpush2.msra.mxu0 0.0
    %1781 = vmatprep.subr.mxu0 0.0
    %1782 = vmatpush2.msra.mxu0 0.0
    %1783 = vmatprep.subr.mxu0 0.0
    %1784 = vmatpush2.msra.mxu0 0.0
    %1785 = vmatprep.subr.mxu0 0.0
    %1786 = vmatpush2.msra.mxu0 0.0
    %1787 = vmatprep.subr.mxu0 0.0
    %1788 = vmatpush2.msra.mxu0 0.0
    %1789 = vmatprep.subr.mxu0 0.0
    %1790 = vmatpush2.msra.mxu0 0.0
    %1791 = vmatprep.mubr.f32.mxu0 0.0
    %1792 = vmatmul.mubr.f32.gmra.mxu0 %v1725
    %v1793 = vpop.f32.mrf.mxu0
    %v1794 = vadd.f32 0.0, %v1793
    %v1795 = vpop.f32.mrf.mxu0
    %1796 = vdwg.mxu0
    %v1798 = vsel %vm33, %v1639, 0
    %1800 = vmatprep.subr.mxu0 0.0
    %1801 = vmatpush1.msra.mxu0 0.0
    %1802 = vmatprep.subr.mxu0 0.0
    %1803 = vmatpush1.msra.mxu0 0.0
    %1804 = vmatprep.subr.mxu0 0.0
    %1805 = vmatpush1.msra.mxu0 0.0
    %1806 = vmatprep.subr.mxu0 0.0
    %1807 = vmatpush1.msra.mxu0 0.0
    %1808 = vmatprep.subr.mxu0 0.0
    %1809 = vmatpush1.msra.mxu0 0.0
    %1810 = vmatprep.subr.mxu0 0.0
    %1811 = vmatpush1.msra.mxu0 0.0
    %1812 = vmatprep.subr.mxu0 0.0
    %1813 = vmatpush1.msra.mxu0 0.0
    %1814 = vmatprep.subr.mxu0 0.0
    %1815 = vmatpush1.msra.mxu0 0.0
    %1816 = vmatprep.subr.mxu0 0.0
    %1817 = vmatpush1.msra.mxu0 0.0
    %1818 = vmatprep.subr.mxu0 0.0
    %1819 = vmatpush1.msra.mxu0 0.0
    %1820 = vmatprep.subr.mxu0 0.0
    %1821 = vmatpush1.msra.mxu0 0.0
    %1822 = vmatprep.subr.mxu0 0.0
    %1823 = vmatpush1.msra.mxu0 0.0
    %1824 = vmatprep.subr.mxu0 0.0
    %1825 = vmatpush1.msra.mxu0 %v1645
    %1826 = vmatprep.subr.mxu0 0.0
    %1827 = vmatpush1.msra.mxu0 %v1644
    %1828 = vmatprep.subr.mxu0 0.0
    %1829 = vmatpush1.msra.mxu0 %v1643
    %1830 = vmatprep.subr.mxu0 0.0
    %1831 = vmatpush1.msra.mxu0 %v1642
    %1832 = vmatprep.subr.mxu0 0.0
    %1833 = vmatpush2.msra.mxu0 0.0
    %1834 = vmatprep.subr.mxu0 0.0
    %1835 = vmatpush2.msra.mxu0 0.0
    %1836 = vmatprep.subr.mxu0 0.0
    %1837 = vmatpush2.msra.mxu0 0.0
    %1838 = vmatprep.subr.mxu0 0.0
    %1839 = vmatpush2.msra.mxu0 0.0
    %1840 = vmatprep.subr.mxu0 0.0
    %1841 = vmatpush2.msra.mxu0 0.0
    %1842 = vmatprep.subr.mxu0 0.0
    %1843 = vmatpush2.msra.mxu0 0.0
    %1844 = vmatprep.subr.mxu0 0.0
    %1845 = vmatpush2.msra.mxu0 0.0
    %1846 = vmatprep.subr.mxu0 0.0
    %1847 = vmatpush2.msra.mxu0 0.0
    %1848 = vmatprep.subr.mxu0 0.0
    %1849 = vmatpush2.msra.mxu0 0.0
    %1850 = vmatprep.subr.mxu0 0.0
    %1851 = vmatpush2.msra.mxu0 0.0
    %1852 = vmatprep.subr.mxu0 0.0
    %1853 = vmatpush2.msra.mxu0 0.0
    %1854 = vmatprep.subr.mxu0 0.0
    %1855 = vmatpush2.msra.mxu0 0.0
    %1856 = vmatprep.subr.mxu0 0.0
    %1857 = vmatpush2.msra.mxu0 0.0
    %1858 = vmatprep.subr.mxu0 0.0
    %1859 = vmatpush2.msra.mxu0 0.0
    %1860 = vmatprep.subr.mxu0 0.0
    %1861 = vmatpush2.msra.mxu0 0.0
    %1862 = vmatprep.subr.mxu0 0.0
    %1863 = vmatpush2.msra.mxu0 0.0
    %1864 = vmatprep.mubr.f32.mxu0 0.0
    %1865 = vmatmul.mubr.f32.gmra.mxu0 %v1798
    %v1866 = vpop.f32.mrf.mxu0
    %v1867 = vadd.f32 %v1794, %v1866
    %v1868 = vpop.f32.mrf.mxu0
    %1869 = vdwg.mxu0
    %v1870 = vld [vmem:[#allocation2 + $0x3c0] sm:$0xf]
    %v1872 = vsel %vm1568, %v1870, 0
    %1874 = vmatprep.subr.mxu0 0.0
    %1875 = vmatpush1.msra.mxu0 0.0
    %1876 = vmatprep.subr.mxu0 0.0
    %1877 = vmatpush1.msra.mxu0 0.0
    %1878 = vmatprep.subr.mxu0 0.0
    %1879 = vmatpush1.msra.mxu0 0.0
    %1880 = vmatprep.subr.mxu0 0.0
    %1881 = vmatpush1.msra.mxu0 0.0
    %1882 = vmatprep.subr.mxu0 0.0
    %1883 = vmatpush1.msra.mxu0 0.0
    %1884 = vmatprep.subr.mxu0 0.0
    %1885 = vmatpush1.msra.mxu0 0.0
    %1886 = vmatprep.subr.mxu0 0.0
    %1887 = vmatpush1.msra.mxu0 0.0
    %1888 = vmatprep.subr.mxu0 0.0
    %1889 = vmatpush1.msra.mxu0 0.0
    %1890 = vmatprep.subr.mxu0 0.0
    %1891 = vmatpush1.msra.mxu0 0.0
    %1892 = vmatprep.subr.mxu0 0.0
    %1893 = vmatpush1.msra.mxu0 0.0
    %1894 = vmatprep.subr.mxu0 0.0
    %1895 = vmatpush1.msra.mxu0 0.0
    %1896 = vmatprep.subr.mxu0 0.0
    %1897 = vmatpush1.msra.mxu0 0.0
    %1898 = vmatprep.subr.mxu0 0.0
    %1899 = vmatpush1.msra.mxu0 0.0
    %1900 = vmatprep.subr.mxu0 0.0
    %1901 = vmatpush1.msra.mxu0 0.0
    %1902 = vmatprep.subr.mxu0 0.0
    %1903 = vmatpush1.msra.mxu0 0.0
    %1904 = vmatprep.subr.mxu0 0.0
    %1905 = vmatpush1.msra.mxu0 %v1566
    %1906 = vmatprep.subr.mxu0 0.0
    %1907 = vmatpush2.msra.mxu0 0.0
    %1908 = vmatprep.subr.mxu0 0.0
    %1909 = vmatpush2.msra.mxu0 0.0
    %1910 = vmatprep.subr.mxu0 0.0
    %1911 = vmatpush2.msra.mxu0 0.0
    %1912 = vmatprep.subr.mxu0 0.0
    %1913 = vmatpush2.msra.mxu0 0.0
    %1914 = vmatprep.subr.mxu0 0.0
    %1915 = vmatpush2.msra.mxu0 0.0
    %1916 = vmatprep.subr.mxu0 0.0
    %1917 = vmatpush2.msra.mxu0 0.0
    %1918 = vmatprep.subr.mxu0 0.0
    %1919 = vmatpush2.msra.mxu0 0.0
    %1920 = vmatprep.subr.mxu0 0.0
    %1921 = vmatpush2.msra.mxu0 0.0
    %1922 = vmatprep.subr.mxu0 0.0
    %1923 = vmatpush2.msra.mxu0 0.0
    %1924 = vmatprep.subr.mxu0 0.0
    %1925 = vmatpush2.msra.mxu0 0.0
    %1926 = vmatprep.subr.mxu0 0.0
    %1927 = vmatpush2.msra.mxu0 0.0
    %1928 = vmatprep.subr.mxu0 0.0
    %1929 = vmatpush2.msra.mxu0 0.0
    %1930 = vmatprep.subr.mxu0 0.0
    %1931 = vmatpush2.msra.mxu0 0.0
    %1932 = vmatprep.subr.mxu0 0.0
    %1933 = vmatpush2.msra.mxu0 0.0
    %1934 = vmatprep.subr.mxu0 0.0
    %1935 = vmatpush2.msra.mxu0 0.0
    %1936 = vmatprep.subr.mxu0 0.0
    %1937 = vmatpush2.msra.mxu0 0.0
    %1938 = vmatprep.mubr.f32.mxu0 0.0
    %1939 = vmatmul.mubr.f32.gmra.mxu0 %v1872
    %v1940 = vpop.f32.mrf.mxu0
    %v1941 = vadd.f32 0.0, %v1940
    %v1942 = vpop.f32.mrf.mxu0
    %1943 = vdwg.mxu0
    %v1944 = vld [vmem:[#allocation2 + $0x3c8] sm:$0xff]
    %v1945 = vld [vmem:[#allocation2 + $0x3d0] sm:$0xff]
    %v1946 = vld [vmem:[#allocation2 + $0x3d8] sm:$0xff]
    %v1947 = vld [vmem:[#allocation2 + $0x3e0] sm:$0xff]
    %v1949 = vsel %vm33, %v1941, 0
    %1951 = vmatprep.subr.mxu0 0.0
    %1952 = vmatpush1.msra.mxu0 0.0
    %1953 = vmatprep.subr.mxu0 0.0
    %1954 = vmatpush1.msra.mxu0 0.0
    %1955 = vmatprep.subr.mxu0 0.0
    %1956 = vmatpush1.msra.mxu0 0.0
    %1957 = vmatprep.subr.mxu0 0.0
    %1958 = vmatpush1.msra.mxu0 0.0
    %1959 = vmatprep.subr.mxu0 0.0
    %1960 = vmatpush1.msra.mxu0 0.0
    %1961 = vmatprep.subr.mxu0 0.0
    %1962 = vmatpush1.msra.mxu0 0.0
    %1963 = vmatprep.subr.mxu0 0.0
    %1964 = vmatpush1.msra.mxu0 0.0
    %1965 = vmatprep.subr.mxu0 0.0
    %1966 = vmatpush1.msra.mxu0 0.0
    %1967 = vmatprep.subr.mxu0 0.0
    %1968 = vmatpush1.msra.mxu0 0.0
    %1969 = vmatprep.subr.mxu0 0.0
    %1970 = vmatpush1.msra.mxu0 0.0
    %1971 = vmatprep.subr.mxu0 0.0
    %1972 = vmatpush1.msra.mxu0 0.0
    %1973 = vmatprep.subr.mxu0 0.0
    %1974 = vmatpush1.msra.mxu0 0.0
    %1975 = vmatprep.subr.mxu0 0.0
    %1976 = vmatpush1.msra.mxu0 %v1947
    %1977 = vmatprep.subr.mxu0 0.0
    %1978 = vmatpush1.msra.mxu0 %v1946
    %1979 = vmatprep.subr.mxu0 0.0
    %1980 = vmatpush1.msra.mxu0 %v1945
    %1981 = vmatprep.subr.mxu0 0.0
    %1982 = vmatpush1.msra.mxu0 %v1944
    %1983 = vmatprep.subr.mxu0 0.0
    %1984 = vmatpush2.msra.mxu0 0.0
    %1985 = vmatprep.subr.mxu0 0.0
    %1986 = vmatpush2.msra.mxu0 0.0
    %1987 = vmatprep.subr.mxu0 0.0
    %1988 = vmatpush2.msra.mxu0 0.0
    %1989 = vmatprep.subr.mxu0 0.0
    %1990 = vmatpush2.msra.mxu0 0.0
    %1991 = vmatprep.subr.mxu0 0.0
    %1992 = vmatpush2.msra.mxu0 0.0
    %1993 = vmatprep.subr.mxu0 0.0
    %1994 = vmatpush2.msra.mxu0 0.0
    %1995 = vmatprep.subr.mxu0 0.0
    %1996 = vmatpush2.msra.mxu0 0.0
    %1997 = vmatprep.subr.mxu0 0.0
    %1998 = vmatpush2.msra.mxu0 0.0
    %1999 = vmatprep.subr.mxu0 0.0
    %2000 = vmatpush2.msra.mxu0 0.0
    %2001 = vmatprep.subr.mxu0 0.0
    %2002 = vmatpush2.msra.mxu0 0.0
    %2003 = vmatprep.subr.mxu0 0.0
    %2004 = vmatpush2.msra.mxu0 0.0
    %2005 = vmatprep.subr.mxu0 0.0
    %2006 = vmatpush2.msra.mxu0 0.0
    %2007 = vmatprep.subr.mxu0 0.0
    %2008 = vmatpush2.msra.mxu0 0.0
    %2009 = vmatprep.subr.mxu0 0.0
    %2010 = vmatpush2.msra.mxu0 0.0
    %2011 = vmatprep.subr.mxu0 0.0
    %2012 = vmatpush2.msra.mxu0 0.0
    %2013 = vmatprep.subr.mxu0 0.0
    %2014 = vmatpush2.msra.mxu0 0.0
    %2015 = vmatprep.mubr.f32.mxu0 0.0
    %2016 = vmatmul.mubr.f32.gmra.mxu0 %v1949
    %v2017 = vpop.f32.mrf.mxu0
    %v2018 = vadd.f32 0.0, %v2017
    %v2019 = vpop.f32.mrf.mxu0
    %2020 = vdwg.mxu0
    %v2021 = vadd.f32 %v1867, %v2018
    %v2022 = vld [vmem:[#allocation2 + $0x3e8] sm:$0x1]
    %v2023 = vlaneseq
    %v2024 = vshrl.u32 %v2023, 7
    %v2025 = vsub.s32 0, %v2024
    %v2026 = vrot.slane %v2022, %v2025
    %v2027 = vadd.f32 %v2021, %v2026
    %v2028 = vmax.f32 %v2027, 0.0
    %v2029 = vld [vmem:[#allocation2 + $0x3f0] sm:$0x3]
    %vm2030 = vcmask 31744
    %v2032 = vsel %vm2030, %v2029, 0
    %vm2034 = vcmask 1043456
    %v2036 = vsel %vm2034, %v2028, 0
    %2038 = vmatprep.subr.mxu0 0.0
    %2039 = vmatpush1.msra.mxu0 0.0
    %2040 = vmatprep.subr.mxu0 0.0
    %2041 = vmatpush1.msra.mxu0 0.0
    %2042 = vmatprep.subr.mxu0 0.0
    %2043 = vmatpush1.msra.mxu0 0.0
    %2044 = vmatprep.subr.mxu0 0.0
    %2045 = vmatpush1.msra.mxu0 0.0
    %2046 = vmatprep.subr.mxu0 0.0
    %2047 = vmatpush1.msra.mxu0 0.0
    %2048 = vmatprep.subr.mxu0 0.0
    %2049 = vmatpush1.msra.mxu0 0.0
    %2050 = vmatprep.subr.mxu0 0.0
    %2051 = vmatpush1.msra.mxu0 0.0
    %2052 = vmatprep.subr.mxu0 0.0
    %2053 = vmatpush1.msra.mxu0 0.0
    %2054 = vmatprep.subr.mxu0 0.0
    %2055 = vmatpush1.msra.mxu0 0.0
    %2056 = vmatprep.subr.mxu0 0.0
    %2057 = vmatpush1.msra.mxu0 0.0
    %2058 = vmatprep.subr.mxu0 0.0
    %2059 = vmatpush1.msra.mxu0 0.0
    %2060 = vmatprep.subr.mxu0 0.0
    %2061 = vmatpush1.msra.mxu0 0.0
    %2062 = vmatprep.subr.mxu0 0.0
    %2063 = vmatpush1.msra.mxu0 0.0
    %2064 = vmatprep.subr.mxu0 0.0
    %2065 = vmatpush1.msra.mxu0 0.0
    %2066 = vmatprep.subr.mxu0 0.0
    %2067 = vmatpush1.msra.mxu0 0.0
    %2068 = vmatprep.subr.mxu0 0.0
    %2069 = vmatpush1.msra.mxu0 %v2036
    %2070 = vmatprep.subr.mxu0 0.0
    %2071 = vmatpush2.msra.mxu0 0.0
    %2072 = vmatprep.subr.mxu0 0.0
    %2073 = vmatpush2.msra.mxu0 0.0
    %2074 = vmatprep.subr.mxu0 0.0
    %2075 = vmatpush2.msra.mxu0 0.0
    %2076 = vmatprep.subr.mxu0 0.0
    %2077 = vmatpush2.msra.mxu0 0.0
    %2078 = vmatprep.subr.mxu0 0.0
    %2079 = vmatpush2.msra.mxu0 0.0
    %2080 = vmatprep.subr.mxu0 0.0
    %2081 = vmatpush2.msra.mxu0 0.0
    %2082 = vmatprep.subr.mxu0 0.0
    %2083 = vmatpush2.msra.mxu0 0.0
    %2084 = vmatprep.subr.mxu0 0.0
    %2085 = vmatpush2.msra.mxu0 0.0
    %2086 = vmatprep.subr.mxu0 0.0
    %2087 = vmatpush2.msra.mxu0 0.0
    %2088 = vmatprep.subr.mxu0 0.0
    %2089 = vmatpush2.msra.mxu0 0.0
    %2090 = vmatprep.subr.mxu0 0.0
    %2091 = vmatpush2.msra.mxu0 0.0
    %2092 = vmatprep.subr.mxu0 0.0
    %2093 = vmatpush2.msra.mxu0 0.0
    %2094 = vmatprep.subr.mxu0 0.0
    %2095 = vmatpush2.msra.mxu0 0.0
    %2096 = vmatprep.subr.mxu0 0.0
    %2097 = vmatpush2.msra.mxu0 0.0
    %2098 = vmatprep.subr.mxu0 0.0
    %2099 = vmatpush2.msra.mxu0 0.0
    %2100 = vmatprep.subr.mxu0 0.0
    %2101 = vmatpush2.msra.mxu0 0.0
    %2102 = vmatprep.mubr.f32.mxu0 0.0
    %2103 = vmatmul.mubr.f32.gmra.mxu0 %v2032
    %v2104 = vpop.f32.mrf.mxu0
    %v2105 = vadd.f32 0.0, %v2104
    %v2106 = vpop.f32.mrf.mxu0
    %2107 = vdwg.mxu0
    %v2108 = vld [vmem:[#allocation2 + $0x3f8] sm:$0xff]
    %v2109 = vld [vmem:[#allocation2 + $0x400] sm:$0xff]
    %v2110 = vld [vmem:[#allocation2 + $0x408] sm:$0xff]
    %v2111 = vld [vmem:[#allocation2 + $0x410] sm:$0xff]
    %v2112 = vld [vmem:[#allocation2 + $0x418] sm:$0x3]
    %v2114 = vsel %vm2030, %v2112, 0
    %2116 = vmatprep.subr.mxu0 0.0
    %2117 = vmatpush1.msra.mxu0 0.0
    %2118 = vmatprep.subr.mxu0 0.0
    %2119 = vmatpush1.msra.mxu0 0.0
    %2120 = vmatprep.subr.mxu0 0.0
    %2121 = vmatpush1.msra.mxu0 0.0
    %2122 = vmatprep.subr.mxu0 0.0
    %2123 = vmatpush1.msra.mxu0 0.0
    %2124 = vmatprep.subr.mxu0 0.0
    %2125 = vmatpush1.msra.mxu0 0.0
    %2126 = vmatprep.subr.mxu0 0.0
    %2127 = vmatpush1.msra.mxu0 0.0
    %2128 = vmatprep.subr.mxu0 0.0
    %2129 = vmatpush1.msra.mxu0 0.0
    %2130 = vmatprep.subr.mxu0 0.0
    %2131 = vmatpush1.msra.mxu0 0.0
    %2132 = vmatprep.subr.mxu0 0.0
    %2133 = vmatpush1.msra.mxu0 0.0
    %2134 = vmatprep.subr.mxu0 0.0
    %2135 = vmatpush1.msra.mxu0 0.0
    %2136 = vmatprep.subr.mxu0 0.0
    %2137 = vmatpush1.msra.mxu0 0.0
    %2138 = vmatprep.subr.mxu0 0.0
    %2139 = vmatpush1.msra.mxu0 0.0
    %2140 = vmatprep.subr.mxu0 0.0
    %2141 = vmatpush1.msra.mxu0 0.0
    %2142 = vmatprep.subr.mxu0 0.0
    %2143 = vmatpush1.msra.mxu0 0.0
    %2144 = vmatprep.subr.mxu0 0.0
    %2145 = vmatpush1.msra.mxu0 0.0
    %2146 = vmatprep.subr.mxu0 0.0
    %2147 = vmatpush1.msra.mxu0 %v2036
    %2148 = vmatprep.subr.mxu0 0.0
    %2149 = vmatpush2.msra.mxu0 0.0
    %2150 = vmatprep.subr.mxu0 0.0
    %2151 = vmatpush2.msra.mxu0 0.0
    %2152 = vmatprep.subr.mxu0 0.0
    %2153 = vmatpush2.msra.mxu0 0.0
    %2154 = vmatprep.subr.mxu0 0.0
    %2155 = vmatpush2.msra.mxu0 0.0
    %2156 = vmatprep.subr.mxu0 0.0
    %2157 = vmatpush2.msra.mxu0 0.0
    %2158 = vmatprep.subr.mxu0 0.0
    %2159 = vmatpush2.msra.mxu0 0.0
    %2160 = vmatprep.subr.mxu0 0.0
    %2161 = vmatpush2.msra.mxu0 0.0
    %2162 = vmatprep.subr.mxu0 0.0
    %2163 = vmatpush2.msra.mxu0 0.0
    %2164 = vmatprep.subr.mxu0 0.0
    %2165 = vmatpush2.msra.mxu0 0.0
    %2166 = vmatprep.subr.mxu0 0.0
    %2167 = vmatpush2.msra.mxu0 0.0
    %2168 = vmatprep.subr.mxu0 0.0
    %2169 = vmatpush2.msra.mxu0 0.0
    %2170 = vmatprep.subr.mxu0 0.0
    %2171 = vmatpush2.msra.mxu0 0.0
    %2172 = vmatprep.subr.mxu0 0.0
    %2173 = vmatpush2.msra.mxu0 0.0
    %2174 = vmatprep.subr.mxu0 0.0
    %2175 = vmatpush2.msra.mxu0 0.0
    %2176 = vmatprep.subr.mxu0 0.0
    %2177 = vmatpush2.msra.mxu0 0.0
    %2178 = vmatprep.subr.mxu0 0.0
    %2179 = vmatpush2.msra.mxu0 0.0
    %2180 = vmatprep.mubr.f32.mxu0 0.0
    %2181 = vmatmul.mubr.f32.gmra.mxu0 %v2114
    %v2182 = vpop.f32.mrf.mxu0
    %v2183 = vadd.f32 0.0, %v2182
    %v2184 = vpop.f32.mrf.mxu0
    %2185 = vdwg.mxu0
    %v2186 = vld [vmem:[#allocation2 + $0x420] sm:$0xff]
    %v2187 = vld [vmem:[#allocation2 + $0x428] sm:$0xff]
    %v2188 = vld [vmem:[#allocation2 + $0x430] sm:$0xff]
    %v2189 = vld [vmem:[#allocation2 + $0x438] sm:$0xff]
    %v2191 = vsel %vm33, %v2183, 0
    %2193 = vmatprep.subr.mxu0 0.0
    %2194 = vmatpush1.msra.mxu0 0.0
    %2195 = vmatprep.subr.mxu0 0.0
    %2196 = vmatpush1.msra.mxu0 0.0
    %2197 = vmatprep.subr.mxu0 0.0
    %2198 = vmatpush1.msra.mxu0 0.0
    %2199 = vmatprep.subr.mxu0 0.0
    %2200 = vmatpush1.msra.mxu0 0.0
    %2201 = vmatprep.subr.mxu0 0.0
    %2202 = vmatpush1.msra.mxu0 0.0
    %2203 = vmatprep.subr.mxu0 0.0
    %2204 = vmatpush1.msra.mxu0 0.0
    %2205 = vmatprep.subr.mxu0 0.0
    %2206 = vmatpush1.msra.mxu0 0.0
    %2207 = vmatprep.subr.mxu0 0.0
    %2208 = vmatpush1.msra.mxu0 0.0
    %2209 = vmatprep.subr.mxu0 0.0
    %2210 = vmatpush1.msra.mxu0 0.0
    %2211 = vmatprep.subr.mxu0 0.0
    %2212 = vmatpush1.msra.mxu0 0.0
    %2213 = vmatprep.subr.mxu0 0.0
    %2214 = vmatpush1.msra.mxu0 0.0
    %2215 = vmatprep.subr.mxu0 0.0
    %2216 = vmatpush1.msra.mxu0 0.0
    %2217 = vmatprep.subr.mxu0 0.0
    %2218 = vmatpush1.msra.mxu0 %v2189
    %2219 = vmatprep.subr.mxu0 0.0
    %2220 = vmatpush1.msra.mxu0 %v2188
    %2221 = vmatprep.subr.mxu0 0.0
    %2222 = vmatpush1.msra.mxu0 %v2187
    %2223 = vmatprep.subr.mxu0 0.0
    %2224 = vmatpush1.msra.mxu0 %v2186
    %2225 = vmatprep.subr.mxu0 0.0
    %2226 = vmatpush2.msra.mxu0 0.0
    %2227 = vmatprep.subr.mxu0 0.0
    %2228 = vmatpush2.msra.mxu0 0.0
    %2229 = vmatprep.subr.mxu0 0.0
    %2230 = vmatpush2.msra.mxu0 0.0
    %2231 = vmatprep.subr.mxu0 0.0
    %2232 = vmatpush2.msra.mxu0 0.0
    %2233 = vmatprep.subr.mxu0 0.0
    %2234 = vmatpush2.msra.mxu0 0.0
    %2235 = vmatprep.subr.mxu0 0.0
    %2236 = vmatpush2.msra.mxu0 0.0
    %2237 = vmatprep.subr.mxu0 0.0
    %2238 = vmatpush2.msra.mxu0 0.0
    %2239 = vmatprep.subr.mxu0 0.0
    %2240 = vmatpush2.msra.mxu0 0.0
    %2241 = vmatprep.subr.mxu0 0.0
    %2242 = vmatpush2.msra.mxu0 0.0
    %2243 = vmatprep.subr.mxu0 0.0
    %2244 = vmatpush2.msra.mxu0 0.0
    %2245 = vmatprep.subr.mxu0 0.0
    %2246 = vmatpush2.msra.mxu0 0.0
    %2247 = vmatprep.subr.mxu0 0.0
    %2248 = vmatpush2.msra.mxu0 0.0
    %2249 = vmatprep.subr.mxu0 0.0
    %2250 = vmatpush2.msra.mxu0 0.0
    %2251 = vmatprep.subr.mxu0 0.0
    %2252 = vmatpush2.msra.mxu0 0.0
    %2253 = vmatprep.subr.mxu0 0.0
    %2254 = vmatpush2.msra.mxu0 0.0
    %2255 = vmatprep.subr.mxu0 0.0
    %2256 = vmatpush2.msra.mxu0 0.0
    %2257 = vmatprep.mubr.f32.mxu0 0.0
    %2258 = vmatmul.mubr.f32.gmra.mxu0 %v2191
    %v2259 = vpop.f32.mrf.mxu0
    %v2260 = vadd.f32 0.0, %v2259
    %v2261 = vpop.f32.mrf.mxu0
    %2262 = vdwg.mxu0
    %v2264 = vsel %vm33, %v2105, 0
    %2266 = vmatprep.subr.mxu0 0.0
    %2267 = vmatpush1.msra.mxu0 0.0
    %2268 = vmatprep.subr.mxu0 0.0
    %2269 = vmatpush1.msra.mxu0 0.0
    %2270 = vmatprep.subr.mxu0 0.0
    %2271 = vmatpush1.msra.mxu0 0.0
    %2272 = vmatprep.subr.mxu0 0.0
    %2273 = vmatpush1.msra.mxu0 0.0
    %2274 = vmatprep.subr.mxu0 0.0
    %2275 = vmatpush1.msra.mxu0 0.0
    %2276 = vmatprep.subr.mxu0 0.0
    %2277 = vmatpush1.msra.mxu0 0.0
    %2278 = vmatprep.subr.mxu0 0.0
    %2279 = vmatpush1.msra.mxu0 0.0
    %2280 = vmatprep.subr.mxu0 0.0
    %2281 = vmatpush1.msra.mxu0 0.0
    %2282 = vmatprep.subr.mxu0 0.0
    %2283 = vmatpush1.msra.mxu0 0.0
    %2284 = vmatprep.subr.mxu0 0.0
    %2285 = vmatpush1.msra.mxu0 0.0
    %2286 = vmatprep.subr.mxu0 0.0
    %2287 = vmatpush1.msra.mxu0 0.0
    %2288 = vmatprep.subr.mxu0 0.0
    %2289 = vmatpush1.msra.mxu0 0.0
    %2290 = vmatprep.subr.mxu0 0.0
    %2291 = vmatpush1.msra.mxu0 %v2111
    %2292 = vmatprep.subr.mxu0 0.0
    %2293 = vmatpush1.msra.mxu0 %v2110
    %2294 = vmatprep.subr.mxu0 0.0
    %2295 = vmatpush1.msra.mxu0 %v2109
    %2296 = vmatprep.subr.mxu0 0.0
    %2297 = vmatpush1.msra.mxu0 %v2108
    %2298 = vmatprep.subr.mxu0 0.0
    %2299 = vmatpush2.msra.mxu0 0.0
    %2300 = vmatprep.subr.mxu0 0.0
    %2301 = vmatpush2.msra.mxu0 0.0
    %2302 = vmatprep.subr.mxu0 0.0
    %2303 = vmatpush2.msra.mxu0 0.0
    %2304 = vmatprep.subr.mxu0 0.0
    %2305 = vmatpush2.msra.mxu0 0.0
    %2306 = vmatprep.subr.mxu0 0.0
    %2307 = vmatpush2.msra.mxu0 0.0
    %2308 = vmatprep.subr.mxu0 0.0
    %2309 = vmatpush2.msra.mxu0 0.0
    %2310 = vmatprep.subr.mxu0 0.0
    %2311 = vmatpush2.msra.mxu0 0.0
    %2312 = vmatprep.subr.mxu0 0.0
    %2313 = vmatpush2.msra.mxu0 0.0
    %2314 = vmatprep.subr.mxu0 0.0
    %2315 = vmatpush2.msra.mxu0 0.0
    %2316 = vmatprep.subr.mxu0 0.0
    %2317 = vmatpush2.msra.mxu0 0.0
    %2318 = vmatprep.subr.mxu0 0.0
    %2319 = vmatpush2.msra.mxu0 0.0
    %2320 = vmatprep.subr.mxu0 0.0
    %2321 = vmatpush2.msra.mxu0 0.0
    %2322 = vmatprep.subr.mxu0 0.0
    %2323 = vmatpush2.msra.mxu0 0.0
    %2324 = vmatprep.subr.mxu0 0.0
    %2325 = vmatpush2.msra.mxu0 0.0
    %2326 = vmatprep.subr.mxu0 0.0
    %2327 = vmatpush2.msra.mxu0 0.0
    %2328 = vmatprep.subr.mxu0 0.0
    %2329 = vmatpush2.msra.mxu0 0.0
    %2330 = vmatprep.mubr.f32.mxu0 0.0
    %2331 = vmatmul.mubr.f32.gmra.mxu0 %v2264
    %v2332 = vpop.f32.mrf.mxu0
    %v2333 = vadd.f32 %v2260, %v2332
    %v2334 = vpop.f32.mrf.mxu0
    %2335 = vdwg.mxu0
    %v2336 = vld [vmem:[#allocation2 + $0x440] sm:$0x1]
    %v2337 = vlaneseq
    %v2338 = vshrl.u32 %v2337, 7
    %v2339 = vsub.s32 0, %v2338
    %v2340 = vrot.slane %v2336, %v2339
    %v2341 = vadd.f32 %v2333, %v2340
    %v2342 = vmax.f32 %v2341, 0.0
    %v2343 = vld [vmem:[#allocation2 + $0x448] sm:$0xff]
    %v2344 = vld [vmem:[#allocation2 + $0x450] sm:$0xff]
    %v2345 = vld [vmem:[#allocation2 + $0x458] sm:$0x1]
    %v2346 = vlaneseq
    %v2347 = vshrl.u32 %v2346, 7
    %v2348 = vsub.s32 0, %v2347
    %v2349 = vrot.slane %v2345, %v2348
    %v2351 = vsel %vm1093, %v2342, 0
    %2353 = vmatprep.subr.mxu0 0.0
    %2354 = vmatpush1.msra.mxu0 0.0
    %2355 = vmatprep.subr.mxu0 0.0
    %2356 = vmatpush1.msra.mxu0 0.0
    %2357 = vmatprep.subr.mxu0 0.0
    %2358 = vmatpush1.msra.mxu0 0.0
    %2359 = vmatprep.subr.mxu0 0.0
    %2360 = vmatpush1.msra.mxu0 0.0
    %2361 = vmatprep.subr.mxu0 0.0
    %2362 = vmatpush1.msra.mxu0 0.0
    %2363 = vmatprep.subr.mxu0 0.0
    %2364 = vmatpush1.msra.mxu0 0.0
    %2365 = vmatprep.subr.mxu0 0.0
    %2366 = vmatpush1.msra.mxu0 0.0
    %2367 = vmatprep.subr.mxu0 0.0
    %2368 = vmatpush1.msra.mxu0 0.0
    %2369 = vmatprep.subr.mxu0 0.0
    %2370 = vmatpush1.msra.mxu0 0.0
    %2371 = vmatprep.subr.mxu0 0.0
    %2372 = vmatpush1.msra.mxu0 0.0
    %2373 = vmatprep.subr.mxu0 0.0
    %2374 = vmatpush1.msra.mxu0 0.0
    %2375 = vmatprep.subr.mxu0 0.0
    %2376 = vmatpush1.msra.mxu0 0.0
    %2377 = vmatprep.subr.mxu0 0.0
    %2378 = vmatpush1.msra.mxu0 0.0
    %2379 = vmatprep.subr.mxu0 0.0
    %2380 = vmatpush1.msra.mxu0 0.0
    %2381 = vmatprep.subr.mxu0 0.0
    %2382 = vmatpush1.msra.mxu0 %v2344
    %2383 = vmatprep.subr.mxu0 0.0
    %2384 = vmatpush1.msra.mxu0 %v2343
    %2385 = vmatprep.subr.mxu0 0.0
    %2386 = vmatpush2.msra.mxu0 0.0
    %2387 = vmatprep.subr.mxu0 0.0
    %2388 = vmatpush2.msra.mxu0 0.0
    %2389 = vmatprep.subr.mxu0 0.0
    %2390 = vmatpush2.msra.mxu0 0.0
    %2391 = vmatprep.subr.mxu0 0.0
    %2392 = vmatpush2.msra.mxu0 0.0
    %2393 = vmatprep.subr.mxu0 0.0
    %2394 = vmatpush2.msra.mxu0 0.0
    %2395 = vmatprep.subr.mxu0 0.0
    %2396 = vmatpush2.msra.mxu0 0.0
    %2397 = vmatprep.subr.mxu0 0.0
    %2398 = vmatpush2.msra.mxu0 0.0
    %2399 = vmatprep.subr.mxu0 0.0
    %2400 = vmatpush2.msra.mxu0 0.0
    %2401 = vmatprep.subr.mxu0 0.0
    %2402 = vmatpush2.msra.mxu0 0.0
    %2403 = vmatprep.subr.mxu0 0.0
    %2404 = vmatpush2.msra.mxu0 0.0
    %2405 = vmatprep.subr.mxu0 0.0
    %2406 = vmatpush2.msra.mxu0 0.0
    %2407 = vmatprep.subr.mxu0 0.0
    %2408 = vmatpush2.msra.mxu0 0.0
    %2409 = vmatprep.subr.mxu0 0.0
    %2410 = vmatpush2.msra.mxu0 0.0
    %2411 = vmatprep.subr.mxu0 0.0
    %2412 = vmatpush2.msra.mxu0 0.0
    %2413 = vmatprep.subr.mxu0 0.0
    %2414 = vmatpush2.msra.mxu0 0.0
    %2415 = vmatprep.subr.mxu0 0.0
    %2416 = vmatpush2.msra.mxu0 0.0
    %2417 = vmatprep.mubr.f32.mxu0 0.0
    %2418 = vmatmul.mubr.f32.gmra.mxu0 %v2351
    %v2419 = vpop.f32.mrf.mxu0
    %v2420 = vadd.f32 %v2349, %v2419
    %v2421 = vpop.f32.mrf.mxu0
    %2422 = vdwg.mxu0
    %v2423 = vmax.f32 %v2420, 0.0
    %v2424 = vld [vmem:[#allocation2 + $0x460] sm:$0xff]
    %v2425 = vld [vmem:[#allocation2 + $0x468] sm:$0xff]
    %v2426 = vld [vmem:[#allocation2 + $0x470] sm:$0xff]
    %v2427 = vld [vmem:[#allocation2 + $0x478] sm:$0xff]
    %v2428 = vld [vmem:[#allocation2 + $0x480] sm:$0x1]
    %v2429 = vlaneseq
    %v2430 = vshrl.u32 %v2429, 7
    %v2431 = vsub.s32 0, %v2430
    %v2432 = vrot.slane %v2428, %v2431
    %v2434 = vsel %vm33, %v2423, 0
    %2436 = vmatprep.subr.mxu0 0.0
    %2437 = vmatpush1.msra.mxu0 0.0
    %2438 = vmatprep.subr.mxu0 0.0
    %2439 = vmatpush1.msra.mxu0 0.0
    %2440 = vmatprep.subr.mxu0 0.0
    %2441 = vmatpush1.msra.mxu0 0.0
    %2442 = vmatprep.subr.mxu0 0.0
    %2443 = vmatpush1.msra.mxu0 0.0
    %2444 = vmatprep.subr.mxu0 0.0
    %2445 = vmatpush1.msra.mxu0 0.0
    %2446 = vmatprep.subr.mxu0 0.0
    %2447 = vmatpush1.msra.mxu0 0.0
    %2448 = vmatprep.subr.mxu0 0.0
    %2449 = vmatpush1.msra.mxu0 0.0
    %2450 = vmatprep.subr.mxu0 0.0
    %2451 = vmatpush1.msra.mxu0 0.0
    %2452 = vmatprep.subr.mxu0 0.0
    %2453 = vmatpush1.msra.mxu0 0.0
    %2454 = vmatprep.subr.mxu0 0.0
    %2455 = vmatpush1.msra.mxu0 0.0
    %2456 = vmatprep.subr.mxu0 0.0
    %2457 = vmatpush1.msra.mxu0 0.0
    %2458 = vmatprep.subr.mxu0 0.0
    %2459 = vmatpush1.msra.mxu0 0.0
    %2460 = vmatprep.subr.mxu0 0.0
    %2461 = vmatpush1.msra.mxu0 %v2427
    %2462 = vmatprep.subr.mxu0 0.0
    %2463 = vmatpush1.msra.mxu0 %v2426
    %2464 = vmatprep.subr.mxu0 0.0
    %2465 = vmatpush1.msra.mxu0 %v2425
    %2466 = vmatprep.subr.mxu0 0.0
    %2467 = vmatpush1.msra.mxu0 %v2424
    %2468 = vmatprep.subr.mxu0 0.0
    %2469 = vmatpush2.msra.mxu0 0.0
    %2470 = vmatprep.subr.mxu0 0.0
    %2471 = vmatpush2.msra.mxu0 0.0
    %2472 = vmatprep.subr.mxu0 0.0
    %2473 = vmatpush2.msra.mxu0 0.0
    %2474 = vmatprep.subr.mxu0 0.0
    %2475 = vmatpush2.msra.mxu0 0.0
    %2476 = vmatprep.subr.mxu0 0.0
    %2477 = vmatpush2.msra.mxu0 0.0
    %2478 = vmatprep.subr.mxu0 0.0
    %2479 = vmatpush2.msra.mxu0 0.0
    %2480 = vmatprep.subr.mxu0 0.0
    %2481 = vmatpush2.msra.mxu0 0.0
    %2482 = vmatprep.subr.mxu0 0.0
    %2483 = vmatpush2.msra.mxu0 0.0
    %2484 = vmatprep.subr.mxu0 0.0
    %2485 = vmatpush2.msra.mxu0 0.0
    %2486 = vmatprep.subr.mxu0 0.0
    %2487 = vmatpush2.msra.mxu0 0.0
    %2488 = vmatprep.subr.mxu0 0.0
    %2489 = vmatpush2.msra.mxu0 0.0
    %2490 = vmatprep.subr.mxu0 0.0
    %2491 = vmatpush2.msra.mxu0 0.0
    %2492 = vmatprep.subr.mxu0 0.0
    %2493 = vmatpush2.msra.mxu0 0.0
    %2494 = vmatprep.subr.mxu0 0.0
    %2495 = vmatpush2.msra.mxu0 0.0
    %2496 = vmatprep.subr.mxu0 0.0
    %2497 = vmatpush2.msra.mxu0 0.0
    %2498 = vmatprep.subr.mxu0 0.0
    %2499 = vmatpush2.msra.mxu0 0.0
    %2500 = vmatprep.mubr.f32.mxu0 0.0
    %2501 = vmatmul.mubr.f32.gmra.mxu0 %v2434
    %v2502 = vpop.f32.mrf.mxu0
    %v2503 = vadd.f32 %v2432, %v2502
    %v2504 = vpop.f32.mrf.mxu0
    %2505 = vdwg.mxu0
    %v2506 = vmax.f32 %v2503, 0.0
    %v2507 = vld [vmem:[#allocation2 + $0x488] sm:$0xff]
    %v2508 = vld [vmem:[#allocation2 + $0x490] sm:$0xff]
    %v2509 = vld [vmem:[#allocation2 + $0x498] sm:$0xff]
    %v2510 = vld [vmem:[#allocation2 + $0x4a0] sm:$0xff]
    %v2511 = vld [vmem:[#allocation2 + $0x4a8] sm:$0x1]
    %v2512 = vlaneseq
    %v2513 = vshrl.u32 %v2512, 7
    %v2514 = vsub.s32 0, %v2513
    %v2515 = vrot.slane %v2511, %v2514
    %v2517 = vsel %vm33, %v2506, 0
    %2519 = vmatprep.subr.mxu0 0.0
    %2520 = vmatpush1.msra.mxu0 0.0
    %2521 = vmatprep.subr.mxu0 0.0
    %2522 = vmatpush1.msra.mxu0 0.0
    %2523 = vmatprep.subr.mxu0 0.0
    %2524 = vmatpush1.msra.mxu0 0.0
    %2525 = vmatprep.subr.mxu0 0.0
    %2526 = vmatpush1.msra.mxu0 0.0
    %2527 = vmatprep.subr.mxu0 0.0
    %2528 = vmatpush1.msra.mxu0 0.0
    %2529 = vmatprep.subr.mxu0 0.0
    %2530 = vmatpush1.msra.mxu0 0.0
    %2531 = vmatprep.subr.mxu0 0.0
    %2532 = vmatpush1.msra.mxu0 0.0
    %2533 = vmatprep.subr.mxu0 0.0
    %2534 = vmatpush1.msra.mxu0 0.0
    %2535 = vmatprep.subr.mxu0 0.0
    %2536 = vmatpush1.msra.mxu0 0.0
    %2537 = vmatprep.subr.mxu0 0.0
    %2538 = vmatpush1.msra.mxu0 0.0
    %2539 = vmatprep.subr.mxu0 0.0
    %2540 = vmatpush1.msra.mxu0 0.0
    %2541 = vmatprep.subr.mxu0 0.0
    %2542 = vmatpush1.msra.mxu0 0.0
    %2543 = vmatprep.subr.mxu0 0.0
    %2544 = vmatpush1.msra.mxu0 %v2510
    %2545 = vmatprep.subr.mxu0 0.0
    %2546 = vmatpush1.msra.mxu0 %v2509
    %2547 = vmatprep.subr.mxu0 0.0
    %2548 = vmatpush1.msra.mxu0 %v2508
    %2549 = vmatprep.subr.mxu0 0.0
    %2550 = vmatpush1.msra.mxu0 %v2507
    %2551 = vmatprep.subr.mxu0 0.0
    %2552 = vmatpush2.msra.mxu0 0.0
    %2553 = vmatprep.subr.mxu0 0.0
    %2554 = vmatpush2.msra.mxu0 0.0
    %2555 = vmatprep.subr.mxu0 0.0
    %2556 = vmatpush2.msra.mxu0 0.0
    %2557 = vmatprep.subr.mxu0 0.0
    %2558 = vmatpush2.msra.mxu0 0.0
    %2559 = vmatprep.subr.mxu0 0.0
    %2560 = vmatpush2.msra.mxu0 0.0
    %2561 = vmatprep.subr.mxu0 0.0
    %2562 = vmatpush2.msra.mxu0 0.0
    %2563 = vmatprep.subr.mxu0 0.0
    %2564 = vmatpush2.msra.mxu0 0.0
    %2565 = vmatprep.subr.mxu0 0.0
    %2566 = vmatpush2.msra.mxu0 0.0
    %2567 = vmatprep.subr.mxu0 0.0
    %2568 = vmatpush2.msra.mxu0 0.0
    %2569 = vmatprep.subr.mxu0 0.0
    %2570 = vmatpush2.msra.mxu0 0.0
    %2571 = vmatprep.subr.mxu0 0.0
    %2572 = vmatpush2.msra.mxu0 0.0
    %2573 = vmatprep.subr.mxu0 0.0
    %2574 = vmatpush2.msra.mxu0 0.0
    %2575 = vmatprep.subr.mxu0 0.0
    %2576 = vmatpush2.msra.mxu0 0.0
    %2577 = vmatprep.subr.mxu0 0.0
    %2578 = vmatpush2.msra.mxu0 0.0
    %2579 = vmatprep.subr.mxu0 0.0
    %2580 = vmatpush2.msra.mxu0 0.0
    %2581 = vmatprep.subr.mxu0 0.0
    %2582 = vmatpush2.msra.mxu0 0.0
    %2583 = vmatprep.mubr.f32.mxu0 0.0
    %2584 = vmatmul.mubr.f32.gmra.mxu0 %v2517
    %v2585 = vpop.f32.mrf.mxu0
    %v2586 = vadd.f32 %v2515, %v2585
    %v2587 = vpop.f32.mrf.mxu0
    %2588 = vdwg.mxu0
    %v2589 = vmax.f32 %v2586, 0.0
    %v2590 = vld [vmem:[#allocation2 + $0x4b0] sm:$0xff]
    %v2591 = vld [vmem:[#allocation2 + $0x4b8] sm:$0xff]
    %v2592 = vld [vmem:[#allocation2 + $0x4c0] sm:$0xff]
    %v2593 = vld [vmem:[#allocation2 + $0x4c8] sm:$0xff]
    %v2594 = vld [vmem:[#allocation2 + $0x4d0] sm:$0xff]
    %v2595 = vld [vmem:[#allocation2 + $0x4d8] sm:$0xff]
    %v2596 = vld [vmem:[#allocation2 + $0x4e0] sm:$0xff]
    %v2597 = vld [vmem:[#allocation2 + $0x4e8] sm:$0xff]
    %v2598 = vld [vmem:[#allocation2 + $0x4f0] sm:$0x1]
    %v2599 = vlaneseq
    %v2600 = vshrl.u32 %v2599, 7
    %v2601 = vsub.s32 0, %v2600
    %v2602 = vrot.slane %v2598, %v2601
    %v2604 = vsel %vm1257, %v2589, 0
    %2606 = vmatprep.subr.mxu0 0.0
    %2607 = vmatpush1.msra.mxu0 0.0
    %2608 = vmatprep.subr.mxu0 0.0
    %2609 = vmatpush1.msra.mxu0 0.0
    %2610 = vmatprep.subr.mxu0 0.0
    %2611 = vmatpush1.msra.mxu0 0.0
    %2612 = vmatprep.subr.mxu0 0.0
    %2613 = vmatpush1.msra.mxu0 0.0
    %2614 = vmatprep.subr.mxu0 0.0
    %2615 = vmatpush1.msra.mxu0 0.0
    %2616 = vmatprep.subr.mxu0 0.0
    %2617 = vmatpush1.msra.mxu0 0.0
    %2618 = vmatprep.subr.mxu0 0.0
    %2619 = vmatpush1.msra.mxu0 0.0
    %2620 = vmatprep.subr.mxu0 0.0
    %2621 = vmatpush1.msra.mxu0 0.0
    %2622 = vmatprep.subr.mxu0 0.0
    %2623 = vmatpush1.msra.mxu0 %v2597
    %2624 = vmatprep.subr.mxu0 0.0
    %2625 = vmatpush1.msra.mxu0 %v2596
    %2626 = vmatprep.subr.mxu0 0.0
    %2627 = vmatpush1.msra.mxu0 %v2595
    %2628 = vmatprep.subr.mxu0 0.0
    %2629 = vmatpush1.msra.mxu0 %v2594
    %2630 = vmatprep.subr.mxu0 0.0
    %2631 = vmatpush1.msra.mxu0 %v2593
    %2632 = vmatprep.subr.mxu0 0.0
    %2633 = vmatpush1.msra.mxu0 %v2592
    %2634 = vmatprep.subr.mxu0 0.0
    %2635 = vmatpush1.msra.mxu0 %v2591
    %2636 = vmatprep.subr.mxu0 0.0
    %2637 = vmatpush1.msra.mxu0 %v2590
    %2638 = vmatprep.subr.mxu0 0.0
    %2639 = vmatpush2.msra.mxu0 0.0
    %2640 = vmatprep.subr.mxu0 0.0
    %2641 = vmatpush2.msra.mxu0 0.0
    %2642 = vmatprep.subr.mxu0 0.0
    %2643 = vmatpush2.msra.mxu0 0.0
    %2644 = vmatprep.subr.mxu0 0.0
    %2645 = vmatpush2.msra.mxu0 0.0
    %2646 = vmatprep.subr.mxu0 0.0
    %2647 = vmatpush2.msra.mxu0 0.0
    %2648 = vmatprep.subr.mxu0 0.0
    %2649 = vmatpush2.msra.mxu0 0.0
    %2650 = vmatprep.subr.mxu0 0.0
    %2651 = vmatpush2.msra.mxu0 0.0
    %2652 = vmatprep.subr.mxu0 0.0
    %2653 = vmatpush2.msra.mxu0 0.0
    %2654 = vmatprep.subr.mxu0 0.0
    %2655 = vmatpush2.msra.mxu0 0.0
    %2656 = vmatprep.subr.mxu0 0.0
    %2657 = vmatpush2.msra.mxu0 0.0
    %2658 = vmatprep.subr.mxu0 0.0
    %2659 = vmatpush2.msra.mxu0 0.0
    %2660 = vmatprep.subr.mxu0 0.0
    %2661 = vmatpush2.msra.mxu0 0.0
    %2662 = vmatprep.subr.mxu0 0.0
    %2663 = vmatpush2.msra.mxu0 0.0
    %2664 = vmatprep.subr.mxu0 0.0
    %2665 = vmatpush2.msra.mxu0 0.0
    %2666 = vmatprep.subr.mxu0 0.0
    %2667 = vmatpush2.msra.mxu0 0.0
    %2668 = vmatprep.subr.mxu0 0.0
    %2669 = vmatpush2.msra.mxu0 0.0
    %2670 = vmatprep.mubr.f32.mxu0 0.0
    %2671 = vmatmul.mubr.f32.gmra.mxu0 %v2604
    %v2672 = vpop.f32.mrf.mxu0
    %v2673 = vadd.f32 %v2602, %v2672
    %v2674 = vpop.f32.mrf.mxu0
    %2675 = vdwg.mxu0
    %v2676 = vmax.f32 %v2673, 0.0
    %v2677 = vld [vmem:[#allocation2 + $0x4f8] sm:$0xff]
    %v2678 = vld [vmem:[#allocation2 + $0x500] sm:$0xff]
    %v2679 = vld [vmem:[#allocation2 + $0x508] sm:$0xff]
    %v2680 = vld [vmem:[#allocation2 + $0x510] sm:$0xff]
    %v2681 = vld [vmem:[#allocation2 + $0x518] sm:$0xff]
    %v2682 = vld [vmem:[#allocation2 + $0x520] sm:$0xff]
    %v2683 = vld [vmem:[#allocation2 + $0x528] sm:$0xff]
    %v2684 = vld [vmem:[#allocation2 + $0x530] sm:$0xff]
    %v2685 = vld [vmem:[#allocation2 + $0x538] sm:$0x1]
    %v2686 = vlaneseq
    %v2687 = vshrl.u32 %v2686, 7
    %v2688 = vsub.s32 0, %v2687
    %v2689 = vrot.slane %v2685, %v2688
    %v2691 = vsel %vm1257, %v2676, 0
    %2693 = vmatprep.subr.mxu0 0.0
    %2694 = vmatpush1.msra.mxu0 0.0
    %2695 = vmatprep.subr.mxu0 0.0
    %2696 = vmatpush1.msra.mxu0 0.0
    %2697 = vmatprep.subr.mxu0 0.0
    %2698 = vmatpush1.msra.mxu0 0.0
    %2699 = vmatprep.subr.mxu0 0.0
    %2700 = vmatpush1.msra.mxu0 0.0
    %2701 = vmatprep.subr.mxu0 0.0
    %2702 = vmatpush1.msra.mxu0 0.0
    %2703 = vmatprep.subr.mxu0 0.0
    %2704 = vmatpush1.msra.mxu0 0.0
    %2705 = vmatprep.subr.mxu0 0.0
    %2706 = vmatpush1.msra.mxu0 0.0
    %2707 = vmatprep.subr.mxu0 0.0
    %2708 = vmatpush1.msra.mxu0 0.0
    %2709 = vmatprep.subr.mxu0 0.0
    %2710 = vmatpush1.msra.mxu0 %v2684
    %2711 = vmatprep.subr.mxu0 0.0
    %2712 = vmatpush1.msra.mxu0 %v2683
    %2713 = vmatprep.subr.mxu0 0.0
    %2714 = vmatpush1.msra.mxu0 %v2682
    %2715 = vmatprep.subr.mxu0 0.0
    %2716 = vmatpush1.msra.mxu0 %v2681
    %2717 = vmatprep.subr.mxu0 0.0
    %2718 = vmatpush1.msra.mxu0 %v2680
    %2719 = vmatprep.subr.mxu0 0.0
    %2720 = vmatpush1.msra.mxu0 %v2679
    %2721 = vmatprep.subr.mxu0 0.0
    %2722 = vmatpush1.msra.mxu0 %v2678
    %2723 = vmatprep.subr.mxu0 0.0
    %2724 = vmatpush1.msra.mxu0 %v2677
    %2725 = vmatprep.subr.mxu0 0.0
    %2726 = vmatpush2.msra.mxu0 0.0
    %2727 = vmatprep.subr.mxu0 0.0
    %2728 = vmatpush2.msra.mxu0 0.0
    %2729 = vmatprep.subr.mxu0 0.0
    %2730 = vmatpush2.msra.mxu0 0.0
    %2731 = vmatprep.subr.mxu0 0.0
    %2732 = vmatpush2.msra.mxu0 0.0
    %2733 = vmatprep.subr.mxu0 0.0
    %2734 = vmatpush2.msra.mxu0 0.0
    %2735 = vmatprep.subr.mxu0 0.0
    %2736 = vmatpush2.msra.mxu0 0.0
    %2737 = vmatprep.subr.mxu0 0.0
    %2738 = vmatpush2.msra.mxu0 0.0
    %2739 = vmatprep.subr.mxu0 0.0
    %2740 = vmatpush2.msra.mxu0 0.0
    %2741 = vmatprep.subr.mxu0 0.0
    %2742 = vmatpush2.msra.mxu0 0.0
    %2743 = vmatprep.subr.mxu0 0.0
    %2744 = vmatpush2.msra.mxu0 0.0
    %2745 = vmatprep.subr.mxu0 0.0
    %2746 = vmatpush2.msra.mxu0 0.0
    %2747 = vmatprep.subr.mxu0 0.0
    %2748 = vmatpush2.msra.mxu0 0.0
    %2749 = vmatprep.subr.mxu0 0.0
    %2750 = vmatpush2.msra.mxu0 0.0
    %2751 = vmatprep.subr.mxu0 0.0
    %2752 = vmatpush2.msra.mxu0 0.0
    %2753 = vmatprep.subr.mxu0 0.0
    %2754 = vmatpush2.msra.mxu0 0.0
    %2755 = vmatprep.subr.mxu0 0.0
    %2756 = vmatpush2.msra.mxu0 0.0
    %2757 = vmatprep.mubr.f32.mxu0 0.0
    %2758 = vmatmul.mubr.f32.gmra.mxu0 %v2691
    %v2759 = vpop.f32.mrf.mxu0
    %v2760 = vadd.f32 %v2689, %v2759
    %v2761 = vpop.f32.mrf.mxu0
    %2762 = vdwg.mxu0
    %v2763 = vmax.f32 %v2760, 0.0
    %v2764 = vld [vmem:[#allocation2 + $0x540] sm:$0xff]
    %v2765 = vld [vmem:[#allocation2 + $0x548] sm:$0xff]
    %v2766 = vld [vmem:[#allocation2 + $0x550] sm:$0xff]
    %v2767 = vld [vmem:[#allocation2 + $0x558] sm:$0xff]
    %v2768 = vld [vmem:[#allocation2 + $0x560] sm:$0x1]
    %v2769 = vlaneseq
    %v2770 = vshrl.u32 %v2769, 7
    %v2771 = vsub.s32 0, %v2770
    %v2772 = vrot.slane %v2768, %v2771
    %v2774 = vsel %vm33, %v2763, 0
    %2776 = vmatprep.subr.mxu0 0.0
    %2777 = vmatpush1.msra.mxu0 0.0
    %2778 = vmatprep.subr.mxu0 0.0
    %2779 = vmatpush1.msra.mxu0 0.0
    %2780 = vmatprep.subr.mxu0 0.0
    %2781 = vmatpush1.msra.mxu0 0.0
    %2782 = vmatprep.subr.mxu0 0.0
    %2783 = vmatpush1.msra.mxu0 0.0
    %2784 = vmatprep.subr.mxu0 0.0
    %2785 = vmatpush1.msra.mxu0 0.0
    %2786 = vmatprep.subr.mxu0 0.0
    %2787 = vmatpush1.msra.mxu0 0.0
    %2788 = vmatprep.subr.mxu0 0.0
    %2789 = vmatpush1.msra.mxu0 0.0
    %2790 = vmatprep.subr.mxu0 0.0
    %2791 = vmatpush1.msra.mxu0 0.0
    %2792 = vmatprep.subr.mxu0 0.0
    %2793 = vmatpush1.msra.mxu0 0.0
    %2794 = vmatprep.subr.mxu0 0.0
    %2795 = vmatpush1.msra.mxu0 0.0
    %2796 = vmatprep.subr.mxu0 0.0
    %2797 = vmatpush1.msra.mxu0 0.0
    %2798 = vmatprep.subr.mxu0 0.0
    %2799 = vmatpush1.msra.mxu0 0.0
    %2800 = vmatprep.subr.mxu0 0.0
    %2801 = vmatpush1.msra.mxu0 %v2767
    %2802 = vmatprep.subr.mxu0 0.0
    %2803 = vmatpush1.msra.mxu0 %v2766
    %2804 = vmatprep.subr.mxu0 0.0
    %2805 = vmatpush1.msra.mxu0 %v2765
    %2806 = vmatprep.subr.mxu0 0.0
    %2807 = vmatpush1.msra.mxu0 %v2764
    %2808 = vmatprep.subr.mxu0 0.0
    %2809 = vmatpush2.msra.mxu0 0.0
    %2810 = vmatprep.subr.mxu0 0.0
    %2811 = vmatpush2.msra.mxu0 0.0
    %2812 = vmatprep.subr.mxu0 0.0
    %2813 = vmatpush2.msra.mxu0 0.0
    %2814 = vmatprep.subr.mxu0 0.0
    %2815 = vmatpush2.msra.mxu0 0.0
    %2816 = vmatprep.subr.mxu0 0.0
    %2817 = vmatpush2.msra.mxu0 0.0
    %2818 = vmatprep.subr.mxu0 0.0
    %2819 = vmatpush2.msra.mxu0 0.0
    %2820 = vmatprep.subr.mxu0 0.0
    %2821 = vmatpush2.msra.mxu0 0.0
    %2822 = vmatprep.subr.mxu0 0.0
    %2823 = vmatpush2.msra.mxu0 0.0
    %2824 = vmatprep.subr.mxu0 0.0
    %2825 = vmatpush2.msra.mxu0 0.0
    %2826 = vmatprep.subr.mxu0 0.0
    %2827 = vmatpush2.msra.mxu0 0.0
    %2828 = vmatprep.subr.mxu0 0.0
    %2829 = vmatpush2.msra.mxu0 0.0
    %2830 = vmatprep.subr.mxu0 0.0
    %2831 = vmatpush2.msra.mxu0 0.0
    %2832 = vmatprep.subr.mxu0 0.0
    %2833 = vmatpush2.msra.mxu0 0.0
    %2834 = vmatprep.subr.mxu0 0.0
    %2835 = vmatpush2.msra.mxu0 0.0
    %2836 = vmatprep.subr.mxu0 0.0
    %2837 = vmatpush2.msra.mxu0 0.0
    %2838 = vmatprep.subr.mxu0 0.0
    %2839 = vmatpush2.msra.mxu0 0.0
    %2840 = vmatprep.mubr.f32.mxu0 0.0
    %2841 = vmatmul.mubr.f32.gmra.mxu0 %v2774
    %v2842 = vpop.f32.mrf.mxu0
    %v2843 = vadd.f32 %v2772, %v2842
    %v2844 = vpop.f32.mrf.mxu0
    %2845 = vdwg.mxu0
    %v2846 = vxor.u32 %v2843, 2147483648
    %v2847 = vmul.f32 %v2846, 1.442695
    %v2848 = vpow.pop %v2847
    %v2849 = vadd.f32 %v2848, 1.0
    %v2850 = vrcp.pop %v2849
    %v2851 = vmul.f32 1.0, %v2850
    %v2852 = vmul.f32 %v2676, %v2851
    %v2853 = vld [vmem:[#allocation2 + $0x568] sm:$0xff]
    %v2854 = vld [vmem:[#allocation2 + $0x570] sm:$0xff]
    %v2855 = vld [vmem:[#allocation2 + $0x578] sm:$0xff]
    %v2856 = vld [vmem:[#allocation2 + $0x580] sm:$0xff]
    %v2857 = vld [vmem:[#allocation2 + $0x588] sm:$0xff]
    %v2858 = vld [vmem:[#allocation2 + $0x590] sm:$0xff]
    %v2859 = vld [vmem:[#allocation2 + $0x598] sm:$0xff]
    %v2860 = vld [vmem:[#allocation2 + $0x5a0] sm:$0xff]
    %v2861 = vld [vmem:[#allocation2 + $0x5a8] sm:$0x1]
    %v2862 = vlaneseq
    %v2863 = vshrl.u32 %v2862, 7
    %v2864 = vsub.s32 0, %v2863
    %v2865 = vrot.slane %v2861, %v2864
    %v2867 = vsel %vm1257, %v2852, 0
    %2869 = vmatprep.subr.mxu0 0.0
    %2870 = vmatpush1.msra.mxu0 0.0
    %2871 = vmatprep.subr.mxu0 0.0
    %2872 = vmatpush1.msra.mxu0 0.0
    %2873 = vmatprep.subr.mxu0 0.0
    %2874 = vmatpush1.msra.mxu0 0.0
    %2875 = vmatprep.subr.mxu0 0.0
    %2876 = vmatpush1.msra.mxu0 0.0
    %2877 = vmatprep.subr.mxu0 0.0
    %2878 = vmatpush1.msra.mxu0 0.0
    %2879 = vmatprep.subr.mxu0 0.0
    %2880 = vmatpush1.msra.mxu0 0.0
    %2881 = vmatprep.subr.mxu0 0.0
    %2882 = vmatpush1.msra.mxu0 0.0
    %2883 = vmatprep.subr.mxu0 0.0
    %2884 = vmatpush1.msra.mxu0 0.0
    %2885 = vmatprep.subr.mxu0 0.0
    %2886 = vmatpush1.msra.mxu0 %v2860
    %2887 = vmatprep.subr.mxu0 0.0
    %2888 = vmatpush1.msra.mxu0 %v2859
    %2889 = vmatprep.subr.mxu0 0.0
    %2890 = vmatpush1.msra.mxu0 %v2858
    %2891 = vmatprep.subr.mxu0 0.0
    %2892 = vmatpush1.msra.mxu0 %v2857
    %2893 = vmatprep.subr.mxu0 0.0
    %2894 = vmatpush1.msra.mxu0 %v2856
    %2895 = vmatprep.subr.mxu0 0.0
    %2896 = vmatpush1.msra.mxu0 %v2855
    %2897 = vmatprep.subr.mxu0 0.0
    %2898 = vmatpush1.msra.mxu0 %v2854
    %2899 = vmatprep.subr.mxu0 0.0
    %2900 = vmatpush1.msra.mxu0 %v2853
    %2901 = vmatprep.subr.mxu0 0.0
    %2902 = vmatpush2.msra.mxu0 0.0
    %2903 = vmatprep.subr.mxu0 0.0
    %2904 = vmatpush2.msra.mxu0 0.0
    %2905 = vmatprep.subr.mxu0 0.0
    %2906 = vmatpush2.msra.mxu0 0.0
    %2907 = vmatprep.subr.mxu0 0.0
    %2908 = vmatpush2.msra.mxu0 0.0
    %2909 = vmatprep.subr.mxu0 0.0
    %2910 = vmatpush2.msra.mxu0 0.0
    %2911 = vmatprep.subr.mxu0 0.0
    %2912 = vmatpush2.msra.mxu0 0.0
    %2913 = vmatprep.subr.mxu0 0.0
    %2914 = vmatpush2.msra.mxu0 0.0
    %2915 = vmatprep.subr.mxu0 0.0
    %2916 = vmatpush2.msra.mxu0 0.0
    %2917 = vmatprep.subr.mxu0 0.0
    %2918 = vmatpush2.msra.mxu0 0.0
    %2919 = vmatprep.subr.mxu0 0.0
    %2920 = vmatpush2.msra.mxu0 0.0
    %2921 = vmatprep.subr.mxu0 0.0
    %2922 = vmatpush2.msra.mxu0 0.0
    %2923 = vmatprep.subr.mxu0 0.0
    %2924 = vmatpush2.msra.mxu0 0.0
    %2925 = vmatprep.subr.mxu0 0.0
    %2926 = vmatpush2.msra.mxu0 0.0
    %2927 = vmatprep.subr.mxu0 0.0
    %2928 = vmatpush2.msra.mxu0 0.0
    %2929 = vmatprep.subr.mxu0 0.0
    %2930 = vmatpush2.msra.mxu0 0.0
    %2931 = vmatprep.subr.mxu0 0.0
    %2932 = vmatpush2.msra.mxu0 0.0
    %2933 = vmatprep.mubr.f32.mxu0 0.0
    %2934 = vmatmul.mubr.f32.gmra.mxu0 %v2867
    %v2935 = vpop.f32.mrf.mxu0
    %v2936 = vadd.f32 %v2865, %v2935
    %v2937 = vpop.f32.mrf.mxu0
    %2938 = vdwg.mxu0
    %v2939 = vmax.f32 %v2936, 0.0
    %v2940 = vld [vmem:[#allocation2 + $0x5b0] sm:$0xff]
    %v2941 = vld [vmem:[#allocation2 + $0x5b8] sm:$0xff]
    %v2942 = vld [vmem:[#allocation2 + $0x5c0] sm:$0xff]
    %v2943 = vld [vmem:[#allocation2 + $0x5c8] sm:$0xff]
    %v2944 = vld [vmem:[#allocation2 + $0x5d0] sm:$0xff]
    %v2945 = vld [vmem:[#allocation2 + $0x5d8] sm:$0xff]
    %v2946 = vld [vmem:[#allocation2 + $0x5e0] sm:$0xff]
    %v2947 = vld [vmem:[#allocation2 + $0x5e8] sm:$0xff]
    %v2948 = vld [vmem:[#allocation2 + $0x5f0] sm:$0x1]
    %v2949 = vlaneseq
    %v2950 = vshrl.u32 %v2949, 7
    %v2951 = vsub.s32 0, %v2950
    %v2952 = vrot.slane %v2948, %v2951
    %v2954 = vsel %vm1257, %v2939, 0
    %2956 = vmatprep.subr.mxu0 0.0
    %2957 = vmatpush1.msra.mxu0 0.0
    %2958 = vmatprep.subr.mxu0 0.0
    %2959 = vmatpush1.msra.mxu0 0.0
    %2960 = vmatprep.subr.mxu0 0.0
    %2961 = vmatpush1.msra.mxu0 0.0
    %2962 = vmatprep.subr.mxu0 0.0
    %2963 = vmatpush1.msra.mxu0 0.0
    %2964 = vmatprep.subr.mxu0 0.0
    %2965 = vmatpush1.msra.mxu0 0.0
    %2966 = vmatprep.subr.mxu0 0.0
    %2967 = vmatpush1.msra.mxu0 0.0
    %2968 = vmatprep.subr.mxu0 0.0
    %2969 = vmatpush1.msra.mxu0 0.0
    %2970 = vmatprep.subr.mxu0 0.0
    %2971 = vmatpush1.msra.mxu0 0.0
    %2972 = vmatprep.subr.mxu0 0.0
    %2973 = vmatpush1.msra.mxu0 %v2947
    %2974 = vmatprep.subr.mxu0 0.0
    %2975 = vmatpush1.msra.mxu0 %v2946
    %2976 = vmatprep.subr.mxu0 0.0
    %2977 = vmatpush1.msra.mxu0 %v2945
    %2978 = vmatprep.subr.mxu0 0.0
    %2979 = vmatpush1.msra.mxu0 %v2944
    %2980 = vmatprep.subr.mxu0 0.0
    %2981 = vmatpush1.msra.mxu0 %v2943
    %2982 = vmatprep.subr.mxu0 0.0
    %2983 = vmatpush1.msra.mxu0 %v2942
    %2984 = vmatprep.subr.mxu0 0.0
    %2985 = vmatpush1.msra.mxu0 %v2941
    %2986 = vmatprep.subr.mxu0 0.0
    %2987 = vmatpush1.msra.mxu0 %v2940
    %2988 = vmatprep.subr.mxu0 0.0
    %2989 = vmatpush2.msra.mxu0 0.0
    %2990 = vmatprep.subr.mxu0 0.0
    %2991 = vmatpush2.msra.mxu0 0.0
    %2992 = vmatprep.subr.mxu0 0.0
    %2993 = vmatpush2.msra.mxu0 0.0
    %2994 = vmatprep.subr.mxu0 0.0
    %2995 = vmatpush2.msra.mxu0 0.0
    %2996 = vmatprep.subr.mxu0 0.0
    %2997 = vmatpush2.msra.mxu0 0.0
    %2998 = vmatprep.subr.mxu0 0.0
    %2999 = vmatpush2.msra.mxu0 0.0
    %3000 = vmatprep.subr.mxu0 0.0
    %3001 = vmatpush2.msra.mxu0 0.0
    %3002 = vmatprep.subr.mxu0 0.0
    %3003 = vmatpush2.msra.mxu0 0.0
    %3004 = vmatprep.subr.mxu0 0.0
    %3005 = vmatpush2.msra.mxu0 0.0
    %3006 = vmatprep.subr.mxu0 0.0
    %3007 = vmatpush2.msra.mxu0 0.0
    %3008 = vmatprep.subr.mxu0 0.0
    %3009 = vmatpush2.msra.mxu0 0.0
    %3010 = vmatprep.subr.mxu0 0.0
    %3011 = vmatpush2.msra.mxu0 0.0
    %3012 = vmatprep.subr.mxu0 0.0
    %3013 = vmatpush2.msra.mxu0 0.0
    %3014 = vmatprep.subr.mxu0 0.0
    %3015 = vmatpush2.msra.mxu0 0.0
    %3016 = vmatprep.subr.mxu0 0.0
    %3017 = vmatpush2.msra.mxu0 0.0
    %3018 = vmatprep.subr.mxu0 0.0
    %3019 = vmatpush2.msra.mxu0 0.0
    %3020 = vmatprep.mubr.f32.mxu0 0.0
    %3021 = vmatmul.mubr.f32.gmra.mxu0 %v2954
    %v3022 = vpop.f32.mrf.mxu0
    %v3023 = vadd.f32 %v2952, %v3022
    %v3024 = vpop.f32.mrf.mxu0
    %3025 = vdwg.mxu0
    %v3026 = vmax.f32 %v3023, 0.0
    %v3027 = vld [vmem:[#allocation2 + $0x5f8] sm:$0xff]
    %v3028 = vld [vmem:[#allocation2 + $0x600] sm:$0xff]
    %v3029 = vld [vmem:[#allocation2 + $0x608] sm:$0xff]
    %v3030 = vld [vmem:[#allocation2 + $0x610] sm:$0xff]
    %v3031 = vld [vmem:[#allocation2 + $0x618] sm:$0x1]
    %v3032 = vlaneseq
    %v3033 = vshrl.u32 %v3032, 7
    %v3034 = vsub.s32 0, %v3033
    %v3035 = vrot.slane %v3031, %v3034
    %v3037 = vsel %vm33, %v3026, 0
    %3039 = vmatprep.subr.mxu0 0.0
    %3040 = vmatpush1.msra.mxu0 0.0
    %3041 = vmatprep.subr.mxu0 0.0
    %3042 = vmatpush1.msra.mxu0 0.0
    %3043 = vmatprep.subr.mxu0 0.0
    %3044 = vmatpush1.msra.mxu0 0.0
    %3045 = vmatprep.subr.mxu0 0.0
    %3046 = vmatpush1.msra.mxu0 0.0
    %3047 = vmatprep.subr.mxu0 0.0
    %3048 = vmatpush1.msra.mxu0 0.0
    %3049 = vmatprep.subr.mxu0 0.0
    %3050 = vmatpush1.msra.mxu0 0.0
    %3051 = vmatprep.subr.mxu0 0.0
    %3052 = vmatpush1.msra.mxu0 0.0
    %3053 = vmatprep.subr.mxu0 0.0
    %3054 = vmatpush1.msra.mxu0 0.0
    %3055 = vmatprep.subr.mxu0 0.0
    %3056 = vmatpush1.msra.mxu0 0.0
    %3057 = vmatprep.subr.mxu0 0.0
    %3058 = vmatpush1.msra.mxu0 0.0
    %3059 = vmatprep.subr.mxu0 0.0
    %3060 = vmatpush1.msra.mxu0 0.0
    %3061 = vmatprep.subr.mxu0 0.0
    %3062 = vmatpush1.msra.mxu0 0.0
    %3063 = vmatprep.subr.mxu0 0.0
    %3064 = vmatpush1.msra.mxu0 %v3030
    %3065 = vmatprep.subr.mxu0 0.0
    %3066 = vmatpush1.msra.mxu0 %v3029
    %3067 = vmatprep.subr.mxu0 0.0
    %3068 = vmatpush1.msra.mxu0 %v3028
    %3069 = vmatprep.subr.mxu0 0.0
    %3070 = vmatpush1.msra.mxu0 %v3027
    %3071 = vmatprep.subr.mxu0 0.0
    %3072 = vmatpush2.msra.mxu0 0.0
    %3073 = vmatprep.subr.mxu0 0.0
    %3074 = vmatpush2.msra.mxu0 0.0
    %3075 = vmatprep.subr.mxu0 0.0
    %3076 = vmatpush2.msra.mxu0 0.0
    %3077 = vmatprep.subr.mxu0 0.0
    %3078 = vmatpush2.msra.mxu0 0.0
    %3079 = vmatprep.subr.mxu0 0.0
    %3080 = vmatpush2.msra.mxu0 0.0
    %3081 = vmatprep.subr.mxu0 0.0
    %3082 = vmatpush2.msra.mxu0 0.0
    %3083 = vmatprep.subr.mxu0 0.0
    %3084 = vmatpush2.msra.mxu0 0.0
    %3085 = vmatprep.subr.mxu0 0.0
    %3086 = vmatpush2.msra.mxu0 0.0
    %3087 = vmatprep.subr.mxu0 0.0
    %3088 = vmatpush2.msra.mxu0 0.0
    %3089 = vmatprep.subr.mxu0 0.0
    %3090 = vmatpush2.msra.mxu0 0.0
    %3091 = vmatprep.subr.mxu0 0.0
    %3092 = vmatpush2.msra.mxu0 0.0
    %3093 = vmatprep.subr.mxu0 0.0
    %3094 = vmatpush2.msra.mxu0 0.0
    %3095 = vmatprep.subr.mxu0 0.0
    %3096 = vmatpush2.msra.mxu0 0.0
    %3097 = vmatprep.subr.mxu0 0.0
    %3098 = vmatpush2.msra.mxu0 0.0
    %3099 = vmatprep.subr.mxu0 0.0
    %3100 = vmatpush2.msra.mxu0 0.0
    %3101 = vmatprep.subr.mxu0 0.0
    %3102 = vmatpush2.msra.mxu0 0.0
    %3103 = vmatprep.mubr.f32.mxu0 0.0
    %3104 = vmatmul.mubr.f32.gmra.mxu0 %v3037
    %v3105 = vpop.f32.mrf.mxu0
    %v3106 = vadd.f32 %v3035, %v3105
    %v3107 = vpop.f32.mrf.mxu0
    %3108 = vdwg.mxu0
    %vm3109 = vcmask 33792
    %3110 = vst.msk [vmem:[%s2] sm:$0x3] %vm3109, %v3106
    // Predicated region
    $region14: #{forward.1} parent=1 // pred_check
      _
    $region15: #{forward.1} parent=1 // pred_check_branch
      %3112 = sbr.rel (0) target = $region17
    $region16: #{forward.1} parent=1 // pred_region
      _
    $region17: #{forward.1} parent=1 // pred_fallthru
      _
    // Predicated region
    $region18: #{forward.1} parent=1 // pred_check
      _
    $region19: #{forward.1} parent=1 // pred_check_branch
      %3114 = sbr.rel (0) target = $region21
    $region20: #{forward.1} parent=1 // pred_region
      _
    $region21: #{forward.1} parent=1 // pred_fallthru
      _
    %3115 = vsyncpa [#allocation3], 1

</llo_original>
